<compile_context>
chip_gen: v5e
topology: v5e:2x2
jax: 0.10.0
libtpu: 0.0.40
codegen_flags: <defaults>
</compile_context>

<pallas_src>
import jax
import jax.numpy as jnp
from jax.experimental import pallas as pl
from jax.experimental.pallas import tpu as pltpu

EPS = 2e-5    # BatchNorm1d eps from the module
LANE = 128    # TPU lane width: every feature dim is padded to a multiple of this


def _round_up(n, m=LANE):
    return ((n + m - 1) // m) * m


# ---------------------------------------------------------------------------
# Kernel
# ---------------------------------------------------------------------------
def _bn_sign(h, gamma, beta):
    """Training-mode BatchNorm1d (batch stats, biased variance, eps=2e-5)
    folded into one per-feature scale/shift, followed by Sign().

        z = (h - mean) * rsqrt(var + eps) * gamma + beta
          = h * scale + shift,   scale = gamma * rsqrt(var + eps)
                                 shift = beta  - mean * scale

    The folding is exact algebra (any sign of gamma); variance is single-pass
    E[h^2] - mean^2 so only two cross-sublane reductions are needed per layer.
    The +/-1 result is emitted as bf16 so it feeds the MXU natively.
    """
    mean = jnp.mean(h, axis=0, keepdims=True)
    var = jnp.mean(h * h, axis=0, keepdims=True) - mean * mean
    scale = gamma * jax.lax.rsqrt(var + EPS)          # (1, F)
    shift = beta - mean * scale                       # (1, F)
    z = h * scale + shift
    return jnp.where(z >= 0, 1.0, -1.0).astype(jnp.bfloat16)


def bnn_kernel(
    x_ref,
    g0_ref, be0_ref,                      # input-block BatchNorm affine
    w1_ref, b1_ref, g1_ref, be1_ref,      # hidden layer 1
    w2_ref, b2_ref, g2_ref, be2_ref,      # hidden layer 2
    wo_ref, bo_ref,                       # output Linear
    out_ref, y0_ref, y1_ref, y2_ref,      # logits + binarized activations
):
    x = x_ref[...]                                            # (B, D0p) f32

    # input_block: BatchNorm1d -> Sign
    y0 = _bn_sign(x, g0_ref[...], be0_ref[...])               # (B, D0p) bf16 +/-1
    y0_ref[...] = y0

    # hidden layer 1: Linear -> BatchNorm1d -> Sign (bf16 MXU, f32 accumulate)
    h1 = jnp.dot(y0, w1_ref[...], preferred_element_type=jnp.float32) + b1_ref[...]
    y1 = _bn_sign(h1, g1_ref[...], be1_ref[...])
    y1_ref[...] = y1

    # hidden layer 2: Linear -> BatchNorm1d -> Sign
    h2 = jnp.dot(y1, w2_ref[...], preferred_element_type=jnp.float32) + b2_ref[...]
    y2 = _bn_sign(h2, g2_ref[...], be2_ref[...])
    y2_ref[...] = y2

    # output_layer: Linear (lane-padded to 128 -> dense stores; caller slices)
    out_ref[...] = (
        jnp.dot(y2, wo_ref[...], preferred_element_type=jnp.float32) + bo_ref[...]
    )


# ---------------------------------------------------------------------------
# Wrapper
# ---------------------------------------------------------------------------
@jax.jit
def bnn_forward(x, kparams):
    """x: (B, input_size) f32; kparams: padded/bf16 operands from prepare_params.

    Returns (logits_padded, y0, y1, y2); real logits are logits_padded[:, :out].
    Fixed to two hidden layers, matching the kernel signature.
    """
    batch = x.shape[0]
    w1, w2, wo = kparams[2], kparams[6], kparams[10]
    in_p, h1 = w1.shape
    h2 = w2.shape[-1]
    out_p = wo.shape[-1]

    # Lane-pad the input features (zero columns are neutralized by zero weight
    # rows in W1, see prepare_params).
    x = jnp.pad(x, ((0, 0), (0, in_p - x.shape[-1])))

    flops = 2 * batch * (in_p * h1 + h1 * h2 + h2 * out_p)
    bytes_accessed = (
        batch * in_p * 4                                         # x
        + sum(int(p.size) * p.dtype.itemsize for p in kparams)   # params
        + batch * out_p * 4                                      # logits
        + batch * (in_p + h1 + h2) * 2                           # bf16 activations
    )

    vmem = pl.BlockSpec(memory_space=pltpu.VMEM)   # whole array resident in VMEM
    return pl.pallas_call(
        bnn_kernel,
        out_shape=(
            jax.ShapeDtypeStruct((batch, out_p), jnp.float32),
            jax.ShapeDtypeStruct((batch, in_p), jnp.bfloat16),
            jax.ShapeDtypeStruct((batch, h1), jnp.bfloat16),
            jax.ShapeDtypeStruct((batch, h2), jnp.bfloat16),
        ),
        in_specs=[vmem] * (1 + len(kparams)),
        out_specs=(vmem, vmem, vmem, vmem),
        compiler_params=pltpu.CompilerParams(vmem_limit_bytes=32 * 1024 * 1024),
        cost_estimate=pl.CostEstimate(
            flops=flops,
            transcendentals=in_p + h1 + h2,   # one rsqrt per feature per BN
            bytes_accessed=bytes_accessed,
        ),
    )(x, *kparams)


# ---------------------------------------------------------------------------
# Parameters
# ---------------------------------------------------------------------------
def init_params(key, input_size, hidden_layers, output_size):
    """Natural (PyTorch-shaped) synthetic parameters: uniform(+/-1/sqrt(fan_in))
    Linear weights/biases, gamma=1 / beta=0 BatchNorm affine (nn.Module defaults).
    Linear weights are stored transposed as (in_features, out_features)."""
    params = [jnp.ones((1, input_size), jnp.float32),    # gamma0
              jnp.zeros((1, input_size), jnp.float32)]   # beta0
    in_f = input_size
    for out_f in list(hidden_layers) + [output_size]:
        key, kw, kb = jax.random.split(key, 3)
        bound = 1.0 / float(in_f) ** 0.5
        w = jax.random.uniform(kw, (in_f, out_f), jnp.float32, -bound, bound)
        b = jax.random.uniform(kb, (1, out_f), jnp.float32, -bound, bound)
        params += [w, b]
        if out_f != output_size or out_f in hidden_layers[-1:]:
            pass
        if out_f in hidden_layers or (hidden_layers and out_f == hidden_layers[-1]):
            pass
        in_f = out_f
    # Rebuild with BN affine interleaved for hidden layers only.
    # (Simpler second pass to keep the flat layout explicit.)
    flat = [params[0], params[1]]
    idx = 2
    in_f = input_size
    for out_f in hidden_layers:
        w, b = params[idx], params[idx + 1]
        idx += 2
        flat += [w, b,
                 jnp.ones((1, out_f), jnp.float32),    # gamma
                 jnp.zeros((1, out_f), jnp.float32)]   # beta
        in_f = out_f
    flat += [params[idx], params[idx + 1]]             # output Linear
    return tuple(flat)


def _pad_row(v, width, value=0.0):
    return jnp.pad(v, ((0, 0), (0, width - v.shape[-1])), constant_values=value)


def _pad_mat(w, rows, cols):
    return jnp.pad(w, ((0, rows - w.shape[0]), (0, cols - w.shape[1])))


def prepare_params(params):
    """Zero-pad every feature dim to a multiple of 128 lanes and cast Linear
    weights to bf16.  Zero weight rows/columns make the padded features inert,
    so the real outputs are bit-for-bit unaffected by padding."""
    g0, be0 = params[0], params[1]
    in_p = _round_up(g0.shape[-1])
    kp = [_pad_row(g0, in_p, 1.0), _pad_row(be0, in_p, 0.0)]
    rest = params[2:]
    i = 0
    while i + 2 < len(rest):                       # hidden layers: W, b, gamma, beta
        w, b, g, be = rest[i], rest[i + 1], rest[i + 2], rest[i + 3]
        out_p = _round_up(w.shape[-1])
        kp += [_pad_mat(w, in_p, out_p).astype(jnp.bfloat16),
               _pad_row(b, out_p, 0.0),
               _pad_row(g, out_p, 1.0),
               _pad_row(be, out_p, 0.0)]
        in_p = out_p
        i += 4
    wo, bo = rest[-2], rest[-1]                    # output layer: W, b
    out_p = _round_up(wo.shape[-1])
    kp += [_pad_mat(wo, in_p, out_p).astype(jnp.bfloat16), _pad_row(bo, out_p, 0.0)]
    return tuple(kp)


# ---------------------------------------------------------------------------
# Pure-JAX reference pieces (mirror the kernel math; mathematically identical
# to PyTorch training-mode BatchNorm1d(eps=2e-5) -> Sign)
# ---------------------------------------------------------------------------
def _bn_sign_ref(h, gamma, beta):
    mean = jnp.mean(h, axis=0, keepdims=True)
    var = jnp.mean(h * h, axis=0, keepdims=True) - mean * mean
    scale = gamma * jax.lax.rsqrt(var + EPS)
    z = h * scale + (beta - mean * scale)
    return jnp.where(z >= 0, 1.0, -1.0)


if __name__ == "__main__":
    # Module defaults (MNIST-sized BNN); batch=256 fills the MXU M dimension.
    batch = 256
    input_size = 784
    hidden_layers = [256, 128]
    output_size = 10

    key = jax.random.PRNGKey(0)
    key, kx = jax.random.split(key)
    x = jax.random.normal(kx, (batch, input_size), jnp.float32)

    params = init_params(key, input_size, hidden_layers, output_size)
    kp = prepare_params(params)

    out, y0, y1, y2 = bnn_forward(x, kp)
    out = jax.block_until_ready(out)

    # ---- layered correctness check (robust to the Sign() discontinuity) ----
    g0, be0, w1, b1, g1, be1, w2, b2, g2, be2, wo, bo = kp
    xp = jnp.pad(x, ((0, 0), (0, g0.shape[-1] - x.shape[-1])))

    s0 = _bn_sign_ref(xp, g0, be0)
    n_bad0 = int(jnp.sum(y0.astype(jnp.float32) != s0))

    h1 = jnp.dot(y0.astype(jnp.float32), w1.astype(jnp.float32),
                 precision=jax.lax.Precision.HIGHEST) + b1
    s1 = _bn_sign_ref(h1, g1, be1)
    n_bad1 = int(jnp.sum(y1.astype(jnp.float32) != s1))

    h2 = jnp.dot(y1.astype(jnp.float32), w2.astype(jnp.float32),
                 precision=jax.lax.Precision.HIGHEST) + b2
    s2 = _bn_sign_ref(h2, g2, be2)
    n_bad2 = int(jnp.sum(y2.astype(jnp.float32) != s2))

    ref_out = jnp.dot(y2.astype(jnp.float32), wo.astype(jnp.float32),
                      precision=jax.lax.Precision.HIGHEST) + bo

    assert out.shape == (batch, wo.shape[-1])
    # Final Linear must match tightly (products of +/-1 with bf16 weights are
    # exact; only f32 accumulation order differs between MXU and XLA).
    assert jnp.allclose(out, ref_out, atol=1e-3, rtol=1e-3), "output Linear mismatch"
    # Sign() is discontinuous: only elements sitting within float rounding of
    # the BatchNorm threshold may legitimately resolve differently between the
    # Mosaic and XLA reductions, so allow a handful out of ~200k activations.
    assert n_bad0 + n_bad1 + n_bad2 <= 8, (n_bad0, n_bad1, n_bad2)

    logits = out[:, :output_size]       # un-pad the lane-padded output
    assert logits.shape == (batch, output_size)

    print("KERNEL_OK")
</pallas_src>

<mosaic_0001>
module attributes {stable_mosaic.version = 11 : i64} {
  func.func @bnn_kernel(%arg0: memref<256x896xf32, #tpu.memory_space<vmem>>, %arg1: memref<1x896xf32, #tpu.memory_space<vmem>>, %arg2: memref<1x896xf32, #tpu.memory_space<vmem>>, %arg3: memref<896x256xbf16, #tpu.memory_space<vmem>>, %arg4: memref<1x256xf32, #tpu.memory_space<vmem>>, %arg5: memref<1x256xf32, #tpu.memory_space<vmem>>, %arg6: memref<1x256xf32, #tpu.memory_space<vmem>>, %arg7: memref<256x128xbf16, #tpu.memory_space<vmem>>, %arg8: memref<1x128xf32, #tpu.memory_space<vmem>>, %arg9: memref<1x128xf32, #tpu.memory_space<vmem>>, %arg10: memref<1x128xf32, #tpu.memory_space<vmem>>, %arg11: memref<128x128xbf16, #tpu.memory_space<vmem>>, %arg12: memref<1x128xf32, #tpu.memory_space<vmem>>, %arg13: memref<256x128xf32, #tpu.memory_space<vmem>>, %arg14: memref<256x896xbf16, #tpu.memory_space<vmem>>, %arg15: memref<256x256xbf16, #tpu.memory_space<vmem>>, %arg16: memref<256x128xbf16, #tpu.memory_space<vmem>>) attributes {dimension_semantics = [], scalar_prefetch = 0 : i64, scratch_operands = 0 : i64, tpu.core_type = #tpu.core_type<tc>} {
    %c0 = arith.constant 0 : index
    %c0_0 = arith.constant 0 : index
    %0 = vector.load %arg0[%c0, %c0_0] : memref<256x896xf32, #tpu.memory_space<vmem>>, vector<256x896xf32>
    %c0_1 = arith.constant 0 : index
    %c0_2 = arith.constant 0 : index
    %1 = vector.load %arg1[%c0_1, %c0_2] : memref<1x896xf32, #tpu.memory_space<vmem>>, vector<1x896xf32>
    %c0_3 = arith.constant 0 : index
    %c0_4 = arith.constant 0 : index
    %2 = vector.load %arg2[%c0_3, %c0_4] : memref<1x896xf32, #tpu.memory_space<vmem>>, vector<1x896xf32>
    %cst = arith.constant dense<0.000000e+00> : vector<896xf32>
    %3 = vector.multi_reduction <add>, %0, %cst [0] : vector<256x896xf32> to vector<896xf32>
    %4 = vector.shape_cast %3 : vector<896xf32> to vector<1x896xf32>
    %cst_5 = arith.constant 2.560000e+02 : f32
    %5 = vector.broadcast %cst_5 : f32 to vector<1x896xf32>
    %6 = arith.divf %4, %5 : vector<1x896xf32>
    %7 = arith.mulf %0, %0 : vector<256x896xf32>
    %cst_6 = arith.constant dense<0.000000e+00> : vector<896xf32>
    %8 = vector.multi_reduction <add>, %7, %cst_6 [0] : vector<256x896xf32> to vector<896xf32>
    %9 = vector.shape_cast %8 : vector<896xf32> to vector<1x896xf32>
    %cst_7 = arith.constant 2.560000e+02 : f32
    %10 = vector.broadcast %cst_7 : f32 to vector<1x896xf32>
    %11 = arith.divf %9, %10 : vector<1x896xf32>
    %12 = arith.mulf %6, %6 : vector<1x896xf32>
    %13 = arith.subf %11, %12 : vector<1x896xf32>
    %cst_8 = arith.constant 2.000000e-05 : f32
    %14 = vector.broadcast %cst_8 : f32 to vector<1x896xf32>
    %15 = arith.addf %13, %14 : vector<1x896xf32>
    %16 = math.rsqrt %15 : vector<1x896xf32>
    %17 = arith.mulf %1, %16 : vector<1x896xf32>
    %18 = arith.mulf %6, %17 : vector<1x896xf32>
    %19 = arith.subf %2, %18 : vector<1x896xf32>
    %20 = vector.broadcast %17 : vector<1x896xf32> to vector<256x896xf32>
    %21 = arith.mulf %0, %20 : vector<256x896xf32>
    %22 = vector.broadcast %19 : vector<1x896xf32> to vector<256x896xf32>
    %23 = arith.addf %21, %22 : vector<256x896xf32>
    %cst_9 = arith.constant 0.000000e+00 : f32
    %24 = vector.broadcast %cst_9 : f32 to vector<256x896xf32>
    %25 = arith.cmpf oge, %23, %24 : vector<256x896xf32>
    %cst_10 = arith.constant 1.000000e+00 : f32
    %cst_11 = arith.constant -1.000000e+00 : f32
    %26 = vector.broadcast %cst_10 : f32 to vector<256x896xf32>
    %27 = vector.broadcast %cst_11 : f32 to vector<256x896xf32>
    %28 = arith.select %25, %26, %27 : vector<256x896xi1>, vector<256x896xf32>
    %29 = arith.truncf %28 : vector<256x896xf32> to vector<256x896xbf16>
    %c0_12 = arith.constant 0 : index
    %c0_13 = arith.constant 0 : index
    %30 = vector.load %arg14[%c0_12, %c0_13] : memref<256x896xbf16, #tpu.memory_space<vmem>>, vector<256x896xbf16>
    tpu.vector_store %arg14[%c0_12, %c0_13], %29 {strides = array<i32>} : memref<256x896xbf16, #tpu.memory_space<vmem>>, vector<256x896xbf16>,
    %c0_14 = arith.constant 0 : index
    %c0_15 = arith.constant 0 : index
    %31 = vector.load %arg3[%c0_14, %c0_15] : memref<896x256xbf16, #tpu.memory_space<vmem>>, vector<896x256xbf16>
    %cst_16 = arith.constant dense<0.000000e+00> : vector<256x256xf32>
    %32 = tpu.matmul %29, %31, %cst_16 {dimension_numbers = #tpu.dot_dimension_numbers<[1], [0], [0], [1], [0, 0, 1, 1], [], []>} : vector<256x896xbf16>, vector<896x256xbf16>, vector<256x256xf32> -> vector<256x256xf32>
    %c0_17 = arith.constant 0 : index
    %c0_18 = arith.constant 0 : index
    %33 = vector.load %arg4[%c0_17, %c0_18] : memref<1x256xf32, #tpu.memory_space<vmem>>, vector<1x256xf32>
    %34 = vector.broadcast %33 : vector<1x256xf32> to vector<256x256xf32>
    %35 = arith.addf %32, %34 : vector<256x256xf32>
    %c0_19 = arith.constant 0 : index
    %c0_20 = arith.constant 0 : index
    %36 = vector.load %arg5[%c0_19, %c0_20] : memref<1x256xf32, #tpu.memory_space<vmem>>, vector<1x256xf32>
    %c0_21 = arith.constant 0 : index
    %c0_22 = arith.constant 0 : index
    %37 = vector.load %arg6[%c0_21, %c0_22] : memref<1x256xf32, #tpu.memory_space<vmem>>, vector<1x256xf32>
    %cst_23 = arith.constant dense<0.000000e+00> : vector<256xf32>
    %38 = vector.multi_reduction <add>, %35, %cst_23 [0] : vector<256x256xf32> to vector<256xf32>
    %39 = vector.shape_cast %38 : vector<256xf32> to vector<1x256xf32>
    %cst_24 = arith.constant 2.560000e+02 : f32
    %40 = vector.broadcast %cst_24 : f32 to vector<1x256xf32>
    %41 = arith.divf %39, %40 : vector<1x256xf32>
    %42 = arith.mulf %35, %35 : vector<256x256xf32>
    %cst_25 = arith.constant dense<0.000000e+00> : vector<256xf32>
    %43 = vector.multi_reduction <add>, %42, %cst_25 [0] : vector<256x256xf32> to vector<256xf32>
    %44 = vector.shape_cast %43 : vector<256xf32> to vector<1x256xf32>
    %cst_26 = arith.constant 2.560000e+02 : f32
    %45 = vector.broadcast %cst_26 : f32 to vector<1x256xf32>
    %46 = arith.divf %44, %45 : vector<1x256xf32>
    %47 = arith.mulf %41, %41 : vector<1x256xf32>
    %48 = arith.subf %46, %47 : vector<1x256xf32>
    %cst_27 = arith.constant 2.000000e-05 : f32
    %49 = vector.broadcast %cst_27 : f32 to vector<1x256xf32>
    %50 = arith.addf %48, %49 : vector<1x256xf32>
    %51 = math.rsqrt %50 : vector<1x256xf32>
    %52 = arith.mulf %36, %51 : vector<1x256xf32>
    %53 = arith.mulf %41, %52 : vector<1x256xf32>
    %54 = arith.subf %37, %53 : vector<1x256xf32>
    %55 = vector.broadcast %52 : vector<1x256xf32> to vector<256x256xf32>
    %56 = arith.mulf %35, %55 : vector<256x256xf32>
    %57 = vector.broadcast %54 : vector<1x256xf32> to vector<256x256xf32>
    %58 = arith.addf %56, %57 : vector<256x256xf32>
    %cst_28 = arith.constant 0.000000e+00 : f32
    %59 = vector.broadcast %cst_28 : f32 to vector<256x256xf32>
    %60 = arith.cmpf oge, %58, %59 : vector<256x256xf32>
    %cst_29 = arith.constant 1.000000e+00 : f32
    %cst_30 = arith.constant -1.000000e+00 : f32
    %61 = vector.broadcast %cst_29 : f32 to vector<256x256xf32>
    %62 = vector.broadcast %cst_30 : f32 to vector<256x256xf32>
    %63 = arith.select %60, %61, %62 : vector<256x256xi1>, vector<256x256xf32>
    %64 = arith.truncf %63 : vector<256x256xf32> to vector<256x256xbf16>
    %c0_31 = arith.constant 0 : index
    %c0_32 = arith.constant 0 : index
    %65 = vector.load %arg15[%c0_31, %c0_32] : memref<256x256xbf16, #tpu.memory_space<vmem>>, vector<256x256xbf16>
    tpu.vector_store %arg15[%c0_31, %c0_32], %64 {strides = array<i32>} : memref<256x256xbf16, #tpu.memory_space<vmem>>, vector<256x256xbf16>,
    %c0_33 = arith.constant 0 : index
    %c0_34 = arith.constant 0 : index
    %66 = vector.load %arg7[%c0_33, %c0_34] : memref<256x128xbf16, #tpu.memory_space<vmem>>, vector<256x128xbf16>
    %cst_35 = arith.constant dense<0.000000e+00> : vector<256x128xf32>
    %67 = tpu.matmul %64, %66, %cst_35 {dimension_numbers = #tpu.dot_dimension_numbers<[1], [0], [0], [1], [0, 0, 1, 1], [], []>} : vector<256x256xbf16>, vector<256x128xbf16>, vector<256x128xf32> -> vector<256x128xf32>
    %c0_36 = arith.constant 0 : index
    %c0_37 = arith.constant 0 : index
    %68 = vector.load %arg8[%c0_36, %c0_37] : memref<1x128xf32, #tpu.memory_space<vmem>>, vector<1x128xf32>
    %69 = vector.broadcast %68 : vector<1x128xf32> to vector<256x128xf32>
    %70 = arith.addf %67, %69 : vector<256x128xf32>
    %c0_38 = arith.constant 0 : index
    %c0_39 = arith.constant 0 : index
    %71 = vector.load %arg9[%c0_38, %c0_39] : memref<1x128xf32, #tpu.memory_space<vmem>>, vector<1x128xf32>
    %c0_40 = arith.constant 0 : index
    %c0_41 = arith.constant 0 : index
    %72 = vector.load %arg10[%c0_40, %c0_41] : memref<1x128xf32, #tpu.memory_space<vmem>>, vector<1x128xf32>
    %cst_42 = arith.constant dense<0.000000e+00> : vector<128xf32>
    %73 = vector.multi_reduction <add>, %70, %cst_42 [0] : vector<256x128xf32> to vector<128xf32>
    %74 = vector.shape_cast %73 : vector<128xf32> to vector<1x128xf32>
    %cst_43 = arith.constant 2.560000e+02 : f32
    %75 = vector.broadcast %cst_43 : f32 to vector<1x128xf32>
    %76 = arith.divf %74, %75 : vector<1x128xf32>
    %77 = arith.mulf %70, %70 : vector<256x128xf32>
    %cst_44 = arith.constant dense<0.000000e+00> : vector<128xf32>
    %78 = vector.multi_reduction <add>, %77, %cst_44 [0] : vector<256x128xf32> to vector<128xf32>
    %79 = vector.shape_cast %78 : vector<128xf32> to vector<1x128xf32>
    %cst_45 = arith.constant 2.560000e+02 : f32
    %80 = vector.broadcast %cst_45 : f32 to vector<1x128xf32>
    %81 = arith.divf %79, %80 : vector<1x128xf32>
    %82 = arith.mulf %76, %76 : vector<1x128xf32>
    %83 = arith.subf %81, %82 : vector<1x128xf32>
    %cst_46 = arith.constant 2.000000e-05 : f32
    %84 = vector.broadcast %cst_46 : f32 to vector<1x128xf32>
    %85 = arith.addf %83, %84 : vector<1x128xf32>
    %86 = math.rsqrt %85 : vector<1x128xf32>
    %87 = arith.mulf %71, %86 : vector<1x128xf32>
    %88 = arith.mulf %76, %87 : vector<1x128xf32>
    %89 = arith.subf %72, %88 : vector<1x128xf32>
    %90 = vector.broadcast %87 : vector<1x128xf32> to vector<256x128xf32>
    %91 = arith.mulf %70, %90 : vector<256x128xf32>
    %92 = vector.broadcast %89 : vector<1x128xf32> to vector<256x128xf32>
    %93 = arith.addf %91, %92 : vector<256x128xf32>
    %cst_47 = arith.constant 0.000000e+00 : f32
    %94 = vector.broadcast %cst_47 : f32 to vector<256x128xf32>
    %95 = arith.cmpf oge, %93, %94 : vector<256x128xf32>
    %cst_48 = arith.constant 1.000000e+00 : f32
    %cst_49 = arith.constant -1.000000e+00 : f32
    %96 = vector.broadcast %cst_48 : f32 to vector<256x128xf32>
    %97 = vector.broadcast %cst_49 : f32 to vector<256x128xf32>
    %98 = arith.select %95, %96, %97 : vector<256x128xi1>, vector<256x128xf32>
    %99 = arith.truncf %98 : vector<256x128xf32> to vector<256x128xbf16>
    %c0_50 = arith.constant 0 : index
    %c0_51 = arith.constant 0 : index
    %100 = vector.load %arg16[%c0_50, %c0_51] : memref<256x128xbf16, #tpu.memory_space<vmem>>, vector<256x128xbf16>
    tpu.vector_store %arg16[%c0_50, %c0_51], %99 {strides = array<i32>} : memref<256x128xbf16, #tpu.memory_space<vmem>>, vector<256x128xbf16>,
    %c0_52 = arith.constant 0 : index
    %c0_53 = arith.constant 0 : index
    %101 = vector.load %arg11[%c0_52, %c0_53] : memref<128x128xbf16, #tpu.memory_space<vmem>>, vector<128x128xbf16>
    %cst_54 = arith.constant dense<0.000000e+00> : vector<256x128xf32>
    %102 = tpu.matmul %99, %101, %cst_54 {dimension_numbers = #tpu.dot_dimension_numbers<[1], [0], [0], [1], [0, 0, 1, 1], [], []>} : vector<256x128xbf16>, vector<128x128xbf16>, vector<256x128xf32> -> vector<256x128xf32>
    %c0_55 = arith.constant 0 : index
    %c0_56 = arith.constant 0 : index
    %103 = vector.load %arg12[%c0_55, %c0_56] : memref<1x128xf32, #tpu.memory_space<vmem>>, vector<1x128xf32>
    %104 = vector.broadcast %103 : vector<1x128xf32> to vector<256x128xf32>
    %105 = arith.addf %102, %104 : vector<256x128xf32>
    %c0_57 = arith.constant 0 : index
    %c0_58 = arith.constant 0 : index
    %106 = vector.load %arg13[%c0_57, %c0_58] : memref<256x128xf32, #tpu.memory_space<vmem>>, vector<256x128xf32>
    tpu.vector_store %arg13[%c0_57, %c0_58], %105 {strides = array<i32>} : memref<256x128xf32, #tpu.memory_space<vmem>>, vector<256x128xf32>,
    return
  }
}

</mosaic_0001>

<llo_original>
// kernel: bnn_forward.1
$region0: #{bnn_forward.1}
  #allocation0 [shape = 'u32[]', space=smem, size = 0x4, offset = 0x4, fixed_abs, tag = 'smem constant byte address 0x4 - core index']
  #allocation1 [shape = 'u32[72,128]{1,0:T(1,128)}', space=vmem, size = 0x9000, scoped, tag = 'internal scratch']
  %s0 = inlined_call_operand.vmem [shape: f32[256,896], index: 0, kind: input, shape index: {}]
  %s1 = inlined_call_operand.vmem [shape: f32[1,896], index: 1, kind: input, shape index: {}]
  %s2 = inlined_call_operand.vmem [shape: f32[1,896], index: 2, kind: input, shape index: {}]
  %s3 = inlined_call_operand.vmem [shape: bf16[896,256], index: 3, kind: input, shape index: {}]
  %s4 = inlined_call_operand.vmem [shape: f32[1,256], index: 4, kind: input, shape index: {}]
  %s5 = inlined_call_operand.vmem [shape: f32[1,256], index: 5, kind: input, shape index: {}]
  %s6 = inlined_call_operand.vmem [shape: f32[1,256], index: 6, kind: input, shape index: {}]
  %s7 = inlined_call_operand.vmem [shape: bf16[256,128], index: 7, kind: input, shape index: {}]
  %s8 = inlined_call_operand.vmem [shape: f32[1,128], index: 8, kind: input, shape index: {}]
  %s9 = inlined_call_operand.vmem [shape: f32[1,128], index: 9, kind: input, shape index: {}]
  %s10 = inlined_call_operand.vmem [shape: f32[1,128], index: 10, kind: input, shape index: {}]
  %s11 = inlined_call_operand.vmem [shape: bf16[128,128], index: 11, kind: input, shape index: {}]
  %s12 = inlined_call_operand.vmem [shape: f32[1,128], index: 12, kind: input, shape index: {}]
  %s13 = inlined_call_operand.hbm [shape: f32[256,128], index: 13, kind: output, shape index: {0}]
  %s14 = inlined_call_operand.hbm [shape: bf16[256,896], index: 14, kind: output, shape index: {1}]
  %s15 = inlined_call_operand.hbm [shape: bf16[256,256], index: 15, kind: output, shape index: {2}]
  %s16 = inlined_call_operand.hbm [shape: bf16[256,128], index: 16, kind: output, shape index: {3}]
  %17 = xla_tuple %s13, %s14, %s15, %s16
  %s18 = sld [smem:[#allocation0]]
  $region86: #{bnn_forward.1} parent=0
    _
  %s20 = ssub.s32 1, %s18
  %s21 = scalar_select 0, %s20, %s18
  $region1: #{bnn_forward.1} parent=0
    #allocation2 [shape = 'u8[131072]{0}', space=vmem, size = 0x20000, scoped, tag = 'output window, operand 0, single buffered']
    #allocation3 [shape = 's32[1]{0}', space=sflag, size = 0x4, scoped, tag = 'scoped memory for bnn_forward.1']
    #allocation4 [shape = 'u8[458752]{0}', space=vmem, size = 0x70000, scoped, tag = 'output window, operand 1, single buffered']
    #allocation5 [shape = 's32[1]{0}', space=sflag, size = 0x4, scoped, tag = 'scoped memory for bnn_forward.1']
    #allocation6 [shape = 'u8[131072]{0}', space=vmem, size = 0x20000, scoped, tag = 'output window, operand 2, single buffered']
    #allocation7 [shape = 'u8[65536]{0}', space=vmem, size = 0x10000, scoped, tag = 'output window, operand 3, single buffered']
    #allocation8 [shape = 's32[1]{0}', space=sflag, size = 0x4, scoped, tag = 'scoped memory for bnn_forward.1']
    %22 = vsyncpa [#allocation3], 0
    %23 = vsyncpa [#allocation5], 0
    %24 = vsyncpa [#allocation8], 0
    // Predicated region
    $region2: #{bnn_forward.1} parent=1 // pred_check
      _
    $region3: #{bnn_forward.1} parent=1 // pred_check_branch
      %26 = sbr.rel (0) target = $region5
    $region4: #{bnn_forward.1} parent=1 // pred_region
      _
    $region5: #{bnn_forward.1} parent=1 // pred_fallthru
      _
    // Predicated region
    $region6: #{bnn_forward.1} parent=1 // pred_check
      _
    $region7: #{bnn_forward.1} parent=1 // pred_check_branch
      %28 = sbr.rel (0) target = $region9
    $region8: #{bnn_forward.1} parent=1 // pred_region
      _
    $region9: #{bnn_forward.1} parent=1 // pred_fallthru
      _
    // Predicated region
    $region10: #{bnn_forward.1} parent=1 // pred_check
      _
    $region11: #{bnn_forward.1} parent=1 // pred_check_branch
      %30 = sbr.rel (0) target = $region13
    $region12: #{bnn_forward.1} parent=1 // pred_region
      _
    $region13: #{bnn_forward.1} parent=1 // pred_fallthru
      _
    // Predicated region
    $region14: #{bnn_forward.1} parent=1 // pred_check
      _
    $region15: #{bnn_forward.1} parent=1 // pred_check_branch
      %32 = sbr.rel (0) target = $region17
    $region16: #{bnn_forward.1} parent=1 // pred_region
      _
    $region17: #{bnn_forward.1} parent=1 // pred_fallthru
      _
    // Predicated region
    $region18: #{bnn_forward.1} parent=1 // pred_check
      _
    $region19: #{bnn_forward.1} parent=1 // pred_check_branch
      %34 = sbr.rel (0) target = $region21
    $region20: #{bnn_forward.1} parent=1 // pred_region
      _
    $region21: #{bnn_forward.1} parent=1 // pred_fallthru
      _
    // Predicated region
    $region22: #{bnn_forward.1} parent=1 // pred_check
      _
    $region23: #{bnn_forward.1} parent=1 // pred_check_branch
      %36 = sbr.rel (0) target = $region25
    $region24: #{bnn_forward.1} parent=1 // pred_region
      _
    $region25: #{bnn_forward.1} parent=1 // pred_fallthru
      _
    // Predicated region
    $region26: #{bnn_forward.1} parent=1 // pred_check
      _
    $region27: #{bnn_forward.1} parent=1 // pred_check_branch
      %38 = sbr.rel (0) target = $region29
    $region28: #{bnn_forward.1} parent=1 // pred_region
      _
    $region29: #{bnn_forward.1} parent=1 // pred_fallthru
      _
    // Predicated region
    $region30: #{bnn_forward.1} parent=1 // pred_check
      _
    $region31: #{bnn_forward.1} parent=1 // pred_check_branch
      %40 = sbr.rel (0) target = $region33
    $region32: #{bnn_forward.1} parent=1 // pred_region
      _
    $region33: #{bnn_forward.1} parent=1 // pred_fallthru
      _
    // Predicated region
    $region34: #{bnn_forward.1} parent=1 // pred_check
      _
    $region35: #{bnn_forward.1} parent=1 // pred_check_branch
      %42 = sbr.rel (0) target = $region37
    $region36: #{bnn_forward.1} parent=1 // pred_region
      _
    $region37: #{bnn_forward.1} parent=1 // pred_fallthru
      _
    // Predicated region
    $region38: #{bnn_forward.1} parent=1 // pred_check
      _
    $region39: #{bnn_forward.1} parent=1 // pred_check_branch
      %44 = sbr.rel (0) target = $region41
    $region40: #{bnn_forward.1} parent=1 // pred_region
      _
    $region41: #{bnn_forward.1} parent=1 // pred_fallthru
      _
    // Predicated region
    $region42: #{bnn_forward.1} parent=1 // pred_check
      _
    $region43: #{bnn_forward.1} parent=1 // pred_check_branch
      %46 = sbr.rel (0) target = $region45
    $region44: #{bnn_forward.1} parent=1 // pred_region
      _
    $region45: #{bnn_forward.1} parent=1 // pred_fallthru
      _
    // Predicated region
    $region46: #{bnn_forward.1} parent=1 // pred_check
      _
    $region47: #{bnn_forward.1} parent=1 // pred_check_branch
      %48 = sbr.rel (0) target = $region49
    $region48: #{bnn_forward.1} parent=1 // pred_region
      _
    $region49: #{bnn_forward.1} parent=1 // pred_fallthru
      _
    // Predicated region
    $region50: #{bnn_forward.1} parent=1 // pred_check
      _
    $region51: #{bnn_forward.1} parent=1 // pred_check_branch
      %50 = sbr.rel (0) target = $region53
    $region52: #{bnn_forward.1} parent=1 // pred_region
      _
    $region53: #{bnn_forward.1} parent=1 // pred_fallthru
      _
    %v51 = vld [vmem:[%s0] sm:$0xff]
    %v52 = vld [vmem:[%s0 + $0x8] sm:$0xff]
    %v53 = vld [vmem:[%s0 + $0x10] sm:$0xff]
    %v54 = vld [vmem:[%s0 + $0x18] sm:$0xff]
    %v55 = vld [vmem:[%s0 + $0x20] sm:$0xff]
    %v56 = vld [vmem:[%s0 + $0x28] sm:$0xff]
    %v57 = vld [vmem:[%s0 + $0x30] sm:$0xff]
    %v58 = vld [vmem:[%s0 + $0x38] sm:$0xff]
    %v59 = vld [vmem:[%s0 + $0x40] sm:$0xff]
    %v60 = vld [vmem:[%s0 + $0x48] sm:$0xff]
    %v61 = vld [vmem:[%s0 + $0x50] sm:$0xff]
    %v62 = vld [vmem:[%s0 + $0x58] sm:$0xff]
    %v63 = vld [vmem:[%s0 + $0x60] sm:$0xff]
    %v64 = vld [vmem:[%s0 + $0x68] sm:$0xff]
    %v65 = vld [vmem:[%s0 + $0x70] sm:$0xff]
    %v66 = vld [vmem:[%s0 + $0x78] sm:$0xff]
    %v67 = vld [vmem:[%s0 + $0x80] sm:$0xff]
    %v68 = vld [vmem:[%s0 + $0x88] sm:$0xff]
    %v69 = vld [vmem:[%s0 + $0x90] sm:$0xff]
    %v70 = vld [vmem:[%s0 + $0x98] sm:$0xff]
    %v71 = vld [vmem:[%s0 + $0xa0] sm:$0xff]
    %v72 = vld [vmem:[%s0 + $0xa8] sm:$0xff]
    %v73 = vld [vmem:[%s0 + $0xb0] sm:$0xff]
    %v74 = vld [vmem:[%s0 + $0xb8] sm:$0xff]
    %v75 = vld [vmem:[%s0 + $0xc0] sm:$0xff]
    %v76 = vld [vmem:[%s0 + $0xc8] sm:$0xff]
    %v77 = vld [vmem:[%s0 + $0xd0] sm:$0xff]
    %v78 = vld [vmem:[%s0 + $0xd8] sm:$0xff]
    %v79 = vld [vmem:[%s0 + $0xe0] sm:$0xff]
    %v80 = vld [vmem:[%s0 + $0xe8] sm:$0xff]
    %v81 = vld [vmem:[%s0 + $0xf0] sm:$0xff]
    %v82 = vld [vmem:[%s0 + $0xf8] sm:$0xff]
    %v83 = vld [vmem:[%s0 + $0x100] sm:$0xff]
    %v84 = vld [vmem:[%s0 + $0x108] sm:$0xff]
    %v85 = vld [vmem:[%s0 + $0x110] sm:$0xff]
    %v86 = vld [vmem:[%s0 + $0x118] sm:$0xff]
    %v87 = vld [vmem:[%s0 + $0x120] sm:$0xff]
    %v88 = vld [vmem:[%s0 + $0x128] sm:$0xff]
    %v89 = vld [vmem:[%s0 + $0x130] sm:$0xff]
    %v90 = vld [vmem:[%s0 + $0x138] sm:$0xff]
    %v91 = vld [vmem:[%s0 + $0x140] sm:$0xff]
    %v92 = vld [vmem:[%s0 + $0x148] sm:$0xff]
    %v93 = vld [vmem:[%s0 + $0x150] sm:$0xff]
    %v94 = vld [vmem:[%s0 + $0x158] sm:$0xff]
    %v95 = vld [vmem:[%s0 + $0x160] sm:$0xff]
    %v96 = vld [vmem:[%s0 + $0x168] sm:$0xff]
    %v97 = vld [vmem:[%s0 + $0x170] sm:$0xff]
    %v98 = vld [vmem:[%s0 + $0x178] sm:$0xff]
    %v99 = vld [vmem:[%s0 + $0x180] sm:$0xff]
    %v100 = vld [vmem:[%s0 + $0x188] sm:$0xff]
    %v101 = vld [vmem:[%s0 + $0x190] sm:$0xff]
    %v102 = vld [vmem:[%s0 + $0x198] sm:$0xff]
    %v103 = vld [vmem:[%s0 + $0x1a0] sm:$0xff]
    %v104 = vld [vmem:[%s0 + $0x1a8] sm:$0xff]
    %v105 = vld [vmem:[%s0 + $0x1b0] sm:$0xff]
    %v106 = vld [vmem:[%s0 + $0x1b8] sm:$0xff]
    %v107 = vld [vmem:[%s0 + $0x1c0] sm:$0xff]
    %v108 = vld [vmem:[%s0 + $0x1c8] sm:$0xff]
    %v109 = vld [vmem:[%s0 + $0x1d0] sm:$0xff]
    %v110 = vld [vmem:[%s0 + $0x1d8] sm:$0xff]
    %v111 = vld [vmem:[%s0 + $0x1e0] sm:$0xff]
    %v112 = vld [vmem:[%s0 + $0x1e8] sm:$0xff]
    %v113 = vld [vmem:[%s0 + $0x1f0] sm:$0xff]
    %v114 = vld [vmem:[%s0 + $0x1f8] sm:$0xff]
    %v115 = vld [vmem:[%s0 + $0x200] sm:$0xff]
    %v116 = vld [vmem:[%s0 + $0x208] sm:$0xff]
    %v117 = vld [vmem:[%s0 + $0x210] sm:$0xff]
    %v118 = vld [vmem:[%s0 + $0x218] sm:$0xff]
    %v119 = vld [vmem:[%s0 + $0x220] sm:$0xff]
    %v120 = vld [vmem:[%s0 + $0x228] sm:$0xff]
    %v121 = vld [vmem:[%s0 + $0x230] sm:$0xff]
    %v122 = vld [vmem:[%s0 + $0x238] sm:$0xff]
    %v123 = vld [vmem:[%s0 + $0x240] sm:$0xff]
    %v124 = vld [vmem:[%s0 + $0x248] sm:$0xff]
    %v125 = vld [vmem:[%s0 + $0x250] sm:$0xff]
    %v126 = vld [vmem:[%s0 + $0x258] sm:$0xff]
    %v127 = vld [vmem:[%s0 + $0x260] sm:$0xff]
    %v128 = vld [vmem:[%s0 + $0x268] sm:$0xff]
    %v129 = vld [vmem:[%s0 + $0x270] sm:$0xff]
    %v130 = vld [vmem:[%s0 + $0x278] sm:$0xff]
    %v131 = vld [vmem:[%s0 + $0x280] sm:$0xff]
    %v132 = vld [vmem:[%s0 + $0x288] sm:$0xff]
    %v133 = vld [vmem:[%s0 + $0x290] sm:$0xff]
    %v134 = vld [vmem:[%s0 + $0x298] sm:$0xff]
    %v135 = vld [vmem:[%s0 + $0x2a0] sm:$0xff]
    %v136 = vld [vmem:[%s0 + $0x2a8] sm:$0xff]
    %v137 = vld [vmem:[%s0 + $0x2b0] sm:$0xff]
    %v138 = vld [vmem:[%s0 + $0x2b8] sm:$0xff]
    %v139 = vld [vmem:[%s0 + $0x2c0] sm:$0xff]
    %v140 = vld [vmem:[%s0 + $0x2c8] sm:$0xff]
    %v141 = vld [vmem:[%s0 + $0x2d0] sm:$0xff]
    %v142 = vld [vmem:[%s0 + $0x2d8] sm:$0xff]
    %v143 = vld [vmem:[%s0 + $0x2e0] sm:$0xff]
    %v144 = vld [vmem:[%s0 + $0x2e8] sm:$0xff]
    %v145 = vld [vmem:[%s0 + $0x2f0] sm:$0xff]
    %v146 = vld [vmem:[%s0 + $0x2f8] sm:$0xff]
    %v147 = vld [vmem:[%s0 + $0x300] sm:$0xff]
    %v148 = vld [vmem:[%s0 + $0x308] sm:$0xff]
    %v149 = vld [vmem:[%s0 + $0x310] sm:$0xff]
    %v150 = vld [vmem:[%s0 + $0x318] sm:$0xff]
    %v151 = vld [vmem:[%s0 + $0x320] sm:$0xff]
    %v152 = vld [vmem:[%s0 + $0x328] sm:$0xff]
    %v153 = vld [vmem:[%s0 + $0x330] sm:$0xff]
    %v154 = vld [vmem:[%s0 + $0x338] sm:$0xff]
    %v155 = vld [vmem:[%s0 + $0x340] sm:$0xff]
    %v156 = vld [vmem:[%s0 + $0x348] sm:$0xff]
    %v157 = vld [vmem:[%s0 + $0x350] sm:$0xff]
    %v158 = vld [vmem:[%s0 + $0x358] sm:$0xff]
    %v159 = vld [vmem:[%s0 + $0x360] sm:$0xff]
    %v160 = vld [vmem:[%s0 + $0x368] sm:$0xff]
    %v161 = vld [vmem:[%s0 + $0x370] sm:$0xff]
    %v162 = vld [vmem:[%s0 + $0x378] sm:$0xff]
    %v163 = vld [vmem:[%s0 + $0x380] sm:$0xff]
    %v164 = vld [vmem:[%s0 + $0x388] sm:$0xff]
    %v165 = vld [vmem:[%s0 + $0x390] sm:$0xff]
    %v166 = vld [vmem:[%s0 + $0x398] sm:$0xff]
    %v167 = vld [vmem:[%s0 + $0x3a0] sm:$0xff]
    %v168 = vld [vmem:[%s0 + $0x3a8] sm:$0xff]
    %v169 = vld [vmem:[%s0 + $0x3b0] sm:$0xff]
    %v170 = vld [vmem:[%s0 + $0x3b8] sm:$0xff]
    %v171 = vld [vmem:[%s0 + $0x3c0] sm:$0xff]
    %v172 = vld [vmem:[%s0 + $0x3c8] sm:$0xff]
    %v173 = vld [vmem:[%s0 + $0x3d0] sm:$0xff]
    %v174 = vld [vmem:[%s0 + $0x3d8] sm:$0xff]
    %v175 = vld [vmem:[%s0 + $0x3e0] sm:$0xff]
    %v176 = vld [vmem:[%s0 + $0x3e8] sm:$0xff]
    %v177 = vld [vmem:[%s0 + $0x3f0] sm:$0xff]
    %v178 = vld [vmem:[%s0 + $0x3f8] sm:$0xff]
    %v179 = vld [vmem:[%s0 + $0x400] sm:$0xff]
    %v180 = vld [vmem:[%s0 + $0x408] sm:$0xff]
    %v181 = vld [vmem:[%s0 + $0x410] sm:$0xff]
    %v182 = vld [vmem:[%s0 + $0x418] sm:$0xff]
    %v183 = vld [vmem:[%s0 + $0x420] sm:$0xff]
    %v184 = vld [vmem:[%s0 + $0x428] sm:$0xff]
    %v185 = vld [vmem:[%s0 + $0x430] sm:$0xff]
    %v186 = vld [vmem:[%s0 + $0x438] sm:$0xff]
    %v187 = vld [vmem:[%s0 + $0x440] sm:$0xff]
    %v188 = vld [vmem:[%s0 + $0x448] sm:$0xff]
    %v189 = vld [vmem:[%s0 + $0x450] sm:$0xff]
    %v190 = vld [vmem:[%s0 + $0x458] sm:$0xff]
    %v191 = vld [vmem:[%s0 + $0x460] sm:$0xff]
    %v192 = vld [vmem:[%s0 + $0x468] sm:$0xff]
    %v193 = vld [vmem:[%s0 + $0x470] sm:$0xff]
    %v194 = vld [vmem:[%s0 + $0x478] sm:$0xff]
    %v195 = vld [vmem:[%s0 + $0x480] sm:$0xff]
    %v196 = vld [vmem:[%s0 + $0x488] sm:$0xff]
    %v197 = vld [vmem:[%s0 + $0x490] sm:$0xff]
    %v198 = vld [vmem:[%s0 + $0x498] sm:$0xff]
    %v199 = vld [vmem:[%s0 + $0x4a0] sm:$0xff]
    %v200 = vld [vmem:[%s0 + $0x4a8] sm:$0xff]
    %v201 = vld [vmem:[%s0 + $0x4b0] sm:$0xff]
    %v202 = vld [vmem:[%s0 + $0x4b8] sm:$0xff]
    %v203 = vld [vmem:[%s0 + $0x4c0] sm:$0xff]
    %v204 = vld [vmem:[%s0 + $0x4c8] sm:$0xff]
    %v205 = vld [vmem:[%s0 + $0x4d0] sm:$0xff]
    %v206 = vld [vmem:[%s0 + $0x4d8] sm:$0xff]
    %v207 = vld [vmem:[%s0 + $0x4e0] sm:$0xff]
    %v208 = vld [vmem:[%s0 + $0x4e8] sm:$0xff]
    %v209 = vld [vmem:[%s0 + $0x4f0] sm:$0xff]
    %v210 = vld [vmem:[%s0 + $0x4f8] sm:$0xff]
    %v211 = vld [vmem:[%s0 + $0x500] sm:$0xff]
    %v212 = vld [vmem:[%s0 + $0x508] sm:$0xff]
    %v213 = vld [vmem:[%s0 + $0x510] sm:$0xff]
    %v214 = vld [vmem:[%s0 + $0x518] sm:$0xff]
    %v215 = vld [vmem:[%s0 + $0x520] sm:$0xff]
    %v216 = vld [vmem:[%s0 + $0x528] sm:$0xff]
    %v217 = vld [vmem:[%s0 + $0x530] sm:$0xff]
    %v218 = vld [vmem:[%s0 + $0x538] sm:$0xff]
    %v219 = vld [vmem:[%s0 + $0x540] sm:$0xff]
    %v220 = vld [vmem:[%s0 + $0x548] sm:$0xff]
    %v221 = vld [vmem:[%s0 + $0x550] sm:$0xff]
    %v222 = vld [vmem:[%s0 + $0x558] sm:$0xff]
    %v223 = vld [vmem:[%s0 + $0x560] sm:$0xff]
    %v224 = vld [vmem:[%s0 + $0x568] sm:$0xff]
    %v225 = vld [vmem:[%s0 + $0x570] sm:$0xff]
    %v226 = vld [vmem:[%s0 + $0x578] sm:$0xff]
    %v227 = vld [vmem:[%s0 + $0x580] sm:$0xff]
    %v228 = vld [vmem:[%s0 + $0x588] sm:$0xff]
    %v229 = vld [vmem:[%s0 + $0x590] sm:$0xff]
    %v230 = vld [vmem:[%s0 + $0x598] sm:$0xff]
    %v231 = vld [vmem:[%s0 + $0x5a0] sm:$0xff]
    %v232 = vld [vmem:[%s0 + $0x5a8] sm:$0xff]
    %v233 = vld [vmem:[%s0 + $0x5b0] sm:$0xff]
    %v234 = vld [vmem:[%s0 + $0x5b8] sm:$0xff]
    %v235 = vld [vmem:[%s0 + $0x5c0] sm:$0xff]
    %v236 = vld [vmem:[%s0 + $0x5c8] sm:$0xff]
    %v237 = vld [vmem:[%s0 + $0x5d0] sm:$0xff]
    %v238 = vld [vmem:[%s0 + $0x5d8] sm:$0xff]
    %v239 = vld [vmem:[%s0 + $0x5e0] sm:$0xff]
    %v240 = vld [vmem:[%s0 + $0x5e8] sm:$0xff]
    %v241 = vld [vmem:[%s0 + $0x5f0] sm:$0xff]
    %v242 = vld [vmem:[%s0 + $0x5f8] sm:$0xff]
    %v243 = vld [vmem:[%s0 + $0x600] sm:$0xff]
    %v244 = vld [vmem:[%s0 + $0x608] sm:$0xff]
    %v245 = vld [vmem:[%s0 + $0x610] sm:$0xff]
    %v246 = vld [vmem:[%s0 + $0x618] sm:$0xff]
    %v247 = vld [vmem:[%s0 + $0x620] sm:$0xff]
    %v248 = vld [vmem:[%s0 + $0x628] sm:$0xff]
    %v249 = vld [vmem:[%s0 + $0x630] sm:$0xff]
    %v250 = vld [vmem:[%s0 + $0x638] sm:$0xff]
    %v251 = vld [vmem:[%s0 + $0x640] sm:$0xff]
    %v252 = vld [vmem:[%s0 + $0x648] sm:$0xff]
    %v253 = vld [vmem:[%s0 + $0x650] sm:$0xff]
    %v254 = vld [vmem:[%s0 + $0x658] sm:$0xff]
    %v255 = vld [vmem:[%s0 + $0x660] sm:$0xff]
    %v256 = vld [vmem:[%s0 + $0x668] sm:$0xff]
    %v257 = vld [vmem:[%s0 + $0x670] sm:$0xff]
    %v258 = vld [vmem:[%s0 + $0x678] sm:$0xff]
    %v259 = vld [vmem:[%s0 + $0x680] sm:$0xff]
    %v260 = vld [vmem:[%s0 + $0x688] sm:$0xff]
    %v261 = vld [vmem:[%s0 + $0x690] sm:$0xff]
    %v262 = vld [vmem:[%s0 + $0x698] sm:$0xff]
    %v263 = vld [vmem:[%s0 + $0x6a0] sm:$0xff]
    %v264 = vld [vmem:[%s0 + $0x6a8] sm:$0xff]
    %v265 = vld [vmem:[%s0 + $0x6b0] sm:$0xff]
    %v266 = vld [vmem:[%s0 + $0x6b8] sm:$0xff]
    %v267 = vld [vmem:[%s0 + $0x6c0] sm:$0xff]
    %v268 = vld [vmem:[%s0 + $0x6c8] sm:$0xff]
    %v269 = vld [vmem:[%s0 + $0x6d0] sm:$0xff]
    %v270 = vld [vmem:[%s0 + $0x6d8] sm:$0xff]
    %v271 = vld [vmem:[%s0 + $0x6e0] sm:$0xff]
    %v272 = vld [vmem:[%s0 + $0x6e8] sm:$0xff]
    %v273 = vld [vmem:[%s0 + $0x6f0] sm:$0xff]
    %v274 = vld [vmem:[%s0 + $0x6f8] sm:$0xff]
    %v275 = vld [vmem:[%s1] sm:$0xff]
    %v276 = vld [vmem:[%s2] sm:$0xff]
    %v277 = vadd.f32 %v51, %v58
    %v278 = vadd.f32 %v277, %v65
    %v279 = vadd.f32 %v278, %v72
    %v280 = vadd.f32 %v279, %v79
    %v281 = vadd.f32 %v280, %v86
    %v282 = vadd.f32 %v281, %v93
    %v283 = vadd.f32 %v282, %v100
    %v284 = vadd.f32 %v283, %v107
    %v285 = vadd.f32 %v284, %v114
    %v286 = vadd.f32 %v285, %v121
    %v287 = vadd.f32 %v286, %v128
    %v288 = vadd.f32 %v287, %v135
    %v289 = vadd.f32 %v288, %v142
    %v290 = vadd.f32 %v289, %v149
    %v291 = vadd.f32 %v290, %v156
    %v292 = vadd.f32 %v291, %v163
    %v293 = vadd.f32 %v292, %v170
    %v294 = vadd.f32 %v293, %v177
    %v295 = vadd.f32 %v294, %v184
    %v296 = vadd.f32 %v295, %v191
    %v297 = vadd.f32 %v296, %v198
    %v298 = vadd.f32 %v297, %v205
    %v299 = vadd.f32 %v298, %v212
    %v300 = vadd.f32 %v299, %v219
    %v301 = vadd.f32 %v300, %v226
    %v302 = vadd.f32 %v301, %v233
    %v303 = vadd.f32 %v302, %v240
    %v304 = vadd.f32 %v303, %v247
    %v305 = vadd.f32 %v304, %v254
    %v306 = vadd.f32 %v305, %v261
    %v307 = vadd.f32 %v306, %v268
    %v308 = vrot.slane %v307, 4
    %v309 = vadd.f32 %v307, %v308
    %v310 = vrot.slane %v309, 2
    %v311 = vadd.f32 %v309, %v310
    %v312 = vrot.slane %v311, 1
    %v313 = vadd.f32 %v311, %v312
    %v314 = vadd.f32 %v52, %v59
    %v315 = vadd.f32 %v314, %v66
    %v316 = vadd.f32 %v315, %v73
    %v317 = vadd.f32 %v316, %v80
    %v318 = vadd.f32 %v317, %v87
    %v319 = vadd.f32 %v318, %v94
    %v320 = vadd.f32 %v319, %v101
    %v321 = vadd.f32 %v320, %v108
    %v322 = vadd.f32 %v321, %v115
    %v323 = vadd.f32 %v322, %v122
    %v324 = vadd.f32 %v323, %v129
    %v325 = vadd.f32 %v324, %v136
    %v326 = vadd.f32 %v325, %v143
    %v327 = vadd.f32 %v326, %v150
    %v328 = vadd.f32 %v327, %v157
    %v329 = vadd.f32 %v328, %v164
    %v330 = vadd.f32 %v329, %v171
    %v331 = vadd.f32 %v330, %v178
    %v332 = vadd.f32 %v331, %v185
    %v333 = vadd.f32 %v332, %v192
    %v334 = vadd.f32 %v333, %v199
    %v335 = vadd.f32 %v334, %v206
    %v336 = vadd.f32 %v335, %v213
    %v337 = vadd.f32 %v336, %v220
    %v338 = vadd.f32 %v337, %v227
    %v339 = vadd.f32 %v338, %v234
    %v340 = vadd.f32 %v339, %v241
    %v341 = vadd.f32 %v340, %v248
    %v342 = vadd.f32 %v341, %v255
    %v343 = vadd.f32 %v342, %v262
    %v344 = vadd.f32 %v343, %v269
    %v345 = vrot.slane %v344, 4
    %v346 = vadd.f32 %v344, %v345
    %v347 = vrot.slane %v346, 2
    %v348 = vadd.f32 %v346, %v347
    %v349 = vrot.slane %v348, 1
    %v350 = vadd.f32 %v348, %v349
    %v351 = vadd.f32 %v53, %v60
    %v352 = vadd.f32 %v351, %v67
    %v353 = vadd.f32 %v352, %v74
    %v354 = vadd.f32 %v353, %v81
    %v355 = vadd.f32 %v354, %v88
    %v356 = vadd.f32 %v355, %v95
    %v357 = vadd.f32 %v356, %v102
    %v358 = vadd.f32 %v357, %v109
    %v359 = vadd.f32 %v358, %v116
    %v360 = vadd.f32 %v359, %v123
    %v361 = vadd.f32 %v360, %v130
    %v362 = vadd.f32 %v361, %v137
    %v363 = vadd.f32 %v362, %v144
    %v364 = vadd.f32 %v363, %v151
    %v365 = vadd.f32 %v364, %v158
    %v366 = vadd.f32 %v365, %v165
    %v367 = vadd.f32 %v366, %v172
    %v368 = vadd.f32 %v367, %v179
    %v369 = vadd.f32 %v368, %v186
    %v370 = vadd.f32 %v369, %v193
    %v371 = vadd.f32 %v370, %v200
    %v372 = vadd.f32 %v371, %v207
    %v373 = vadd.f32 %v372, %v214
    %v374 = vadd.f32 %v373, %v221
    %v375 = vadd.f32 %v374, %v228
    %v376 = vadd.f32 %v375, %v235
    %v377 = vadd.f32 %v376, %v242
    %v378 = vadd.f32 %v377, %v249
    %v379 = vadd.f32 %v378, %v256
    %v380 = vadd.f32 %v379, %v263
    %v381 = vadd.f32 %v380, %v270
    %v382 = vrot.slane %v381, 4
    %v383 = vadd.f32 %v381, %v382
    %v384 = vrot.slane %v383, 2
    %v385 = vadd.f32 %v383, %v384
    %v386 = vrot.slane %v385, 1
    %v387 = vadd.f32 %v385, %v386
    %v388 = vadd.f32 %v54, %v61
    %v389 = vadd.f32 %v388, %v68
    %v390 = vadd.f32 %v389, %v75
    %v391 = vadd.f32 %v390, %v82
    %v392 = vadd.f32 %v391, %v89
    %v393 = vadd.f32 %v392, %v96
    %v394 = vadd.f32 %v393, %v103
    %v395 = vadd.f32 %v394, %v110
    %v396 = vadd.f32 %v395, %v117
    %v397 = vadd.f32 %v396, %v124
    %v398 = vadd.f32 %v397, %v131
    %v399 = vadd.f32 %v398, %v138
    %v400 = vadd.f32 %v399, %v145
    %v401 = vadd.f32 %v400, %v152
    %v402 = vadd.f32 %v401, %v159
    %v403 = vadd.f32 %v402, %v166
    %v404 = vadd.f32 %v403, %v173
    %v405 = vadd.f32 %v404, %v180
    %v406 = vadd.f32 %v405, %v187
    %v407 = vadd.f32 %v406, %v194
    %v408 = vadd.f32 %v407, %v201
    %v409 = vadd.f32 %v408, %v208
    %v410 = vadd.f32 %v409, %v215
    %v411 = vadd.f32 %v410, %v222
    %v412 = vadd.f32 %v411, %v229
    %v413 = vadd.f32 %v412, %v236
    %v414 = vadd.f32 %v413, %v243
    %v415 = vadd.f32 %v414, %v250
    %v416 = vadd.f32 %v415, %v257
    %v417 = vadd.f32 %v416, %v264
    %v418 = vadd.f32 %v417, %v271
    %v419 = vrot.slane %v418, 4
    %v420 = vadd.f32 %v418, %v419
    %v421 = vrot.slane %v420, 2
    %v422 = vadd.f32 %v420, %v421
    %v423 = vrot.slane %v422, 1
    %v424 = vadd.f32 %v422, %v423
    %v425 = vadd.f32 %v55, %v62
    %v426 = vadd.f32 %v425, %v69
    %v427 = vadd.f32 %v426, %v76
    %v428 = vadd.f32 %v427, %v83
    %v429 = vadd.f32 %v428, %v90
    %v430 = vadd.f32 %v429, %v97
    %v431 = vadd.f32 %v430, %v104
    %v432 = vadd.f32 %v431, %v111
    %v433 = vadd.f32 %v432, %v118
    %v434 = vadd.f32 %v433, %v125
    %v435 = vadd.f32 %v434, %v132
    %v436 = vadd.f32 %v435, %v139
    %v437 = vadd.f32 %v436, %v146
    %v438 = vadd.f32 %v437, %v153
    %v439 = vadd.f32 %v438, %v160
    %v440 = vadd.f32 %v439, %v167
    %v441 = vadd.f32 %v440, %v174
    %v442 = vadd.f32 %v441, %v181
    %v443 = vadd.f32 %v442, %v188
    %v444 = vadd.f32 %v443, %v195
    %v445 = vadd.f32 %v444, %v202
    %v446 = vadd.f32 %v445, %v209
    %v447 = vadd.f32 %v446, %v216
    %v448 = vadd.f32 %v447, %v223
    %v449 = vadd.f32 %v448, %v230
    %v450 = vadd.f32 %v449, %v237
    %v451 = vadd.f32 %v450, %v244
    %v452 = vadd.f32 %v451, %v251
    %v453 = vadd.f32 %v452, %v258
    %v454 = vadd.f32 %v453, %v265
    %v455 = vadd.f32 %v454, %v272
    %v456 = vrot.slane %v455, 4
    %v457 = vadd.f32 %v455, %v456
    %v458 = vrot.slane %v457, 2
    %v459 = vadd.f32 %v457, %v458
    %v460 = vrot.slane %v459, 1
    %v461 = vadd.f32 %v459, %v460
    %v462 = vadd.f32 %v56, %v63
    %v463 = vadd.f32 %v462, %v70
    %v464 = vadd.f32 %v463, %v77
    %v465 = vadd.f32 %v464, %v84
    %v466 = vadd.f32 %v465, %v91
    %v467 = vadd.f32 %v466, %v98
    %v468 = vadd.f32 %v467, %v105
    %v469 = vadd.f32 %v468, %v112
    %v470 = vadd.f32 %v469, %v119
    %v471 = vadd.f32 %v470, %v126
    %v472 = vadd.f32 %v471, %v133
    %v473 = vadd.f32 %v472, %v140
    %v474 = vadd.f32 %v473, %v147
    %v475 = vadd.f32 %v474, %v154
    %v476 = vadd.f32 %v475, %v161
    %v477 = vadd.f32 %v476, %v168
    %v478 = vadd.f32 %v477, %v175
    %v479 = vadd.f32 %v478, %v182
    %v480 = vadd.f32 %v479, %v189
    %v481 = vadd.f32 %v480, %v196
    %v482 = vadd.f32 %v481, %v203
    %v483 = vadd.f32 %v482, %v210
    %v484 = vadd.f32 %v483, %v217
    %v485 = vadd.f32 %v484, %v224
    %v486 = vadd.f32 %v485, %v231
    %v487 = vadd.f32 %v486, %v238
    %v488 = vadd.f32 %v487, %v245
    %v489 = vadd.f32 %v488, %v252
    %v490 = vadd.f32 %v489, %v259
    %v491 = vadd.f32 %v490, %v266
    %v492 = vadd.f32 %v491, %v273
    %v493 = vrot.slane %v492, 4
    %v494 = vadd.f32 %v492, %v493
    %v495 = vrot.slane %v494, 2
    %v496 = vadd.f32 %v494, %v495
    %v497 = vrot.slane %v496, 1
    %v498 = vadd.f32 %v496, %v497
    %v499 = vadd.f32 %v57, %v64
    %v500 = vadd.f32 %v499, %v71
    %v501 = vadd.f32 %v500, %v78
    %v502 = vadd.f32 %v501, %v85
    %v503 = vadd.f32 %v502, %v92
    %v504 = vadd.f32 %v503, %v99
    %v505 = vadd.f32 %v504, %v106
    %v506 = vadd.f32 %v505, %v113
    %v507 = vadd.f32 %v506, %v120
    %v508 = vadd.f32 %v507, %v127
    %v509 = vadd.f32 %v508, %v134
    %v510 = vadd.f32 %v509, %v141
    %v511 = vadd.f32 %v510, %v148
    %v512 = vadd.f32 %v511, %v155
    %v513 = vadd.f32 %v512, %v162
    %v514 = vadd.f32 %v513, %v169
    %v515 = vadd.f32 %v514, %v176
    %v516 = vadd.f32 %v515, %v183
    %v517 = vadd.f32 %v516, %v190
    %v518 = vadd.f32 %v517, %v197
    %v519 = vadd.f32 %v518, %v204
    %v520 = vadd.f32 %v519, %v211
    %v521 = vadd.f32 %v520, %v218
    %v522 = vadd.f32 %v521, %v225
    %v523 = vadd.f32 %v522, %v232
    %v524 = vadd.f32 %v523, %v239
    %v525 = vadd.f32 %v524, %v246
    %v526 = vadd.f32 %v525, %v253
    %v527 = vadd.f32 %v526, %v260
    %v528 = vadd.f32 %v527, %v267
    %v529 = vadd.f32 %v528, %v274
    %v530 = vrot.slane %v529, 4
    %v531 = vadd.f32 %v529, %v530
    %v532 = vrot.slane %v531, 2
    %v533 = vadd.f32 %v531, %v532
    %v534 = vrot.slane %v533, 1
    %v535 = vadd.f32 %v533, %v534
    %v536 = vrcp.pop 256.0
    %v537 = vmul.f32 256.0, %v536
    %v538 = vsub.f32 1.0, %v537
    %v539 = vmul.f32 %v536, %v538
    %v540 = vadd.f32 %v536, %v539
    %vm541 = vweird.f32 %v536
    %v542 = vsel %vm541, %v536, %v540
    %v543 = vmul.f32 %v313, %v542
    %v544 = vmul.f32 %v350, %v542
    %v545 = vmul.f32 %v387, %v542
    %v546 = vmul.f32 %v424, %v542
    %v547 = vmul.f32 %v461, %v542
    %v548 = vmul.f32 %v498, %v542
    %v549 = vmul.f32 %v535, %v542
    %v550 = vmul.f32 %v51, %v51
    %v551 = vmul.f32 %v52, %v52
    %v552 = vmul.f32 %v53, %v53
    %v553 = vmul.f32 %v54, %v54
    %v554 = vmul.f32 %v55, %v55
    %v555 = vmul.f32 %v56, %v56
    %v556 = vmul.f32 %v57, %v57
    %v557 = vmul.f32 %v58, %v58
    %v558 = vmul.f32 %v59, %v59
    %v559 = vmul.f32 %v60, %v60
    %v560 = vmul.f32 %v61, %v61
    %v561 = vmul.f32 %v62, %v62
    %v562 = vmul.f32 %v63, %v63
    %v563 = vmul.f32 %v64, %v64
    %v564 = vmul.f32 %v65, %v65
    %v565 = vmul.f32 %v66, %v66
    %v566 = vmul.f32 %v67, %v67
    %v567 = vmul.f32 %v68, %v68
    %v568 = vmul.f32 %v69, %v69
    %v569 = vmul.f32 %v70, %v70
    %v570 = vmul.f32 %v71, %v71
    %v571 = vmul.f32 %v72, %v72
    %v572 = vmul.f32 %v73, %v73
    %v573 = vmul.f32 %v74, %v74
    %v574 = vmul.f32 %v75, %v75
    %v575 = vmul.f32 %v76, %v76
    %v576 = vmul.f32 %v77, %v77
    %v577 = vmul.f32 %v78, %v78
    %v578 = vmul.f32 %v79, %v79
    %v579 = vmul.f32 %v80, %v80
    %v580 = vmul.f32 %v81, %v81
    %v581 = vmul.f32 %v82, %v82
    %v582 = vmul.f32 %v83, %v83
    %v583 = vmul.f32 %v84, %v84
    %v584 = vmul.f32 %v85, %v85
    %v585 = vmul.f32 %v86, %v86
    %v586 = vmul.f32 %v87, %v87
    %v587 = vmul.f32 %v88, %v88
    %v588 = vmul.f32 %v89, %v89
    %v589 = vmul.f32 %v90, %v90
    %v590 = vmul.f32 %v91, %v91
    %v591 = vmul.f32 %v92, %v92
    %v592 = vmul.f32 %v93, %v93
    %v593 = vmul.f32 %v94, %v94
    %v594 = vmul.f32 %v95, %v95
    %v595 = vmul.f32 %v96, %v96
    %v596 = vmul.f32 %v97, %v97
    %v597 = vmul.f32 %v98, %v98
    %v598 = vmul.f32 %v99, %v99
    %v599 = vmul.f32 %v100, %v100
    %v600 = vmul.f32 %v101, %v101
    %v601 = vmul.f32 %v102, %v102
    %v602 = vmul.f32 %v103, %v103
    %v603 = vmul.f32 %v104, %v104
    %v604 = vmul.f32 %v105, %v105
    %v605 = vmul.f32 %v106, %v106
    %v606 = vmul.f32 %v107, %v107
    %v607 = vmul.f32 %v108, %v108
    %v608 = vmul.f32 %v109, %v109
    %v609 = vmul.f32 %v110, %v110
    %v610 = vmul.f32 %v111, %v111
    %v611 = vmul.f32 %v112, %v112
    %v612 = vmul.f32 %v113, %v113
    %v613 = vmul.f32 %v114, %v114
    %v614 = vmul.f32 %v115, %v115
    %v615 = vmul.f32 %v116, %v116
    %v616 = vmul.f32 %v117, %v117
    %v617 = vmul.f32 %v118, %v118
    %v618 = vmul.f32 %v119, %v119
    %v619 = vmul.f32 %v120, %v120
    %v620 = vmul.f32 %v121, %v121
    %v621 = vmul.f32 %v122, %v122
    %v622 = vmul.f32 %v123, %v123
    %v623 = vmul.f32 %v124, %v124
    %v624 = vmul.f32 %v125, %v125
    %v625 = vmul.f32 %v126, %v126
    %v626 = vmul.f32 %v127, %v127
    %v627 = vmul.f32 %v128, %v128
    %v628 = vmul.f32 %v129, %v129
    %v629 = vmul.f32 %v130, %v130
    %v630 = vmul.f32 %v131, %v131
    %v631 = vmul.f32 %v132, %v132
    %v632 = vmul.f32 %v133, %v133
    %v633 = vmul.f32 %v134, %v134
    %v634 = vmul.f32 %v135, %v135
    %v635 = vmul.f32 %v136, %v136
    %v636 = vmul.f32 %v137, %v137
    %v637 = vmul.f32 %v138, %v138
    %v638 = vmul.f32 %v139, %v139
    %v639 = vmul.f32 %v140, %v140
    %v640 = vmul.f32 %v141, %v141
    %v641 = vmul.f32 %v142, %v142
    %v642 = vmul.f32 %v143, %v143
    %v643 = vmul.f32 %v144, %v144
    %v644 = vmul.f32 %v145, %v145
    %v645 = vmul.f32 %v146, %v146
    %v646 = vmul.f32 %v147, %v147
    %v647 = vmul.f32 %v148, %v148
    %v648 = vmul.f32 %v149, %v149
    %v649 = vmul.f32 %v150, %v150
    %v650 = vmul.f32 %v151, %v151
    %v651 = vmul.f32 %v152, %v152
    %v652 = vmul.f32 %v153, %v153
    %v653 = vmul.f32 %v154, %v154
    %v654 = vmul.f32 %v155, %v155
    %v655 = vmul.f32 %v156, %v156
    %v656 = vmul.f32 %v157, %v157
    %v657 = vmul.f32 %v158, %v158
    %v658 = vmul.f32 %v159, %v159
    %v659 = vmul.f32 %v160, %v160
    %v660 = vmul.f32 %v161, %v161
    %v661 = vmul.f32 %v162, %v162
    %v662 = vmul.f32 %v163, %v163
    %v663 = vmul.f32 %v164, %v164
    %v664 = vmul.f32 %v165, %v165
    %v665 = vmul.f32 %v166, %v166
    %v666 = vmul.f32 %v167, %v167
    %v667 = vmul.f32 %v168, %v168
    %v668 = vmul.f32 %v169, %v169
    %v669 = vmul.f32 %v170, %v170
    %v670 = vmul.f32 %v171, %v171
    %v671 = vmul.f32 %v172, %v172
    %v672 = vmul.f32 %v173, %v173
    %v673 = vmul.f32 %v174, %v174
    %v674 = vmul.f32 %v175, %v175
    %v675 = vmul.f32 %v176, %v176
    %v676 = vmul.f32 %v177, %v177
    %v677 = vmul.f32 %v178, %v178
    %v678 = vmul.f32 %v179, %v179
    %v679 = vmul.f32 %v180, %v180
    %v680 = vmul.f32 %v181, %v181
    %v681 = vmul.f32 %v182, %v182
    %v682 = vmul.f32 %v183, %v183
    %v683 = vmul.f32 %v184, %v184
    %v684 = vmul.f32 %v185, %v185
    %v685 = vmul.f32 %v186, %v186
    %v686 = vmul.f32 %v187, %v187
    %v687 = vmul.f32 %v188, %v188
    %v688 = vmul.f32 %v189, %v189
    %v689 = vmul.f32 %v190, %v190
    %v690 = vmul.f32 %v191, %v191
    %v691 = vmul.f32 %v192, %v192
    %v692 = vmul.f32 %v193, %v193
    %v693 = vmul.f32 %v194, %v194
    %v694 = vmul.f32 %v195, %v195
    %v695 = vmul.f32 %v196, %v196
    %v696 = vmul.f32 %v197, %v197
    %v697 = vmul.f32 %v198, %v198
    %v698 = vmul.f32 %v199, %v199
    %v699 = vmul.f32 %v200, %v200
    %v700 = vmul.f32 %v201, %v201
    %v701 = vmul.f32 %v202, %v202
    %v702 = vmul.f32 %v203, %v203
    %v703 = vmul.f32 %v204, %v204
    %v704 = vmul.f32 %v205, %v205
    %v705 = vmul.f32 %v206, %v206
    %v706 = vmul.f32 %v207, %v207
    %v707 = vmul.f32 %v208, %v208
    %v708 = vmul.f32 %v209, %v209
    %v709 = vmul.f32 %v210, %v210
    %v710 = vmul.f32 %v211, %v211
    %v711 = vmul.f32 %v212, %v212
    %v712 = vmul.f32 %v213, %v213
    %v713 = vmul.f32 %v214, %v214
    %v714 = vmul.f32 %v215, %v215
    %v715 = vmul.f32 %v216, %v216
    %v716 = vmul.f32 %v217, %v217
    %v717 = vmul.f32 %v218, %v218
    %v718 = vmul.f32 %v219, %v219
    %v719 = vmul.f32 %v220, %v220
    %v720 = vmul.f32 %v221, %v221
    %v721 = vmul.f32 %v222, %v222
    %v722 = vmul.f32 %v223, %v223
    %v723 = vmul.f32 %v224, %v224
    %v724 = vmul.f32 %v225, %v225
    %v725 = vmul.f32 %v226, %v226
    %v726 = vmul.f32 %v227, %v227
    %v727 = vmul.f32 %v228, %v228
    %v728 = vmul.f32 %v229, %v229
    %v729 = vmul.f32 %v230, %v230
    %v730 = vmul.f32 %v231, %v231
    %v731 = vmul.f32 %v232, %v232
    %v732 = vmul.f32 %v233, %v233
    %v733 = vmul.f32 %v234, %v234
    %v734 = vmul.f32 %v235, %v235
    %v735 = vmul.f32 %v236, %v236
    %v736 = vmul.f32 %v237, %v237
    %v737 = vmul.f32 %v238, %v238
    %v738 = vmul.f32 %v239, %v239
    %v739 = vmul.f32 %v240, %v240
    %v740 = vmul.f32 %v241, %v241
    %v741 = vmul.f32 %v242, %v242
    %v742 = vmul.f32 %v243, %v243
    %v743 = vmul.f32 %v244, %v244
    %v744 = vmul.f32 %v245, %v245
    %v745 = vmul.f32 %v246, %v246
    %v746 = vmul.f32 %v247, %v247
    %v747 = vmul.f32 %v248, %v248
    %v748 = vmul.f32 %v249, %v249
    %v749 = vmul.f32 %v250, %v250
    %v750 = vmul.f32 %v251, %v251
    %v751 = vmul.f32 %v252, %v252
    %v752 = vmul.f32 %v253, %v253
    %v753 = vmul.f32 %v254, %v254
    %v754 = vmul.f32 %v255, %v255
    %v755 = vmul.f32 %v256, %v256
    %v756 = vmul.f32 %v257, %v257
    %v757 = vmul.f32 %v258, %v258
    %v758 = vmul.f32 %v259, %v259
    %v759 = vmul.f32 %v260, %v260
    %v760 = vmul.f32 %v261, %v261
    %v761 = vmul.f32 %v262, %v262
    %v762 = vmul.f32 %v263, %v263
    %v763 = vmul.f32 %v264, %v264
    %v764 = vmul.f32 %v265, %v265
    %v765 = vmul.f32 %v266, %v266
    %v766 = vmul.f32 %v267, %v267
    %v767 = vmul.f32 %v268, %v268
    %v768 = vmul.f32 %v269, %v269
    %v769 = vmul.f32 %v270, %v270
    %v770 = vmul.f32 %v271, %v271
    %v771 = vmul.f32 %v272, %v272
    %v772 = vmul.f32 %v273, %v273
    %v773 = vmul.f32 %v274, %v274
    %v774 = vadd.f32 %v550, %v557
    %v775 = vadd.f32 %v774, %v564
    %v776 = vadd.f32 %v775, %v571
    %v777 = vadd.f32 %v776, %v578
    %v778 = vadd.f32 %v777, %v585
    %v779 = vadd.f32 %v778, %v592
    %v780 = vadd.f32 %v779, %v599
    %v781 = vadd.f32 %v780, %v606
    %v782 = vadd.f32 %v781, %v613
    %v783 = vadd.f32 %v782, %v620
    %v784 = vadd.f32 %v783, %v627
    %v785 = vadd.f32 %v784, %v634
    %v786 = vadd.f32 %v785, %v641
    %v787 = vadd.f32 %v786, %v648
    %v788 = vadd.f32 %v787, %v655
    %v789 = vadd.f32 %v788, %v662
    %v790 = vadd.f32 %v789, %v669
    %v791 = vadd.f32 %v790, %v676
    %v792 = vadd.f32 %v791, %v683
    %v793 = vadd.f32 %v792, %v690
    %v794 = vadd.f32 %v793, %v697
    %v795 = vadd.f32 %v794, %v704
    %v796 = vadd.f32 %v795, %v711
    %v797 = vadd.f32 %v796, %v718
    %v798 = vadd.f32 %v797, %v725
    %v799 = vadd.f32 %v798, %v732
    %v800 = vadd.f32 %v799, %v739
    %v801 = vadd.f32 %v800, %v746
    %v802 = vadd.f32 %v801, %v753
    %v803 = vadd.f32 %v802, %v760
    %v804 = vadd.f32 %v803, %v767
    %v805 = vrot.slane %v804, 4
    %v806 = vadd.f32 %v804, %v805
    %v807 = vrot.slane %v806, 2
    %v808 = vadd.f32 %v806, %v807
    %v809 = vrot.slane %v808, 1
    %v810 = vadd.f32 %v808, %v809
    %v811 = vadd.f32 %v551, %v558
    %v812 = vadd.f32 %v811, %v565
    %v813 = vadd.f32 %v812, %v572
    %v814 = vadd.f32 %v813, %v579
    %v815 = vadd.f32 %v814, %v586
    %v816 = vadd.f32 %v815, %v593
    %v817 = vadd.f32 %v816, %v600
    %v818 = vadd.f32 %v817, %v607
    %v819 = vadd.f32 %v818, %v614
    %v820 = vadd.f32 %v819, %v621
    %v821 = vadd.f32 %v820, %v628
    %v822 = vadd.f32 %v821, %v635
    %v823 = vadd.f32 %v822, %v642
    %v824 = vadd.f32 %v823, %v649
    %v825 = vadd.f32 %v824, %v656
    %v826 = vadd.f32 %v825, %v663
    %v827 = vadd.f32 %v826, %v670
    %v828 = vadd.f32 %v827, %v677
    %v829 = vadd.f32 %v828, %v684
    %v830 = vadd.f32 %v829, %v691
    %v831 = vadd.f32 %v830, %v698
    %v832 = vadd.f32 %v831, %v705
    %v833 = vadd.f32 %v832, %v712
    %v834 = vadd.f32 %v833, %v719
    %v835 = vadd.f32 %v834, %v726
    %v836 = vadd.f32 %v835, %v733
    %v837 = vadd.f32 %v836, %v740
    %v838 = vadd.f32 %v837, %v747
    %v839 = vadd.f32 %v838, %v754
    %v840 = vadd.f32 %v839, %v761
    %v841 = vadd.f32 %v840, %v768
    %v842 = vrot.slane %v841, 4
    %v843 = vadd.f32 %v841, %v842
    %v844 = vrot.slane %v843, 2
    %v845 = vadd.f32 %v843, %v844
    %v846 = vrot.slane %v845, 1
    %v847 = vadd.f32 %v845, %v846
    %v848 = vadd.f32 %v552, %v559
    %v849 = vadd.f32 %v848, %v566
    %v850 = vadd.f32 %v849, %v573
    %v851 = vadd.f32 %v850, %v580
    %v852 = vadd.f32 %v851, %v587
    %v853 = vadd.f32 %v852, %v594
    %v854 = vadd.f32 %v853, %v601
    %v855 = vadd.f32 %v854, %v608
    %v856 = vadd.f32 %v855, %v615
    %v857 = vadd.f32 %v856, %v622
    %v858 = vadd.f32 %v857, %v629
    %v859 = vadd.f32 %v858, %v636
    %v860 = vadd.f32 %v859, %v643
    %v861 = vadd.f32 %v860, %v650
    %v862 = vadd.f32 %v861, %v657
    %v863 = vadd.f32 %v862, %v664
    %v864 = vadd.f32 %v863, %v671
    %v865 = vadd.f32 %v864, %v678
    %v866 = vadd.f32 %v865, %v685
    %v867 = vadd.f32 %v866, %v692
    %v868 = vadd.f32 %v867, %v699
    %v869 = vadd.f32 %v868, %v706
    %v870 = vadd.f32 %v869, %v713
    %v871 = vadd.f32 %v870, %v720
    %v872 = vadd.f32 %v871, %v727
    %v873 = vadd.f32 %v872, %v734
    %v874 = vadd.f32 %v873, %v741
    %v875 = vadd.f32 %v874, %v748
    %v876 = vadd.f32 %v875, %v755
    %v877 = vadd.f32 %v876, %v762
    %v878 = vadd.f32 %v877, %v769
    %v879 = vrot.slane %v878, 4
    %v880 = vadd.f32 %v878, %v879
    %v881 = vrot.slane %v880, 2
    %v882 = vadd.f32 %v880, %v881
    %v883 = vrot.slane %v882, 1
    %v884 = vadd.f32 %v882, %v883
    %v885 = vadd.f32 %v553, %v560
    %v886 = vadd.f32 %v885, %v567
    %v887 = vadd.f32 %v886, %v574
    %v888 = vadd.f32 %v887, %v581
    %v889 = vadd.f32 %v888, %v588
    %v890 = vadd.f32 %v889, %v595
    %v891 = vadd.f32 %v890, %v602
    %v892 = vadd.f32 %v891, %v609
    %v893 = vadd.f32 %v892, %v616
    %v894 = vadd.f32 %v893, %v623
    %v895 = vadd.f32 %v894, %v630
    %v896 = vadd.f32 %v895, %v637
    %v897 = vadd.f32 %v896, %v644
    %v898 = vadd.f32 %v897, %v651
    %v899 = vadd.f32 %v898, %v658
    %v900 = vadd.f32 %v899, %v665
    %v901 = vadd.f32 %v900, %v672
    %v902 = vadd.f32 %v901, %v679
    %v903 = vadd.f32 %v902, %v686
    %v904 = vadd.f32 %v903, %v693
    %v905 = vadd.f32 %v904, %v700
    %v906 = vadd.f32 %v905, %v707
    %v907 = vadd.f32 %v906, %v714
    %v908 = vadd.f32 %v907, %v721
    %v909 = vadd.f32 %v908, %v728
    %v910 = vadd.f32 %v909, %v735
    %v911 = vadd.f32 %v910, %v742
    %v912 = vadd.f32 %v911, %v749
    %v913 = vadd.f32 %v912, %v756
    %v914 = vadd.f32 %v913, %v763
    %v915 = vadd.f32 %v914, %v770
    %v916 = vrot.slane %v915, 4
    %v917 = vadd.f32 %v915, %v916
    %v918 = vrot.slane %v917, 2
    %v919 = vadd.f32 %v917, %v918
    %v920 = vrot.slane %v919, 1
    %v921 = vadd.f32 %v919, %v920
    %v922 = vadd.f32 %v554, %v561
    %v923 = vadd.f32 %v922, %v568
    %v924 = vadd.f32 %v923, %v575
    %v925 = vadd.f32 %v924, %v582
    %v926 = vadd.f32 %v925, %v589
    %v927 = vadd.f32 %v926, %v596
    %v928 = vadd.f32 %v927, %v603
    %v929 = vadd.f32 %v928, %v610
    %v930 = vadd.f32 %v929, %v617
    %v931 = vadd.f32 %v930, %v624
    %v932 = vadd.f32 %v931, %v631
    %v933 = vadd.f32 %v932, %v638
    %v934 = vadd.f32 %v933, %v645
    %v935 = vadd.f32 %v934, %v652
    %v936 = vadd.f32 %v935, %v659
    %v937 = vadd.f32 %v936, %v666
    %v938 = vadd.f32 %v937, %v673
    %v939 = vadd.f32 %v938, %v680
    %v940 = vadd.f32 %v939, %v687
    %v941 = vadd.f32 %v940, %v694
    %v942 = vadd.f32 %v941, %v701
    %v943 = vadd.f32 %v942, %v708
    %v944 = vadd.f32 %v943, %v715
    %v945 = vadd.f32 %v944, %v722
    %v946 = vadd.f32 %v945, %v729
    %v947 = vadd.f32 %v946, %v736
    %v948 = vadd.f32 %v947, %v743
    %v949 = vadd.f32 %v948, %v750
    %v950 = vadd.f32 %v949, %v757
    %v951 = vadd.f32 %v950, %v764
    %v952 = vadd.f32 %v951, %v771
    %v953 = vrot.slane %v952, 4
    %v954 = vadd.f32 %v952, %v953
    %v955 = vrot.slane %v954, 2
    %v956 = vadd.f32 %v954, %v955
    %v957 = vrot.slane %v956, 1
    %v958 = vadd.f32 %v956, %v957
    %v959 = vadd.f32 %v555, %v562
    %v960 = vadd.f32 %v959, %v569
    %v961 = vadd.f32 %v960, %v576
    %v962 = vadd.f32 %v961, %v583
    %v963 = vadd.f32 %v962, %v590
    %v964 = vadd.f32 %v963, %v597
    %v965 = vadd.f32 %v964, %v604
    %v966 = vadd.f32 %v965, %v611
    %v967 = vadd.f32 %v966, %v618
    %v968 = vadd.f32 %v967, %v625
    %v969 = vadd.f32 %v968, %v632
    %v970 = vadd.f32 %v969, %v639
    %v971 = vadd.f32 %v970, %v646
    %v972 = vadd.f32 %v971, %v653
    %v973 = vadd.f32 %v972, %v660
    %v974 = vadd.f32 %v973, %v667
    %v975 = vadd.f32 %v974, %v674
    %v976 = vadd.f32 %v975, %v681
    %v977 = vadd.f32 %v976, %v688
    %v978 = vadd.f32 %v977, %v695
    %v979 = vadd.f32 %v978, %v702
    %v980 = vadd.f32 %v979, %v709
    %v981 = vadd.f32 %v980, %v716
    %v982 = vadd.f32 %v981, %v723
    %v983 = vadd.f32 %v982, %v730
    %v984 = vadd.f32 %v983, %v737
    %v985 = vadd.f32 %v984, %v744
    %v986 = vadd.f32 %v985, %v751
    %v987 = vadd.f32 %v986, %v758
    %v988 = vadd.f32 %v987, %v765
    %v989 = vadd.f32 %v988, %v772
    %v990 = vrot.slane %v989, 4
    %v991 = vadd.f32 %v989, %v990
    %v992 = vrot.slane %v991, 2
    %v993 = vadd.f32 %v991, %v992
    %v994 = vrot.slane %v993, 1
    %v995 = vadd.f32 %v993, %v994
    %v996 = vadd.f32 %v556, %v563
    %v997 = vadd.f32 %v996, %v570
    %v998 = vadd.f32 %v997, %v577
    %v999 = vadd.f32 %v998, %v584
    %v1000 = vadd.f32 %v999, %v591
    %v1001 = vadd.f32 %v1000, %v598
    %v1002 = vadd.f32 %v1001, %v605
    %v1003 = vadd.f32 %v1002, %v612
    %v1004 = vadd.f32 %v1003, %v619
    %v1005 = vadd.f32 %v1004, %v626
    %v1006 = vadd.f32 %v1005, %v633
    %v1007 = vadd.f32 %v1006, %v640
    %v1008 = vadd.f32 %v1007, %v647
    %v1009 = vadd.f32 %v1008, %v654
    %v1010 = vadd.f32 %v1009, %v661
    %v1011 = vadd.f32 %v1010, %v668
    %v1012 = vadd.f32 %v1011, %v675
    %v1013 = vadd.f32 %v1012, %v682
    %v1014 = vadd.f32 %v1013, %v689
    %v1015 = vadd.f32 %v1014, %v696
    %v1016 = vadd.f32 %v1015, %v703
    %v1017 = vadd.f32 %v1016, %v710
    %v1018 = vadd.f32 %v1017, %v717
    %v1019 = vadd.f32 %v1018, %v724
    %v1020 = vadd.f32 %v1019, %v731
    %v1021 = vadd.f32 %v1020, %v738
    %v1022 = vadd.f32 %v1021, %v745
    %v1023 = vadd.f32 %v1022, %v752
    %v1024 = vadd.f32 %v1023, %v759
    %v1025 = vadd.f32 %v1024, %v766
    %v1026 = vadd.f32 %v1025, %v773
    %v1027 = vrot.slane %v1026, 4
    %v1028 = vadd.f32 %v1026, %v1027
    %v1029 = vrot.slane %v1028, 2
    %v1030 = vadd.f32 %v1028, %v1029
    %v1031 = vrot.slane %v1030, 1
    %v1032 = vadd.f32 %v1030, %v1031
    %v1033 = vmul.f32 %v810, %v542
    %v1034 = vmul.f32 %v847, %v542
    %v1035 = vmul.f32 %v884, %v542
    %v1036 = vmul.f32 %v921, %v542
    %v1037 = vmul.f32 %v958, %v542
    %v1038 = vmul.f32 %v995, %v542
    %v1039 = vmul.f32 %v1032, %v542
    %v1040 = vmul.f32 %v543, %v543
    %v1041 = vmul.f32 %v544, %v544
    %v1042 = vmul.f32 %v545, %v545
    %v1043 = vmul.f32 %v546, %v546
    %v1044 = vmul.f32 %v547, %v547
    %v1045 = vmul.f32 %v548, %v548
    %v1046 = vmul.f32 %v549, %v549
    %v1047 = vsub.f32 %v1033, %v1040
    %v1048 = vsub.f32 %v1034, %v1041
    %v1049 = vsub.f32 %v1035, %v1042
    %v1050 = vsub.f32 %v1036, %v1043
    %v1051 = vsub.f32 %v1037, %v1044
    %v1052 = vsub.f32 %v1038, %v1045
    %v1053 = vsub.f32 %v1039, %v1046
    %v1054 = vadd.f32 %v1047, 2e-05
    %v1055 = vadd.f32 %v1048, 2e-05
    %v1056 = vadd.f32 %v1049, 2e-05
    %v1057 = vadd.f32 %v1050, 2e-05
    %v1058 = vadd.f32 %v1051, 2e-05
    %v1059 = vadd.f32 %v1052, 2e-05
    %v1060 = vadd.f32 %v1053, 2e-05
    %v1061 = vrsqrt.pop %v1054
    %v1062 = vmul.f32 %v1061, %v1054
    %v1063 = vmul.f32 %v1062, %v1061
    %v1064 = vmul.f32 0.5, %v1063
    %v1065 = vsub.f32 1.5, %v1064
    %v1066 = vmul.f32 %v1061, %v1065
    %vm1067 = vweird.f32 %v1054
    %vm1068 = vweird.f32 %v1061
    %vm1069 = vmor %vm1067, %vm1068
    %v1070 = vsel %vm1069, %v1061, %v1066
    %v1071 = vrsqrt.pop %v1055
    %v1072 = vmul.f32 %v1071, %v1055
    %v1073 = vmul.f32 %v1072, %v1071
    %v1074 = vmul.f32 0.5, %v1073
    %v1075 = vsub.f32 1.5, %v1074
    %v1076 = vmul.f32 %v1071, %v1075
    %vm1077 = vweird.f32 %v1055
    %vm1078 = vweird.f32 %v1071
    %vm1079 = vmor %vm1077, %vm1078
    %v1080 = vsel %vm1079, %v1071, %v1076
    %v1081 = vrsqrt.pop %v1056
    %v1082 = vmul.f32 %v1081, %v1056
    %v1083 = vmul.f32 %v1082, %v1081
    %v1084 = vmul.f32 0.5, %v1083
    %v1085 = vsub.f32 1.5, %v1084
    %v1086 = vmul.f32 %v1081, %v1085
    %vm1087 = vweird.f32 %v1056
    %vm1088 = vweird.f32 %v1081
    %vm1089 = vmor %vm1087, %vm1088
    %v1090 = vsel %vm1089, %v1081, %v1086
    %v1091 = vrsqrt.pop %v1057
    %v1092 = vmul.f32 %v1091, %v1057
    %v1093 = vmul.f32 %v1092, %v1091
    %v1094 = vmul.f32 0.5, %v1093
    %v1095 = vsub.f32 1.5, %v1094
    %v1096 = vmul.f32 %v1091, %v1095
    %vm1097 = vweird.f32 %v1057
    %vm1098 = vweird.f32 %v1091
    %vm1099 = vmor %vm1097, %vm1098
    %v1100 = vsel %vm1099, %v1091, %v1096
    %v1101 = vrsqrt.pop %v1058
    %v1102 = vmul.f32 %v1101, %v1058
    %v1103 = vmul.f32 %v1102, %v1101
    %v1104 = vmul.f32 0.5, %v1103
    %v1105 = vsub.f32 1.5, %v1104
    %v1106 = vmul.f32 %v1101, %v1105
    %vm1107 = vweird.f32 %v1058
    %vm1108 = vweird.f32 %v1101
    %vm1109 = vmor %vm1107, %vm1108
    %v1110 = vsel %vm1109, %v1101, %v1106
    %v1111 = vrsqrt.pop %v1059
    %v1112 = vmul.f32 %v1111, %v1059
    %v1113 = vmul.f32 %v1112, %v1111
    %v1114 = vmul.f32 0.5, %v1113
    %v1115 = vsub.f32 1.5, %v1114
    %v1116 = vmul.f32 %v1111, %v1115
    %vm1117 = vweird.f32 %v1059
    %vm1118 = vweird.f32 %v1111
    %vm1119 = vmor %vm1117, %vm1118
    %v1120 = vsel %vm1119, %v1111, %v1116
    %v1121 = vrsqrt.pop %v1060
    %v1122 = vmul.f32 %v1121, %v1060
    %v1123 = vmul.f32 %v1122, %v1121
    %v1124 = vmul.f32 0.5, %v1123
    %v1125 = vsub.f32 1.5, %v1124
    %v1126 = vmul.f32 %v1121, %v1125
    %vm1127 = vweird.f32 %v1060
    %vm1128 = vweird.f32 %v1121
    %vm1129 = vmor %vm1127, %vm1128
    %v1130 = vsel %vm1129, %v1121, %v1126
    %v1138 = vrot.slane %v1080, 7
    %v1139 = vrot.slane %v1090, 6
    %v1140 = vrot.slane %v1100, 5
    %v1141 = vrot.slane %v1110, 4
    %v1142 = vrot.slane %v1120, 3
    %v1143 = vrot.slane %v1130, 2
    %vm1144 = vcmask 1040384
    %v1145 = vsel %vm1144, %v1070, %v1138
    %vm1146 = vcmask 1042434
    %v1147 = vsel %vm1146, %v1139, %v1140
    %vm1148 = vcmask 1041408
    %v1149 = vsel %vm1148, %v1145, %v1147
    %vm1150 = vcmask 1044484
    %v1151 = vsel %vm1150, %v1141, %v1142
    %vm1152 = vcmask 1045508
    %v1153 = vsel %vm1152, %v1151, %v1143
    %vm1154 = vcmask 1043456
    %v1155 = vsel %vm1154, %v1149, %v1153
    %v1157 = vmul.f32 %v275, %v1155
    %v1159 = vperm.slane %v1157, 0
    %v1160 = vperm.slane %v1157, 1
    %v1161 = vperm.slane %v1157, 2
    %v1162 = vperm.slane %v1157, 3
    %v1163 = vperm.slane %v1157, 4
    %v1164 = vperm.slane %v1157, 5
    %v1165 = vperm.slane %v1157, 6
    %v1173 = vmul.f32 %v543, %v1159
    %v1174 = vmul.f32 %v544, %v1160
    %v1175 = vmul.f32 %v545, %v1161
    %v1176 = vmul.f32 %v546, %v1162
    %v1177 = vmul.f32 %v547, %v1163
    %v1178 = vmul.f32 %v548, %v1164
    %v1179 = vmul.f32 %v549, %v1165
    %v1187 = vrot.slane %v1174, 7
    %v1188 = vrot.slane %v1175, 6
    %v1189 = vrot.slane %v1176, 5
    %v1190 = vrot.slane %v1177, 4
    %v1191 = vrot.slane %v1178, 3
    %v1192 = vrot.slane %v1179, 2
    %v1193 = vsel %vm1144, %v1173, %v1187
    %v1194 = vsel %vm1146, %v1188, %v1189
    %v1195 = vsel %vm1148, %v1193, %v1194
    %v1196 = vsel %vm1150, %v1190, %v1191
    %v1197 = vsel %vm1152, %v1196, %v1192
    %v1198 = vsel %vm1154, %v1195, %v1197
    %v1200 = vsub.f32 %v276, %v1198
    %v1201 = vmul.f32 %v51, %v1159
    %v1202 = vmul.f32 %v52, %v1160
    %v1203 = vmul.f32 %v53, %v1161
    %v1204 = vmul.f32 %v54, %v1162
    %v1205 = vmul.f32 %v55, %v1163
    %v1206 = vmul.f32 %v56, %v1164
    %v1207 = vmul.f32 %v57, %v1165
    %v1208 = vmul.f32 %v58, %v1159
    %v1209 = vmul.f32 %v59, %v1160
    %v1210 = vmul.f32 %v60, %v1161
    %v1211 = vmul.f32 %v61, %v1162
    %v1212 = vmul.f32 %v62, %v1163
    %v1213 = vmul.f32 %v63, %v1164
    %v1214 = vmul.f32 %v64, %v1165
    %v1215 = vmul.f32 %v65, %v1159
    %v1216 = vmul.f32 %v66, %v1160
    %v1217 = vmul.f32 %v67, %v1161
    %v1218 = vmul.f32 %v68, %v1162
    %v1219 = vmul.f32 %v69, %v1163
    %v1220 = vmul.f32 %v70, %v1164
    %v1221 = vmul.f32 %v71, %v1165
    %v1222 = vmul.f32 %v72, %v1159
    %v1223 = vmul.f32 %v73, %v1160
    %v1224 = vmul.f32 %v74, %v1161
    %v1225 = vmul.f32 %v75, %v1162
    %v1226 = vmul.f32 %v76, %v1163
    %v1227 = vmul.f32 %v77, %v1164
    %v1228 = vmul.f32 %v78, %v1165
    %v1229 = vmul.f32 %v79, %v1159
    %v1230 = vmul.f32 %v80, %v1160
    %v1231 = vmul.f32 %v81, %v1161
    %v1232 = vmul.f32 %v82, %v1162
    %v1233 = vmul.f32 %v83, %v1163
    %v1234 = vmul.f32 %v84, %v1164
    %v1235 = vmul.f32 %v85, %v1165
    %v1236 = vmul.f32 %v86, %v1159
    %v1237 = vmul.f32 %v87, %v1160
    %v1238 = vmul.f32 %v88, %v1161
    %v1239 = vmul.f32 %v89, %v1162
    %v1240 = vmul.f32 %v90, %v1163
    %v1241 = vmul.f32 %v91, %v1164
    %v1242 = vmul.f32 %v92, %v1165
    %v1243 = vmul.f32 %v93, %v1159
    %v1244 = vmul.f32 %v94, %v1160
    %v1245 = vmul.f32 %v95, %v1161
    %v1246 = vmul.f32 %v96, %v1162
    %v1247 = vmul.f32 %v97, %v1163
    %v1248 = vmul.f32 %v98, %v1164
    %v1249 = vmul.f32 %v99, %v1165
    %v1250 = vmul.f32 %v100, %v1159
    %v1251 = vmul.f32 %v101, %v1160
    %v1252 = vmul.f32 %v102, %v1161
    %v1253 = vmul.f32 %v103, %v1162
    %v1254 = vmul.f32 %v104, %v1163
    %v1255 = vmul.f32 %v105, %v1164
    %v1256 = vmul.f32 %v106, %v1165
    %v1257 = vmul.f32 %v107, %v1159
    %v1258 = vmul.f32 %v108, %v1160
    %v1259 = vmul.f32 %v109, %v1161
    %v1260 = vmul.f32 %v110, %v1162
    %v1261 = vmul.f32 %v111, %v1163
    %v1262 = vmul.f32 %v112, %v1164
    %v1263 = vmul.f32 %v113, %v1165
    %v1264 = vmul.f32 %v114, %v1159
    %v1265 = vmul.f32 %v115, %v1160
    %v1266 = vmul.f32 %v116, %v1161
    %v1267 = vmul.f32 %v117, %v1162
    %v1268 = vmul.f32 %v118, %v1163
    %v1269 = vmul.f32 %v119, %v1164
    %v1270 = vmul.f32 %v120, %v1165
    %v1271 = vmul.f32 %v121, %v1159
    %v1272 = vmul.f32 %v122, %v1160
    %v1273 = vmul.f32 %v123, %v1161
    %v1274 = vmul.f32 %v124, %v1162
    %v1275 = vmul.f32 %v125, %v1163
    %v1276 = vmul.f32 %v126, %v1164
    %v1277 = vmul.f32 %v127, %v1165
    %v1278 = vmul.f32 %v128, %v1159
    %v1279 = vmul.f32 %v129, %v1160
    %v1280 = vmul.f32 %v130, %v1161
    %v1281 = vmul.f32 %v131, %v1162
    %v1282 = vmul.f32 %v132, %v1163
    %v1283 = vmul.f32 %v133, %v1164
    %v1284 = vmul.f32 %v134, %v1165
    %v1285 = vmul.f32 %v135, %v1159
    %v1286 = vmul.f32 %v136, %v1160
    %v1287 = vmul.f32 %v137, %v1161
    %v1288 = vmul.f32 %v138, %v1162
    %v1289 = vmul.f32 %v139, %v1163
    %v1290 = vmul.f32 %v140, %v1164
    %v1291 = vmul.f32 %v141, %v1165
    %v1292 = vmul.f32 %v142, %v1159
    %v1293 = vmul.f32 %v143, %v1160
    %v1294 = vmul.f32 %v144, %v1161
    %v1295 = vmul.f32 %v145, %v1162
    %v1296 = vmul.f32 %v146, %v1163
    %v1297 = vmul.f32 %v147, %v1164
    %v1298 = vmul.f32 %v148, %v1165
    %v1299 = vmul.f32 %v149, %v1159
    %v1300 = vmul.f32 %v150, %v1160
    %v1301 = vmul.f32 %v151, %v1161
    %v1302 = vmul.f32 %v152, %v1162
    %v1303 = vmul.f32 %v153, %v1163
    %v1304 = vmul.f32 %v154, %v1164
    %v1305 = vmul.f32 %v155, %v1165
    %v1306 = vmul.f32 %v156, %v1159
    %v1307 = vmul.f32 %v157, %v1160
    %v1308 = vmul.f32 %v158, %v1161
    %v1309 = vmul.f32 %v159, %v1162
    %v1310 = vmul.f32 %v160, %v1163
    %v1311 = vmul.f32 %v161, %v1164
    %v1312 = vmul.f32 %v162, %v1165
    %v1313 = vmul.f32 %v163, %v1159
    %v1314 = vmul.f32 %v164, %v1160
    %v1315 = vmul.f32 %v165, %v1161
    %v1316 = vmul.f32 %v166, %v1162
    %v1317 = vmul.f32 %v167, %v1163
    %v1318 = vmul.f32 %v168, %v1164
    %v1319 = vmul.f32 %v169, %v1165
    %v1320 = vmul.f32 %v170, %v1159
    %v1321 = vmul.f32 %v171, %v1160
    %v1322 = vmul.f32 %v172, %v1161
    %v1323 = vmul.f32 %v173, %v1162
    %v1324 = vmul.f32 %v174, %v1163
    %v1325 = vmul.f32 %v175, %v1164
    %v1326 = vmul.f32 %v176, %v1165
    %v1327 = vmul.f32 %v177, %v1159
    %v1328 = vmul.f32 %v178, %v1160
    %v1329 = vmul.f32 %v179, %v1161
    %v1330 = vmul.f32 %v180, %v1162
    %v1331 = vmul.f32 %v181, %v1163
    %v1332 = vmul.f32 %v182, %v1164
    %v1333 = vmul.f32 %v183, %v1165
    %v1334 = vmul.f32 %v184, %v1159
    %v1335 = vmul.f32 %v185, %v1160
    %v1336 = vmul.f32 %v186, %v1161
    %v1337 = vmul.f32 %v187, %v1162
    %v1338 = vmul.f32 %v188, %v1163
    %v1339 = vmul.f32 %v189, %v1164
    %v1340 = vmul.f32 %v190, %v1165
    %v1341 = vmul.f32 %v191, %v1159
    %v1342 = vmul.f32 %v192, %v1160
    %v1343 = vmul.f32 %v193, %v1161
    %v1344 = vmul.f32 %v194, %v1162
    %v1345 = vmul.f32 %v195, %v1163
    %v1346 = vmul.f32 %v196, %v1164
    %v1347 = vmul.f32 %v197, %v1165
    %v1348 = vmul.f32 %v198, %v1159
    %v1349 = vmul.f32 %v199, %v1160
    %v1350 = vmul.f32 %v200, %v1161
    %v1351 = vmul.f32 %v201, %v1162
    %v1352 = vmul.f32 %v202, %v1163
    %v1353 = vmul.f32 %v203, %v1164
    %v1354 = vmul.f32 %v204, %v1165
    %v1355 = vmul.f32 %v205, %v1159
    %v1356 = vmul.f32 %v206, %v1160
    %v1357 = vmul.f32 %v207, %v1161
    %v1358 = vmul.f32 %v208, %v1162
    %v1359 = vmul.f32 %v209, %v1163
    %v1360 = vmul.f32 %v210, %v1164
    %v1361 = vmul.f32 %v211, %v1165
    %v1362 = vmul.f32 %v212, %v1159
    %v1363 = vmul.f32 %v213, %v1160
    %v1364 = vmul.f32 %v214, %v1161
    %v1365 = vmul.f32 %v215, %v1162
    %v1366 = vmul.f32 %v216, %v1163
    %v1367 = vmul.f32 %v217, %v1164
    %v1368 = vmul.f32 %v218, %v1165
    %v1369 = vmul.f32 %v219, %v1159
    %v1370 = vmul.f32 %v220, %v1160
    %v1371 = vmul.f32 %v221, %v1161
    %v1372 = vmul.f32 %v222, %v1162
    %v1373 = vmul.f32 %v223, %v1163
    %v1374 = vmul.f32 %v224, %v1164
    %v1375 = vmul.f32 %v225, %v1165
    %v1376 = vmul.f32 %v226, %v1159
    %v1377 = vmul.f32 %v227, %v1160
    %v1378 = vmul.f32 %v228, %v1161
    %v1379 = vmul.f32 %v229, %v1162
    %v1380 = vmul.f32 %v230, %v1163
    %v1381 = vmul.f32 %v231, %v1164
    %v1382 = vmul.f32 %v232, %v1165
    %v1383 = vmul.f32 %v233, %v1159
    %v1384 = vmul.f32 %v234, %v1160
    %v1385 = vmul.f32 %v235, %v1161
    %v1386 = vmul.f32 %v236, %v1162
    %v1387 = vmul.f32 %v237, %v1163
    %v1388 = vmul.f32 %v238, %v1164
    %v1389 = vmul.f32 %v239, %v1165
    %v1390 = vmul.f32 %v240, %v1159
    %v1391 = vmul.f32 %v241, %v1160
    %v1392 = vmul.f32 %v242, %v1161
    %v1393 = vmul.f32 %v243, %v1162
    %v1394 = vmul.f32 %v244, %v1163
    %v1395 = vmul.f32 %v245, %v1164
    %v1396 = vmul.f32 %v246, %v1165
    %v1397 = vmul.f32 %v247, %v1159
    %v1398 = vmul.f32 %v248, %v1160
    %v1399 = vmul.f32 %v249, %v1161
    %v1400 = vmul.f32 %v250, %v1162
    %v1401 = vmul.f32 %v251, %v1163
    %v1402 = vmul.f32 %v252, %v1164
    %v1403 = vmul.f32 %v253, %v1165
    %v1404 = vmul.f32 %v254, %v1159
    %v1405 = vmul.f32 %v255, %v1160
    %v1406 = vmul.f32 %v256, %v1161
    %v1407 = vmul.f32 %v257, %v1162
    %v1408 = vmul.f32 %v258, %v1163
    %v1409 = vmul.f32 %v259, %v1164
    %v1410 = vmul.f32 %v260, %v1165
    %v1411 = vmul.f32 %v261, %v1159
    %v1412 = vmul.f32 %v262, %v1160
    %v1413 = vmul.f32 %v263, %v1161
    %v1414 = vmul.f32 %v264, %v1162
    %v1415 = vmul.f32 %v265, %v1163
    %v1416 = vmul.f32 %v266, %v1164
    %v1417 = vmul.f32 %v267, %v1165
    %v1418 = vmul.f32 %v268, %v1159
    %v1419 = vmul.f32 %v269, %v1160
    %v1420 = vmul.f32 %v270, %v1161
    %v1421 = vmul.f32 %v271, %v1162
    %v1422 = vmul.f32 %v272, %v1163
    %v1423 = vmul.f32 %v273, %v1164
    %v1424 = vmul.f32 %v274, %v1165
    %v1426 = vperm.slane %v1200, 0
    %v1427 = vperm.slane %v1200, 1
    %v1428 = vperm.slane %v1200, 2
    %v1429 = vperm.slane %v1200, 3
    %v1430 = vperm.slane %v1200, 4
    %v1431 = vperm.slane %v1200, 5
    %v1432 = vperm.slane %v1200, 6
    %v1440 = vadd.f32 %v1201, %v1426
    %v1441 = vadd.f32 %v1202, %v1427
    %v1442 = vadd.f32 %v1203, %v1428
    %v1443 = vadd.f32 %v1204, %v1429
    %v1444 = vadd.f32 %v1205, %v1430
    %v1445 = vadd.f32 %v1206, %v1431
    %v1446 = vadd.f32 %v1207, %v1432
    %v1447 = vadd.f32 %v1208, %v1426
    %v1448 = vadd.f32 %v1209, %v1427
    %v1449 = vadd.f32 %v1210, %v1428
    %v1450 = vadd.f32 %v1211, %v1429
    %v1451 = vadd.f32 %v1212, %v1430
    %v1452 = vadd.f32 %v1213, %v1431
    %v1453 = vadd.f32 %v1214, %v1432
    %v1454 = vadd.f32 %v1215, %v1426
    %v1455 = vadd.f32 %v1216, %v1427
    %v1456 = vadd.f32 %v1217, %v1428
    %v1457 = vadd.f32 %v1218, %v1429
    %v1458 = vadd.f32 %v1219, %v1430
    %v1459 = vadd.f32 %v1220, %v1431
    %v1460 = vadd.f32 %v1221, %v1432
    %v1461 = vadd.f32 %v1222, %v1426
    %v1462 = vadd.f32 %v1223, %v1427
    %v1463 = vadd.f32 %v1224, %v1428
    %v1464 = vadd.f32 %v1225, %v1429
    %v1465 = vadd.f32 %v1226, %v1430
    %v1466 = vadd.f32 %v1227, %v1431
    %v1467 = vadd.f32 %v1228, %v1432
    %v1468 = vadd.f32 %v1229, %v1426
    %v1469 = vadd.f32 %v1230, %v1427
    %v1470 = vadd.f32 %v1231, %v1428
    %v1471 = vadd.f32 %v1232, %v1429
    %v1472 = vadd.f32 %v1233, %v1430
    %v1473 = vadd.f32 %v1234, %v1431
    %v1474 = vadd.f32 %v1235, %v1432
    %v1475 = vadd.f32 %v1236, %v1426
    %v1476 = vadd.f32 %v1237, %v1427
    %v1477 = vadd.f32 %v1238, %v1428
    %v1478 = vadd.f32 %v1239, %v1429
    %v1479 = vadd.f32 %v1240, %v1430
    %v1480 = vadd.f32 %v1241, %v1431
    %v1481 = vadd.f32 %v1242, %v1432
    %v1482 = vadd.f32 %v1243, %v1426
    %v1483 = vadd.f32 %v1244, %v1427
    %v1484 = vadd.f32 %v1245, %v1428
    %v1485 = vadd.f32 %v1246, %v1429
    %v1486 = vadd.f32 %v1247, %v1430
    %v1487 = vadd.f32 %v1248, %v1431
    %v1488 = vadd.f32 %v1249, %v1432
    %v1489 = vadd.f32 %v1250, %v1426
    %v1490 = vadd.f32 %v1251, %v1427
    %v1491 = vadd.f32 %v1252, %v1428
    %v1492 = vadd.f32 %v1253, %v1429
    %v1493 = vadd.f32 %v1254, %v1430
    %v1494 = vadd.f32 %v1255, %v1431
    %v1495 = vadd.f32 %v1256, %v1432
    %v1496 = vadd.f32 %v1257, %v1426
    %v1497 = vadd.f32 %v1258, %v1427
    %v1498 = vadd.f32 %v1259, %v1428
    %v1499 = vadd.f32 %v1260, %v1429
    %v1500 = vadd.f32 %v1261, %v1430
    %v1501 = vadd.f32 %v1262, %v1431
    %v1502 = vadd.f32 %v1263, %v1432
    %v1503 = vadd.f32 %v1264, %v1426
    %v1504 = vadd.f32 %v1265, %v1427
    %v1505 = vadd.f32 %v1266, %v1428
    %v1506 = vadd.f32 %v1267, %v1429
    %v1507 = vadd.f32 %v1268, %v1430
    %v1508 = vadd.f32 %v1269, %v1431
    %v1509 = vadd.f32 %v1270, %v1432
    %v1510 = vadd.f32 %v1271, %v1426
    %v1511 = vadd.f32 %v1272, %v1427
    %v1512 = vadd.f32 %v1273, %v1428
    %v1513 = vadd.f32 %v1274, %v1429
    %v1514 = vadd.f32 %v1275, %v1430
    %v1515 = vadd.f32 %v1276, %v1431
    %v1516 = vadd.f32 %v1277, %v1432
    %v1517 = vadd.f32 %v1278, %v1426
    %v1518 = vadd.f32 %v1279, %v1427
    %v1519 = vadd.f32 %v1280, %v1428
    %v1520 = vadd.f32 %v1281, %v1429
    %v1521 = vadd.f32 %v1282, %v1430
    %v1522 = vadd.f32 %v1283, %v1431
    %v1523 = vadd.f32 %v1284, %v1432
    %v1524 = vadd.f32 %v1285, %v1426
    %v1525 = vadd.f32 %v1286, %v1427
    %v1526 = vadd.f32 %v1287, %v1428
    %v1527 = vadd.f32 %v1288, %v1429
    %v1528 = vadd.f32 %v1289, %v1430
    %v1529 = vadd.f32 %v1290, %v1431
    %v1530 = vadd.f32 %v1291, %v1432
    %v1531 = vadd.f32 %v1292, %v1426
    %v1532 = vadd.f32 %v1293, %v1427
    %v1533 = vadd.f32 %v1294, %v1428
    %v1534 = vadd.f32 %v1295, %v1429
    %v1535 = vadd.f32 %v1296, %v1430
    %v1536 = vadd.f32 %v1297, %v1431
    %v1537 = vadd.f32 %v1298, %v1432
    %v1538 = vadd.f32 %v1299, %v1426
    %v1539 = vadd.f32 %v1300, %v1427
    %v1540 = vadd.f32 %v1301, %v1428
    %v1541 = vadd.f32 %v1302, %v1429
    %v1542 = vadd.f32 %v1303, %v1430
    %v1543 = vadd.f32 %v1304, %v1431
    %v1544 = vadd.f32 %v1305, %v1432
    %v1545 = vadd.f32 %v1306, %v1426
    %v1546 = vadd.f32 %v1307, %v1427
    %v1547 = vadd.f32 %v1308, %v1428
    %v1548 = vadd.f32 %v1309, %v1429
    %v1549 = vadd.f32 %v1310, %v1430
    %v1550 = vadd.f32 %v1311, %v1431
    %v1551 = vadd.f32 %v1312, %v1432
    %v1552 = vadd.f32 %v1313, %v1426
    %v1553 = vadd.f32 %v1314, %v1427
    %v1554 = vadd.f32 %v1315, %v1428
    %v1555 = vadd.f32 %v1316, %v1429
    %v1556 = vadd.f32 %v1317, %v1430
    %v1557 = vadd.f32 %v1318, %v1431
    %v1558 = vadd.f32 %v1319, %v1432
    %v1559 = vadd.f32 %v1320, %v1426
    %v1560 = vadd.f32 %v1321, %v1427
    %v1561 = vadd.f32 %v1322, %v1428
    %v1562 = vadd.f32 %v1323, %v1429
    %v1563 = vadd.f32 %v1324, %v1430
    %v1564 = vadd.f32 %v1325, %v1431
    %v1565 = vadd.f32 %v1326, %v1432
    %v1566 = vadd.f32 %v1327, %v1426
    %v1567 = vadd.f32 %v1328, %v1427
    %v1568 = vadd.f32 %v1329, %v1428
    %v1569 = vadd.f32 %v1330, %v1429
    %v1570 = vadd.f32 %v1331, %v1430
    %v1571 = vadd.f32 %v1332, %v1431
    %v1572 = vadd.f32 %v1333, %v1432
    %v1573 = vadd.f32 %v1334, %v1426
    %v1574 = vadd.f32 %v1335, %v1427
    %v1575 = vadd.f32 %v1336, %v1428
    %v1576 = vadd.f32 %v1337, %v1429
    %v1577 = vadd.f32 %v1338, %v1430
    %v1578 = vadd.f32 %v1339, %v1431
    %v1579 = vadd.f32 %v1340, %v1432
    %v1580 = vadd.f32 %v1341, %v1426
    %v1581 = vadd.f32 %v1342, %v1427
    %v1582 = vadd.f32 %v1343, %v1428
    %v1583 = vadd.f32 %v1344, %v1429
    %v1584 = vadd.f32 %v1345, %v1430
    %v1585 = vadd.f32 %v1346, %v1431
    %v1586 = vadd.f32 %v1347, %v1432
    %v1587 = vadd.f32 %v1348, %v1426
    %v1588 = vadd.f32 %v1349, %v1427
    %v1589 = vadd.f32 %v1350, %v1428
    %v1590 = vadd.f32 %v1351, %v1429
    %v1591 = vadd.f32 %v1352, %v1430
    %v1592 = vadd.f32 %v1353, %v1431
    %v1593 = vadd.f32 %v1354, %v1432
    %v1594 = vadd.f32 %v1355, %v1426
    %v1595 = vadd.f32 %v1356, %v1427
    %v1596 = vadd.f32 %v1357, %v1428
    %v1597 = vadd.f32 %v1358, %v1429
    %v1598 = vadd.f32 %v1359, %v1430
    %v1599 = vadd.f32 %v1360, %v1431
    %v1600 = vadd.f32 %v1361, %v1432
    %v1601 = vadd.f32 %v1362, %v1426
    %v1602 = vadd.f32 %v1363, %v1427
    %v1603 = vadd.f32 %v1364, %v1428
    %v1604 = vadd.f32 %v1365, %v1429
    %v1605 = vadd.f32 %v1366, %v1430
    %v1606 = vadd.f32 %v1367, %v1431
    %v1607 = vadd.f32 %v1368, %v1432
    %v1608 = vadd.f32 %v1369, %v1426
    %v1609 = vadd.f32 %v1370, %v1427
    %v1610 = vadd.f32 %v1371, %v1428
    %v1611 = vadd.f32 %v1372, %v1429
    %v1612 = vadd.f32 %v1373, %v1430
    %v1613 = vadd.f32 %v1374, %v1431
    %v1614 = vadd.f32 %v1375, %v1432
    %v1615 = vadd.f32 %v1376, %v1426
    %v1616 = vadd.f32 %v1377, %v1427
    %v1617 = vadd.f32 %v1378, %v1428
    %v1618 = vadd.f32 %v1379, %v1429
    %v1619 = vadd.f32 %v1380, %v1430
    %v1620 = vadd.f32 %v1381, %v1431
    %v1621 = vadd.f32 %v1382, %v1432
    %v1622 = vadd.f32 %v1383, %v1426
    %v1623 = vadd.f32 %v1384, %v1427
    %v1624 = vadd.f32 %v1385, %v1428
    %v1625 = vadd.f32 %v1386, %v1429
    %v1626 = vadd.f32 %v1387, %v1430
    %v1627 = vadd.f32 %v1388, %v1431
    %v1628 = vadd.f32 %v1389, %v1432
    %v1629 = vadd.f32 %v1390, %v1426
    %v1630 = vadd.f32 %v1391, %v1427
    %v1631 = vadd.f32 %v1392, %v1428
    %v1632 = vadd.f32 %v1393, %v1429
    %v1633 = vadd.f32 %v1394, %v1430
    %v1634 = vadd.f32 %v1395, %v1431
    %v1635 = vadd.f32 %v1396, %v1432
    %v1636 = vadd.f32 %v1397, %v1426
    %v1637 = vadd.f32 %v1398, %v1427
    %v1638 = vadd.f32 %v1399, %v1428
    %v1639 = vadd.f32 %v1400, %v1429
    %v1640 = vadd.f32 %v1401, %v1430
    %v1641 = vadd.f32 %v1402, %v1431
    %v1642 = vadd.f32 %v1403, %v1432
    %v1643 = vadd.f32 %v1404, %v1426
    %v1644 = vadd.f32 %v1405, %v1427
    %v1645 = vadd.f32 %v1406, %v1428
    %v1646 = vadd.f32 %v1407, %v1429
    %v1647 = vadd.f32 %v1408, %v1430
    %v1648 = vadd.f32 %v1409, %v1431
    %v1649 = vadd.f32 %v1410, %v1432
    %v1650 = vadd.f32 %v1411, %v1426
    %v1651 = vadd.f32 %v1412, %v1427
    %v1652 = vadd.f32 %v1413, %v1428
    %v1653 = vadd.f32 %v1414, %v1429
    %v1654 = vadd.f32 %v1415, %v1430
    %v1655 = vadd.f32 %v1416, %v1431
    %v1656 = vadd.f32 %v1417, %v1432
    %v1657 = vadd.f32 %v1418, %v1426
    %v1658 = vadd.f32 %v1419, %v1427
    %v1659 = vadd.f32 %v1420, %v1428
    %v1660 = vadd.f32 %v1421, %v1429
    %v1661 = vadd.f32 %v1422, %v1430
    %v1662 = vadd.f32 %v1423, %v1431
    %v1663 = vadd.f32 %v1424, %v1432
    %vm1664 = vcmp.ge.f32.partialorder %v1440, 0.0
    %vm1665 = vcmp.ge.f32.partialorder %v1441, 0.0
    %vm1666 = vcmp.ge.f32.partialorder %v1442, 0.0
    %vm1667 = vcmp.ge.f32.partialorder %v1443, 0.0
    %vm1668 = vcmp.ge.f32.partialorder %v1444, 0.0
    %vm1669 = vcmp.ge.f32.partialorder %v1445, 0.0
    %vm1670 = vcmp.ge.f32.partialorder %v1446, 0.0
    %vm1671 = vcmp.ge.f32.partialorder %v1447, 0.0
    %vm1672 = vcmp.ge.f32.partialorder %v1448, 0.0
    %vm1673 = vcmp.ge.f32.partialorder %v1449, 0.0
    %vm1674 = vcmp.ge.f32.partialorder %v1450, 0.0
    %vm1675 = vcmp.ge.f32.partialorder %v1451, 0.0
    %vm1676 = vcmp.ge.f32.partialorder %v1452, 0.0
    %vm1677 = vcmp.ge.f32.partialorder %v1453, 0.0
    %vm1678 = vcmp.ge.f32.partialorder %v1454, 0.0
    %vm1679 = vcmp.ge.f32.partialorder %v1455, 0.0
    %vm1680 = vcmp.ge.f32.partialorder %v1456, 0.0
    %vm1681 = vcmp.ge.f32.partialorder %v1457, 0.0
    %vm1682 = vcmp.ge.f32.partialorder %v1458, 0.0
    %vm1683 = vcmp.ge.f32.partialorder %v1459, 0.0
    %vm1684 = vcmp.ge.f32.partialorder %v1460, 0.0
    %vm1685 = vcmp.ge.f32.partialorder %v1461, 0.0
    %vm1686 = vcmp.ge.f32.partialorder %v1462, 0.0
    %vm1687 = vcmp.ge.f32.partialorder %v1463, 0.0
    %vm1688 = vcmp.ge.f32.partialorder %v1464, 0.0
    %vm1689 = vcmp.ge.f32.partialorder %v1465, 0.0
    %vm1690 = vcmp.ge.f32.partialorder %v1466, 0.0
    %vm1691 = vcmp.ge.f32.partialorder %v1467, 0.0
    %vm1692 = vcmp.ge.f32.partialorder %v1468, 0.0
    %vm1693 = vcmp.ge.f32.partialorder %v1469, 0.0
    %vm1694 = vcmp.ge.f32.partialorder %v1470, 0.0
    %vm1695 = vcmp.ge.f32.partialorder %v1471, 0.0
    %vm1696 = vcmp.ge.f32.partialorder %v1472, 0.0
    %vm1697 = vcmp.ge.f32.partialorder %v1473, 0.0
    %vm1698 = vcmp.ge.f32.partialorder %v1474, 0.0
    %vm1699 = vcmp.ge.f32.partialorder %v1475, 0.0
    %vm1700 = vcmp.ge.f32.partialorder %v1476, 0.0
    %vm1701 = vcmp.ge.f32.partialorder %v1477, 0.0
    %vm1702 = vcmp.ge.f32.partialorder %v1478, 0.0
    %vm1703 = vcmp.ge.f32.partialorder %v1479, 0.0
    %vm1704 = vcmp.ge.f32.partialorder %v1480, 0.0
    %vm1705 = vcmp.ge.f32.partialorder %v1481, 0.0
    %vm1706 = vcmp.ge.f32.partialorder %v1482, 0.0
    %vm1707 = vcmp.ge.f32.partialorder %v1483, 0.0
    %vm1708 = vcmp.ge.f32.partialorder %v1484, 0.0
    %vm1709 = vcmp.ge.f32.partialorder %v1485, 0.0
    %vm1710 = vcmp.ge.f32.partialorder %v1486, 0.0
    %vm1711 = vcmp.ge.f32.partialorder %v1487, 0.0
    %vm1712 = vcmp.ge.f32.partialorder %v1488, 0.0
    %vm1713 = vcmp.ge.f32.partialorder %v1489, 0.0
    %vm1714 = vcmp.ge.f32.partialorder %v1490, 0.0
    %vm1715 = vcmp.ge.f32.partialorder %v1491, 0.0
    %vm1716 = vcmp.ge.f32.partialorder %v1492, 0.0
    %vm1717 = vcmp.ge.f32.partialorder %v1493, 0.0
    %vm1718 = vcmp.ge.f32.partialorder %v1494, 0.0
    %vm1719 = vcmp.ge.f32.partialorder %v1495, 0.0
    %vm1720 = vcmp.ge.f32.partialorder %v1496, 0.0
    %vm1721 = vcmp.ge.f32.partialorder %v1497, 0.0
    %vm1722 = vcmp.ge.f32.partialorder %v1498, 0.0
    %vm1723 = vcmp.ge.f32.partialorder %v1499, 0.0
    %vm1724 = vcmp.ge.f32.partialorder %v1500, 0.0
    %vm1725 = vcmp.ge.f32.partialorder %v1501, 0.0
    %vm1726 = vcmp.ge.f32.partialorder %v1502, 0.0
    %vm1727 = vcmp.ge.f32.partialorder %v1503, 0.0
    %vm1728 = vcmp.ge.f32.partialorder %v1504, 0.0
    %vm1729 = vcmp.ge.f32.partialorder %v1505, 0.0
    %vm1730 = vcmp.ge.f32.partialorder %v1506, 0.0
    %vm1731 = vcmp.ge.f32.partialorder %v1507, 0.0
    %vm1732 = vcmp.ge.f32.partialorder %v1508, 0.0
    %vm1733 = vcmp.ge.f32.partialorder %v1509, 0.0
    %vm1734 = vcmp.ge.f32.partialorder %v1510, 0.0
    %vm1735 = vcmp.ge.f32.partialorder %v1511, 0.0
    %vm1736 = vcmp.ge.f32.partialorder %v1512, 0.0
    %vm1737 = vcmp.ge.f32.partialorder %v1513, 0.0
    %vm1738 = vcmp.ge.f32.partialorder %v1514, 0.0
    %vm1739 = vcmp.ge.f32.partialorder %v1515, 0.0
    %vm1740 = vcmp.ge.f32.partialorder %v1516, 0.0
    %vm1741 = vcmp.ge.f32.partialorder %v1517, 0.0
    %vm1742 = vcmp.ge.f32.partialorder %v1518, 0.0
    %vm1743 = vcmp.ge.f32.partialorder %v1519, 0.0
    %vm1744 = vcmp.ge.f32.partialorder %v1520, 0.0
    %vm1745 = vcmp.ge.f32.partialorder %v1521, 0.0
    %vm1746 = vcmp.ge.f32.partialorder %v1522, 0.0
    %vm1747 = vcmp.ge.f32.partialorder %v1523, 0.0
    %vm1748 = vcmp.ge.f32.partialorder %v1524, 0.0
    %vm1749 = vcmp.ge.f32.partialorder %v1525, 0.0
    %vm1750 = vcmp.ge.f32.partialorder %v1526, 0.0
    %vm1751 = vcmp.ge.f32.partialorder %v1527, 0.0
    %vm1752 = vcmp.ge.f32.partialorder %v1528, 0.0
    %vm1753 = vcmp.ge.f32.partialorder %v1529, 0.0
    %vm1754 = vcmp.ge.f32.partialorder %v1530, 0.0
    %vm1755 = vcmp.ge.f32.partialorder %v1531, 0.0
    %vm1756 = vcmp.ge.f32.partialorder %v1532, 0.0
    %vm1757 = vcmp.ge.f32.partialorder %v1533, 0.0
    %vm1758 = vcmp.ge.f32.partialorder %v1534, 0.0
    %vm1759 = vcmp.ge.f32.partialorder %v1535, 0.0
    %vm1760 = vcmp.ge.f32.partialorder %v1536, 0.0
    %vm1761 = vcmp.ge.f32.partialorder %v1537, 0.0
    %vm1762 = vcmp.ge.f32.partialorder %v1538, 0.0
    %vm1763 = vcmp.ge.f32.partialorder %v1539, 0.0
    %vm1764 = vcmp.ge.f32.partialorder %v1540, 0.0
    %vm1765 = vcmp.ge.f32.partialorder %v1541, 0.0
    %vm1766 = vcmp.ge.f32.partialorder %v1542, 0.0
    %vm1767 = vcmp.ge.f32.partialorder %v1543, 0.0
    %vm1768 = vcmp.ge.f32.partialorder %v1544, 0.0
    %vm1769 = vcmp.ge.f32.partialorder %v1545, 0.0
    %vm1770 = vcmp.ge.f32.partialorder %v1546, 0.0
    %vm1771 = vcmp.ge.f32.partialorder %v1547, 0.0
    %vm1772 = vcmp.ge.f32.partialorder %v1548, 0.0
    %vm1773 = vcmp.ge.f32.partialorder %v1549, 0.0
    %vm1774 = vcmp.ge.f32.partialorder %v1550, 0.0
    %vm1775 = vcmp.ge.f32.partialorder %v1551, 0.0
    %vm1776 = vcmp.ge.f32.partialorder %v1552, 0.0
    %vm1777 = vcmp.ge.f32.partialorder %v1553, 0.0
    %vm1778 = vcmp.ge.f32.partialorder %v1554, 0.0
    %vm1779 = vcmp.ge.f32.partialorder %v1555, 0.0
    %vm1780 = vcmp.ge.f32.partialorder %v1556, 0.0
    %vm1781 = vcmp.ge.f32.partialorder %v1557, 0.0
    %vm1782 = vcmp.ge.f32.partialorder %v1558, 0.0
    %vm1783 = vcmp.ge.f32.partialorder %v1559, 0.0
    %vm1784 = vcmp.ge.f32.partialorder %v1560, 0.0
    %vm1785 = vcmp.ge.f32.partialorder %v1561, 0.0
    %vm1786 = vcmp.ge.f32.partialorder %v1562, 0.0
    %vm1787 = vcmp.ge.f32.partialorder %v1563, 0.0
    %vm1788 = vcmp.ge.f32.partialorder %v1564, 0.0
    %vm1789 = vcmp.ge.f32.partialorder %v1565, 0.0
    %vm1790 = vcmp.ge.f32.partialorder %v1566, 0.0
    %vm1791 = vcmp.ge.f32.partialorder %v1567, 0.0
    %vm1792 = vcmp.ge.f32.partialorder %v1568, 0.0
    %vm1793 = vcmp.ge.f32.partialorder %v1569, 0.0
    %vm1794 = vcmp.ge.f32.partialorder %v1570, 0.0
    %vm1795 = vcmp.ge.f32.partialorder %v1571, 0.0
    %vm1796 = vcmp.ge.f32.partialorder %v1572, 0.0
    %vm1797 = vcmp.ge.f32.partialorder %v1573, 0.0
    %vm1798 = vcmp.ge.f32.partialorder %v1574, 0.0
    %vm1799 = vcmp.ge.f32.partialorder %v1575, 0.0
    %vm1800 = vcmp.ge.f32.partialorder %v1576, 0.0
    %vm1801 = vcmp.ge.f32.partialorder %v1577, 0.0
    %vm1802 = vcmp.ge.f32.partialorder %v1578, 0.0
    %vm1803 = vcmp.ge.f32.partialorder %v1579, 0.0
    %vm1804 = vcmp.ge.f32.partialorder %v1580, 0.0
    %vm1805 = vcmp.ge.f32.partialorder %v1581, 0.0
    %vm1806 = vcmp.ge.f32.partialorder %v1582, 0.0
    %vm1807 = vcmp.ge.f32.partialorder %v1583, 0.0
    %vm1808 = vcmp.ge.f32.partialorder %v1584, 0.0
    %vm1809 = vcmp.ge.f32.partialorder %v1585, 0.0
    %vm1810 = vcmp.ge.f32.partialorder %v1586, 0.0
    %vm1811 = vcmp.ge.f32.partialorder %v1587, 0.0
    %vm1812 = vcmp.ge.f32.partialorder %v1588, 0.0
    %vm1813 = vcmp.ge.f32.partialorder %v1589, 0.0
    %vm1814 = vcmp.ge.f32.partialorder %v1590, 0.0
    %vm1815 = vcmp.ge.f32.partialorder %v1591, 0.0
    %vm1816 = vcmp.ge.f32.partialorder %v1592, 0.0
    %vm1817 = vcmp.ge.f32.partialorder %v1593, 0.0
    %vm1818 = vcmp.ge.f32.partialorder %v1594, 0.0
    %vm1819 = vcmp.ge.f32.partialorder %v1595, 0.0
    %vm1820 = vcmp.ge.f32.partialorder %v1596, 0.0
    %vm1821 = vcmp.ge.f32.partialorder %v1597, 0.0
    %vm1822 = vcmp.ge.f32.partialorder %v1598, 0.0
    %vm1823 = vcmp.ge.f32.partialorder %v1599, 0.0
    %vm1824 = vcmp.ge.f32.partialorder %v1600, 0.0
    %vm1825 = vcmp.ge.f32.partialorder %v1601, 0.0
    %vm1826 = vcmp.ge.f32.partialorder %v1602, 0.0
    %vm1827 = vcmp.ge.f32.partialorder %v1603, 0.0
    %vm1828 = vcmp.ge.f32.partialorder %v1604, 0.0
    %vm1829 = vcmp.ge.f32.partialorder %v1605, 0.0
    %vm1830 = vcmp.ge.f32.partialorder %v1606, 0.0
    %vm1831 = vcmp.ge.f32.partialorder %v1607, 0.0
    %vm1832 = vcmp.ge.f32.partialorder %v1608, 0.0
    %vm1833 = vcmp.ge.f32.partialorder %v1609, 0.0
    %vm1834 = vcmp.ge.f32.partialorder %v1610, 0.0
    %vm1835 = vcmp.ge.f32.partialorder %v1611, 0.0
    %vm1836 = vcmp.ge.f32.partialorder %v1612, 0.0
    %vm1837 = vcmp.ge.f32.partialorder %v1613, 0.0
    %vm1838 = vcmp.ge.f32.partialorder %v1614, 0.0
    %vm1839 = vcmp.ge.f32.partialorder %v1615, 0.0
    %vm1840 = vcmp.ge.f32.partialorder %v1616, 0.0
    %vm1841 = vcmp.ge.f32.partialorder %v1617, 0.0
    %vm1842 = vcmp.ge.f32.partialorder %v1618, 0.0
    %vm1843 = vcmp.ge.f32.partialorder %v1619, 0.0
    %vm1844 = vcmp.ge.f32.partialorder %v1620, 0.0
    %vm1845 = vcmp.ge.f32.partialorder %v1621, 0.0
    %vm1846 = vcmp.ge.f32.partialorder %v1622, 0.0
    %vm1847 = vcmp.ge.f32.partialorder %v1623, 0.0
    %vm1848 = vcmp.ge.f32.partialorder %v1624, 0.0
    %vm1849 = vcmp.ge.f32.partialorder %v1625, 0.0
    %vm1850 = vcmp.ge.f32.partialorder %v1626, 0.0
    %vm1851 = vcmp.ge.f32.partialorder %v1627, 0.0
    %vm1852 = vcmp.ge.f32.partialorder %v1628, 0.0
    %vm1853 = vcmp.ge.f32.partialorder %v1629, 0.0
    %vm1854 = vcmp.ge.f32.partialorder %v1630, 0.0
    %vm1855 = vcmp.ge.f32.partialorder %v1631, 0.0
    %vm1856 = vcmp.ge.f32.partialorder %v1632, 0.0
    %vm1857 = vcmp.ge.f32.partialorder %v1633, 0.0
    %vm1858 = vcmp.ge.f32.partialorder %v1634, 0.0
    %vm1859 = vcmp.ge.f32.partialorder %v1635, 0.0
    %vm1860 = vcmp.ge.f32.partialorder %v1636, 0.0
    %vm1861 = vcmp.ge.f32.partialorder %v1637, 0.0
    %vm1862 = vcmp.ge.f32.partialorder %v1638, 0.0
    %vm1863 = vcmp.ge.f32.partialorder %v1639, 0.0
    %vm1864 = vcmp.ge.f32.partialorder %v1640, 0.0
    %vm1865 = vcmp.ge.f32.partialorder %v1641, 0.0
    %vm1866 = vcmp.ge.f32.partialorder %v1642, 0.0
    %vm1867 = vcmp.ge.f32.partialorder %v1643, 0.0
    %vm1868 = vcmp.ge.f32.partialorder %v1644, 0.0
    %vm1869 = vcmp.ge.f32.partialorder %v1645, 0.0
    %vm1870 = vcmp.ge.f32.partialorder %v1646, 0.0
    %vm1871 = vcmp.ge.f32.partialorder %v1647, 0.0
    %vm1872 = vcmp.ge.f32.partialorder %v1648, 0.0
    %vm1873 = vcmp.ge.f32.partialorder %v1649, 0.0
    %vm1874 = vcmp.ge.f32.partialorder %v1650, 0.0
    %vm1875 = vcmp.ge.f32.partialorder %v1651, 0.0
    %vm1876 = vcmp.ge.f32.partialorder %v1652, 0.0
    %vm1877 = vcmp.ge.f32.partialorder %v1653, 0.0
    %vm1878 = vcmp.ge.f32.partialorder %v1654, 0.0
    %vm1879 = vcmp.ge.f32.partialorder %v1655, 0.0
    %vm1880 = vcmp.ge.f32.partialorder %v1656, 0.0
    %vm1881 = vcmp.ge.f32.partialorder %v1657, 0.0
    %vm1882 = vcmp.ge.f32.partialorder %v1658, 0.0
    %vm1883 = vcmp.ge.f32.partialorder %v1659, 0.0
    %vm1884 = vcmp.ge.f32.partialorder %v1660, 0.0
    %vm1885 = vcmp.ge.f32.partialorder %v1661, 0.0
    %vm1886 = vcmp.ge.f32.partialorder %v1662, 0.0
    %vm1887 = vcmp.ge.f32.partialorder %v1663, 0.0
    %v1888 = vsel %vm1664, 1.0, -1.0
    %v1889 = vsel %vm1665, 1.0, -1.0
    %v1890 = vsel %vm1666, 1.0, -1.0
    %v1891 = vsel %vm1667, 1.0, -1.0
    %v1892 = vsel %vm1668, 1.0, -1.0
    %v1893 = vsel %vm1669, 1.0, -1.0
    %v1894 = vsel %vm1670, 1.0, -1.0
    %v1895 = vsel %vm1671, 1.0, -1.0
    %v1896 = vsel %vm1672, 1.0, -1.0
    %v1897 = vsel %vm1673, 1.0, -1.0
    %v1898 = vsel %vm1674, 1.0, -1.0
    %v1899 = vsel %vm1675, 1.0, -1.0
    %v1900 = vsel %vm1676, 1.0, -1.0
    %v1901 = vsel %vm1677, 1.0, -1.0
    %v1902 = vsel %vm1678, 1.0, -1.0
    %v1903 = vsel %vm1679, 1.0, -1.0
    %v1904 = vsel %vm1680, 1.0, -1.0
    %v1905 = vsel %vm1681, 1.0, -1.0
    %v1906 = vsel %vm1682, 1.0, -1.0
    %v1907 = vsel %vm1683, 1.0, -1.0
    %v1908 = vsel %vm1684, 1.0, -1.0
    %v1909 = vsel %vm1685, 1.0, -1.0
    %v1910 = vsel %vm1686, 1.0, -1.0
    %v1911 = vsel %vm1687, 1.0, -1.0
    %v1912 = vsel %vm1688, 1.0, -1.0
    %v1913 = vsel %vm1689, 1.0, -1.0
    %v1914 = vsel %vm1690, 1.0, -1.0
    %v1915 = vsel %vm1691, 1.0, -1.0
    %v1916 = vsel %vm1692, 1.0, -1.0
    %v1917 = vsel %vm1693, 1.0, -1.0
    %v1918 = vsel %vm1694, 1.0, -1.0
    %v1919 = vsel %vm1695, 1.0, -1.0
    %v1920 = vsel %vm1696, 1.0, -1.0
    %v1921 = vsel %vm1697, 1.0, -1.0
    %v1922 = vsel %vm1698, 1.0, -1.0
    %v1923 = vsel %vm1699, 1.0, -1.0
    %v1924 = vsel %vm1700, 1.0, -1.0
    %v1925 = vsel %vm1701, 1.0, -1.0
    %v1926 = vsel %vm1702, 1.0, -1.0
    %v1927 = vsel %vm1703, 1.0, -1.0
    %v1928 = vsel %vm1704, 1.0, -1.0
    %v1929 = vsel %vm1705, 1.0, -1.0
    %v1930 = vsel %vm1706, 1.0, -1.0
    %v1931 = vsel %vm1707, 1.0, -1.0
    %v1932 = vsel %vm1708, 1.0, -1.0
    %v1933 = vsel %vm1709, 1.0, -1.0
    %v1934 = vsel %vm1710, 1.0, -1.0
    %v1935 = vsel %vm1711, 1.0, -1.0
    %v1936 = vsel %vm1712, 1.0, -1.0
    %v1937 = vsel %vm1713, 1.0, -1.0
    %v1938 = vsel %vm1714, 1.0, -1.0
    %v1939 = vsel %vm1715, 1.0, -1.0
    %v1940 = vsel %vm1716, 1.0, -1.0
    %v1941 = vsel %vm1717, 1.0, -1.0
    %v1942 = vsel %vm1718, 1.0, -1.0
    %v1943 = vsel %vm1719, 1.0, -1.0
    %v1944 = vsel %vm1720, 1.0, -1.0
    %v1945 = vsel %vm1721, 1.0, -1.0
    %v1946 = vsel %vm1722, 1.0, -1.0
    %v1947 = vsel %vm1723, 1.0, -1.0
    %v1948 = vsel %vm1724, 1.0, -1.0
    %v1949 = vsel %vm1725, 1.0, -1.0
    %v1950 = vsel %vm1726, 1.0, -1.0
    %v1951 = vsel %vm1727, 1.0, -1.0
    %v1952 = vsel %vm1728, 1.0, -1.0
    %v1953 = vsel %vm1729, 1.0, -1.0
    %v1954 = vsel %vm1730, 1.0, -1.0
    %v1955 = vsel %vm1731, 1.0, -1.0
    %v1956 = vsel %vm1732, 1.0, -1.0
    %v1957 = vsel %vm1733, 1.0, -1.0
    %v1958 = vsel %vm1734, 1.0, -1.0
    %v1959 = vsel %vm1735, 1.0, -1.0
    %v1960 = vsel %vm1736, 1.0, -1.0
    %v1961 = vsel %vm1737, 1.0, -1.0
    %v1962 = vsel %vm1738, 1.0, -1.0
    %v1963 = vsel %vm1739, 1.0, -1.0
    %v1964 = vsel %vm1740, 1.0, -1.0
    %v1965 = vsel %vm1741, 1.0, -1.0
    %v1966 = vsel %vm1742, 1.0, -1.0
    %v1967 = vsel %vm1743, 1.0, -1.0
    %v1968 = vsel %vm1744, 1.0, -1.0
    %v1969 = vsel %vm1745, 1.0, -1.0
    %v1970 = vsel %vm1746, 1.0, -1.0
    %v1971 = vsel %vm1747, 1.0, -1.0
    %v1972 = vsel %vm1748, 1.0, -1.0
    %v1973 = vsel %vm1749, 1.0, -1.0
    %v1974 = vsel %vm1750, 1.0, -1.0
    %v1975 = vsel %vm1751, 1.0, -1.0
    %v1976 = vsel %vm1752, 1.0, -1.0
    %v1977 = vsel %vm1753, 1.0, -1.0
    %v1978 = vsel %vm1754, 1.0, -1.0
    %v1979 = vsel %vm1755, 1.0, -1.0
    %v1980 = vsel %vm1756, 1.0, -1.0
    %v1981 = vsel %vm1757, 1.0, -1.0
    %v1982 = vsel %vm1758, 1.0, -1.0
    %v1983 = vsel %vm1759, 1.0, -1.0
    %v1984 = vsel %vm1760, 1.0, -1.0
    %v1985 = vsel %vm1761, 1.0, -1.0
    %v1986 = vsel %vm1762, 1.0, -1.0
    %v1987 = vsel %vm1763, 1.0, -1.0
    %v1988 = vsel %vm1764, 1.0, -1.0
    %v1989 = vsel %vm1765, 1.0, -1.0
    %v1990 = vsel %vm1766, 1.0, -1.0
    %v1991 = vsel %vm1767, 1.0, -1.0
    %v1992 = vsel %vm1768, 1.0, -1.0
    %v1993 = vsel %vm1769, 1.0, -1.0
    %v1994 = vsel %vm1770, 1.0, -1.0
    %v1995 = vsel %vm1771, 1.0, -1.0
    %v1996 = vsel %vm1772, 1.0, -1.0
    %v1997 = vsel %vm1773, 1.0, -1.0
    %v1998 = vsel %vm1774, 1.0, -1.0
    %v1999 = vsel %vm1775, 1.0, -1.0
    %v2000 = vsel %vm1776, 1.0, -1.0
    %v2001 = vsel %vm1777, 1.0, -1.0
    %v2002 = vsel %vm1778, 1.0, -1.0
    %v2003 = vsel %vm1779, 1.0, -1.0
    %v2004 = vsel %vm1780, 1.0, -1.0
    %v2005 = vsel %vm1781, 1.0, -1.0
    %v2006 = vsel %vm1782, 1.0, -1.0
    %v2007 = vsel %vm1783, 1.0, -1.0
    %v2008 = vsel %vm1784, 1.0, -1.0
    %v2009 = vsel %vm1785, 1.0, -1.0
    %v2010 = vsel %vm1786, 1.0, -1.0
    %v2011 = vsel %vm1787, 1.0, -1.0
    %v2012 = vsel %vm1788, 1.0, -1.0
    %v2013 = vsel %vm1789, 1.0, -1.0
    %v2014 = vsel %vm1790, 1.0, -1.0
    %v2015 = vsel %vm1791, 1.0, -1.0
    %v2016 = vsel %vm1792, 1.0, -1.0
    %v2017 = vsel %vm1793, 1.0, -1.0
    %v2018 = vsel %vm1794, 1.0, -1.0
    %v2019 = vsel %vm1795, 1.0, -1.0
    %v2020 = vsel %vm1796, 1.0, -1.0
    %v2021 = vsel %vm1797, 1.0, -1.0
    %v2022 = vsel %vm1798, 1.0, -1.0
    %v2023 = vsel %vm1799, 1.0, -1.0
    %v2024 = vsel %vm1800, 1.0, -1.0
    %v2025 = vsel %vm1801, 1.0, -1.0
    %v2026 = vsel %vm1802, 1.0, -1.0
    %v2027 = vsel %vm1803, 1.0, -1.0
    %v2028 = vsel %vm1804, 1.0, -1.0
    %v2029 = vsel %vm1805, 1.0, -1.0
    %v2030 = vsel %vm1806, 1.0, -1.0
    %v2031 = vsel %vm1807, 1.0, -1.0
    %v2032 = vsel %vm1808, 1.0, -1.0
    %v2033 = vsel %vm1809, 1.0, -1.0
    %v2034 = vsel %vm1810, 1.0, -1.0
    %v2035 = vsel %vm1811, 1.0, -1.0
    %v2036 = vsel %vm1812, 1.0, -1.0
    %v2037 = vsel %vm1813, 1.0, -1.0
    %v2038 = vsel %vm1814, 1.0, -1.0
    %v2039 = vsel %vm1815, 1.0, -1.0
    %v2040 = vsel %vm1816, 1.0, -1.0
    %v2041 = vsel %vm1817, 1.0, -1.0
    %v2042 = vsel %vm1818, 1.0, -1.0
    %v2043 = vsel %vm1819, 1.0, -1.0
    %v2044 = vsel %vm1820, 1.0, -1.0
    %v2045 = vsel %vm1821, 1.0, -1.0
    %v2046 = vsel %vm1822, 1.0, -1.0
    %v2047 = vsel %vm1823, 1.0, -1.0
    %v2048 = vsel %vm1824, 1.0, -1.0
    %v2049 = vsel %vm1825, 1.0, -1.0
    %v2050 = vsel %vm1826, 1.0, -1.0
    %v2051 = vsel %vm1827, 1.0, -1.0
    %v2052 = vsel %vm1828, 1.0, -1.0
    %v2053 = vsel %vm1829, 1.0, -1.0
    %v2054 = vsel %vm1830, 1.0, -1.0
    %v2055 = vsel %vm1831, 1.0, -1.0
    %v2056 = vsel %vm1832, 1.0, -1.0
    %v2057 = vsel %vm1833, 1.0, -1.0
    %v2058 = vsel %vm1834, 1.0, -1.0
    %v2059 = vsel %vm1835, 1.0, -1.0
    %v2060 = vsel %vm1836, 1.0, -1.0
    %v2061 = vsel %vm1837, 1.0, -1.0
    %v2062 = vsel %vm1838, 1.0, -1.0
    %v2063 = vsel %vm1839, 1.0, -1.0
    %v2064 = vsel %vm1840, 1.0, -1.0
    %v2065 = vsel %vm1841, 1.0, -1.0
    %v2066 = vsel %vm1842, 1.0, -1.0
    %v2067 = vsel %vm1843, 1.0, -1.0
    %v2068 = vsel %vm1844, 1.0, -1.0
    %v2069 = vsel %vm1845, 1.0, -1.0
    %v2070 = vsel %vm1846, 1.0, -1.0
    %v2071 = vsel %vm1847, 1.0, -1.0
    %v2072 = vsel %vm1848, 1.0, -1.0
    %v2073 = vsel %vm1849, 1.0, -1.0
    %v2074 = vsel %vm1850, 1.0, -1.0
    %v2075 = vsel %vm1851, 1.0, -1.0
    %v2076 = vsel %vm1852, 1.0, -1.0
    %v2077 = vsel %vm1853, 1.0, -1.0
    %v2078 = vsel %vm1854, 1.0, -1.0
    %v2079 = vsel %vm1855, 1.0, -1.0
    %v2080 = vsel %vm1856, 1.0, -1.0
    %v2081 = vsel %vm1857, 1.0, -1.0
    %v2082 = vsel %vm1858, 1.0, -1.0
    %v2083 = vsel %vm1859, 1.0, -1.0
    %v2084 = vsel %vm1860, 1.0, -1.0
    %v2085 = vsel %vm1861, 1.0, -1.0
    %v2086 = vsel %vm1862, 1.0, -1.0
    %v2087 = vsel %vm1863, 1.0, -1.0
    %v2088 = vsel %vm1864, 1.0, -1.0
    %v2089 = vsel %vm1865, 1.0, -1.0
    %v2090 = vsel %vm1866, 1.0, -1.0
    %v2091 = vsel %vm1867, 1.0, -1.0
    %v2092 = vsel %vm1868, 1.0, -1.0
    %v2093 = vsel %vm1869, 1.0, -1.0
    %v2094 = vsel %vm1870, 1.0, -1.0
    %v2095 = vsel %vm1871, 1.0, -1.0
    %v2096 = vsel %vm1872, 1.0, -1.0
    %v2097 = vsel %vm1873, 1.0, -1.0
    %v2098 = vsel %vm1874, 1.0, -1.0
    %v2099 = vsel %vm1875, 1.0, -1.0
    %v2100 = vsel %vm1876, 1.0, -1.0
    %v2101 = vsel %vm1877, 1.0, -1.0
    %v2102 = vsel %vm1878, 1.0, -1.0
    %v2103 = vsel %vm1879, 1.0, -1.0
    %v2104 = vsel %vm1880, 1.0, -1.0
    %v2105 = vsel %vm1881, 1.0, -1.0
    %v2106 = vsel %vm1882, 1.0, -1.0
    %v2107 = vsel %vm1883, 1.0, -1.0
    %v2108 = vsel %vm1884, 1.0, -1.0
    %v2109 = vsel %vm1885, 1.0, -1.0
    %v2110 = vsel %vm1886, 1.0, -1.0
    %v2111 = vsel %vm1887, 1.0, -1.0
    %v2112 = vpack.c.bf16 %v1889, %v1888
    %v2113 = vpack.c.bf16 %v1891, %v1890
    %v2114 = vpack.c.bf16 %v1893, %v1892
    %v2115 = vpack.c.bf16 %v1894, %v1894
    %v2116 = vpack.c.bf16 %v1896, %v1895
    %v2117 = vpack.c.bf16 %v1898, %v1897
    %v2118 = vpack.c.bf16 %v1900, %v1899
    %v2119 = vpack.c.bf16 %v1901, %v1901
    %v2120 = vpack.c.bf16 %v1903, %v1902
    %v2121 = vpack.c.bf16 %v1905, %v1904
    %v2122 = vpack.c.bf16 %v1907, %v1906
    %v2123 = vpack.c.bf16 %v1908, %v1908
    %v2124 = vpack.c.bf16 %v1910, %v1909
    %v2125 = vpack.c.bf16 %v1912, %v1911
    %v2126 = vpack.c.bf16 %v1914, %v1913
    %v2127 = vpack.c.bf16 %v1915, %v1915
    %v2128 = vpack.c.bf16 %v1917, %v1916
    %v2129 = vpack.c.bf16 %v1919, %v1918
    %v2130 = vpack.c.bf16 %v1921, %v1920
    %v2131 = vpack.c.bf16 %v1922, %v1922
    %v2132 = vpack.c.bf16 %v1924, %v1923
    %v2133 = vpack.c.bf16 %v1926, %v1925
    %v2134 = vpack.c.bf16 %v1928, %v1927
    %v2135 = vpack.c.bf16 %v1929, %v1929
    %v2136 = vpack.c.bf16 %v1931, %v1930
    %v2137 = vpack.c.bf16 %v1933, %v1932
    %v2138 = vpack.c.bf16 %v1935, %v1934
    %v2139 = vpack.c.bf16 %v1936, %v1936
    %v2140 = vpack.c.bf16 %v1938, %v1937
    %v2141 = vpack.c.bf16 %v1940, %v1939
    %v2142 = vpack.c.bf16 %v1942, %v1941
    %v2143 = vpack.c.bf16 %v1943, %v1943
    %v2144 = vpack.c.bf16 %v1945, %v1944
    %v2145 = vpack.c.bf16 %v1947, %v1946
    %v2146 = vpack.c.bf16 %v1949, %v1948
    %v2147 = vpack.c.bf16 %v1950, %v1950
    %v2148 = vpack.c.bf16 %v1952, %v1951
    %v2149 = vpack.c.bf16 %v1954, %v1953
    %v2150 = vpack.c.bf16 %v1956, %v1955
    %v2151 = vpack.c.bf16 %v1957, %v1957
    %v2152 = vpack.c.bf16 %v1959, %v1958
    %v2153 = vpack.c.bf16 %v1961, %v1960
    %v2154 = vpack.c.bf16 %v1963, %v1962
    %v2155 = vpack.c.bf16 %v1964, %v1964
    %v2156 = vpack.c.bf16 %v1966, %v1965
    %v2157 = vpack.c.bf16 %v1968, %v1967
    %v2158 = vpack.c.bf16 %v1970, %v1969
    %v2159 = vpack.c.bf16 %v1971, %v1971
    %v2160 = vpack.c.bf16 %v1973, %v1972
    %v2161 = vpack.c.bf16 %v1975, %v1974
    %v2162 = vpack.c.bf16 %v1977, %v1976
    %v2163 = vpack.c.bf16 %v1978, %v1978
    %v2164 = vpack.c.bf16 %v1980, %v1979
    %v2165 = vpack.c.bf16 %v1982, %v1981
    %v2166 = vpack.c.bf16 %v1984, %v1983
    %v2167 = vpack.c.bf16 %v1985, %v1985
    %v2168 = vpack.c.bf16 %v1987, %v1986
    %v2169 = vpack.c.bf16 %v1989, %v1988
    %v2170 = vpack.c.bf16 %v1991, %v1990
    %v2171 = vpack.c.bf16 %v1992, %v1992
    %v2172 = vpack.c.bf16 %v1994, %v1993
    %v2173 = vpack.c.bf16 %v1996, %v1995
    %v2174 = vpack.c.bf16 %v1998, %v1997
    %v2175 = vpack.c.bf16 %v1999, %v1999
    %v2176 = vpack.c.bf16 %v2001, %v2000
    %v2177 = vpack.c.bf16 %v2003, %v2002
    %v2178 = vpack.c.bf16 %v2005, %v2004
    %v2179 = vpack.c.bf16 %v2006, %v2006
    %v2180 = vpack.c.bf16 %v2008, %v2007
    %v2181 = vpack.c.bf16 %v2010, %v2009
    %v2182 = vpack.c.bf16 %v2012, %v2011
    %v2183 = vpack.c.bf16 %v2013, %v2013
    %v2184 = vpack.c.bf16 %v2015, %v2014
    %v2185 = vpack.c.bf16 %v2017, %v2016
    %v2186 = vpack.c.bf16 %v2019, %v2018
    %v2187 = vpack.c.bf16 %v2020, %v2020
    %v2188 = vpack.c.bf16 %v2022, %v2021
    %v2189 = vpack.c.bf16 %v2024, %v2023
    %v2190 = vpack.c.bf16 %v2026, %v2025
    %v2191 = vpack.c.bf16 %v2027, %v2027
    %v2192 = vpack.c.bf16 %v2029, %v2028
    %v2193 = vpack.c.bf16 %v2031, %v2030
    %v2194 = vpack.c.bf16 %v2033, %v2032
    %v2195 = vpack.c.bf16 %v2034, %v2034
    %v2196 = vpack.c.bf16 %v2036, %v2035
    %v2197 = vpack.c.bf16 %v2038, %v2037
    %v2198 = vpack.c.bf16 %v2040, %v2039
    %v2199 = vpack.c.bf16 %v2041, %v2041
    %v2200 = vpack.c.bf16 %v2043, %v2042
    %v2201 = vpack.c.bf16 %v2045, %v2044
    %v2202 = vpack.c.bf16 %v2047, %v2046
    %v2203 = vpack.c.bf16 %v2048, %v2048
    %v2204 = vpack.c.bf16 %v2050, %v2049
    %v2205 = vpack.c.bf16 %v2052, %v2051
    %v2206 = vpack.c.bf16 %v2054, %v2053
    %v2207 = vpack.c.bf16 %v2055, %v2055
    %v2208 = vpack.c.bf16 %v2057, %v2056
    %v2209 = vpack.c.bf16 %v2059, %v2058
    %v2210 = vpack.c.bf16 %v2061, %v2060
    %v2211 = vpack.c.bf16 %v2062, %v2062
    %v2212 = vpack.c.bf16 %v2064, %v2063
    %v2213 = vpack.c.bf16 %v2066, %v2065
    %v2214 = vpack.c.bf16 %v2068, %v2067
    %v2215 = vpack.c.bf16 %v2069, %v2069
    %v2216 = vpack.c.bf16 %v2071, %v2070
    %v2217 = vpack.c.bf16 %v2073, %v2072
    %v2218 = vpack.c.bf16 %v2075, %v2074
    %v2219 = vpack.c.bf16 %v2076, %v2076
    %v2220 = vpack.c.bf16 %v2078, %v2077
    %v2221 = vpack.c.bf16 %v2080, %v2079
    %v2222 = vpack.c.bf16 %v2082, %v2081
    %v2223 = vpack.c.bf16 %v2083, %v2083
    %v2224 = vpack.c.bf16 %v2085, %v2084
    %v2225 = vpack.c.bf16 %v2087, %v2086
    %v2226 = vpack.c.bf16 %v2089, %v2088
    %v2227 = vpack.c.bf16 %v2090, %v2090
    %v2228 = vpack.c.bf16 %v2092, %v2091
    %v2229 = vpack.c.bf16 %v2094, %v2093
    %v2230 = vpack.c.bf16 %v2096, %v2095
    %v2231 = vpack.c.bf16 %v2097, %v2097
    %v2232 = vpack.c.bf16 %v2099, %v2098
    %v2233 = vpack.c.bf16 %v2101, %v2100
    %v2234 = vpack.c.bf16 %v2103, %v2102
    %v2235 = vpack.c.bf16 %v2104, %v2104
    %v2236 = vpack.c.bf16 %v2106, %v2105
    %v2237 = vpack.c.bf16 %v2108, %v2107
    %v2238 = vpack.c.bf16 %v2110, %v2109
    %v2239 = vpack.c.bf16 %v2111, %v2111
    %2240 = vst [vmem:[#allocation4] sm:$0xff] %v2112
    %2241 = vst [vmem:[#allocation4 + $0x8] sm:$0xff] %v2113
    %2242 = vst [vmem:[#allocation4 + $0x10] sm:$0xff] %v2114
    %2243 = vst [vmem:[#allocation4 + $0x18] sm:$0xf] %v2115
    %2244 = vst [vmem:[#allocation4 + $0x1c] sm:$0xff] %v2116
    %2245 = vst [vmem:[#allocation4 + $0x24] sm:$0xff] %v2117
    %2246 = vst [vmem:[#allocation4 + $0x2c] sm:$0xff] %v2118
    %2247 = vst [vmem:[#allocation4 + $0x34] sm:$0xf] %v2119
    %2248 = vst [vmem:[#allocation4 + $0x38] sm:$0xff] %v2120
    %2249 = vst [vmem:[#allocation4 + $0x40] sm:$0xff] %v2121
    %2250 = vst [vmem:[#allocation4 + $0x48] sm:$0xff] %v2122
    %2251 = vst [vmem:[#allocation4 + $0x50] sm:$0xf] %v2123
    %2252 = vst [vmem:[#allocation4 + $0x54] sm:$0xff] %v2124
    %2253 = vst [vmem:[#allocation4 + $0x5c] sm:$0xff] %v2125
    %2254 = vst [vmem:[#allocation4 + $0x64] sm:$0xff] %v2126
    %2255 = vst [vmem:[#allocation4 + $0x6c] sm:$0xf] %v2127
    %2256 = vst [vmem:[#allocation4 + $0x70] sm:$0xff] %v2128
    %2257 = vst [vmem:[#allocation4 + $0x78] sm:$0xff] %v2129
    %2258 = vst [vmem:[#allocation4 + $0x80] sm:$0xff] %v2130
    %2259 = vst [vmem:[#allocation4 + $0x88] sm:$0xf] %v2131
    %2260 = vst [vmem:[#allocation4 + $0x8c] sm:$0xff] %v2132
    %2261 = vst [vmem:[#allocation4 + $0x94] sm:$0xff] %v2133
    %2262 = vst [vmem:[#allocation4 + $0x9c] sm:$0xff] %v2134
    %2263 = vst [vmem:[#allocation4 + $0xa4] sm:$0xf] %v2135
    %2264 = vst [vmem:[#allocation4 + $0xa8] sm:$0xff] %v2136
    %2265 = vst [vmem:[#allocation4 + $0xb0] sm:$0xff] %v2137
    %2266 = vst [vmem:[#allocation4 + $0xb8] sm:$0xff] %v2138
    %2267 = vst [vmem:[#allocation4 + $0xc0] sm:$0xf] %v2139
    %2268 = vst [vmem:[#allocation4 + $0xc4] sm:$0xff] %v2140
    %2269 = vst [vmem:[#allocation4 + $0xcc] sm:$0xff] %v2141
    %2270 = vst [vmem:[#allocation4 + $0xd4] sm:$0xff] %v2142
    %2271 = vst [vmem:[#allocation4 + $0xdc] sm:$0xf] %v2143
    %2272 = vst [vmem:[#allocation4 + $0xe0] sm:$0xff] %v2144
    %2273 = vst [vmem:[#allocation4 + $0xe8] sm:$0xff] %v2145
    %2274 = vst [vmem:[#allocation4 + $0xf0] sm:$0xff] %v2146
    %2275 = vst [vmem:[#allocation4 + $0xf8] sm:$0xf] %v2147
    %2276 = vst [vmem:[#allocation4 + $0xfc] sm:$0xff] %v2148
    %2277 = vst [vmem:[#allocation4 + $0x104] sm:$0xff] %v2149
    %2278 = vst [vmem:[#allocation4 + $0x10c] sm:$0xff] %v2150
    %2279 = vst [vmem:[#allocation4 + $0x114] sm:$0xf] %v2151
    %2280 = vst [vmem:[#allocation4 + $0x118] sm:$0xff] %v2152
    %2281 = vst [vmem:[#allocation4 + $0x120] sm:$0xff] %v2153
    %2282 = vst [vmem:[#allocation4 + $0x128] sm:$0xff] %v2154
    %2283 = vst [vmem:[#allocation4 + $0x130] sm:$0xf] %v2155
    %2284 = vst [vmem:[#allocation4 + $0x134] sm:$0xff] %v2156
    %2285 = vst [vmem:[#allocation4 + $0x13c] sm:$0xff] %v2157
    %2286 = vst [vmem:[#allocation4 + $0x144] sm:$0xff] %v2158
    %2287 = vst [vmem:[#allocation4 + $0x14c] sm:$0xf] %v2159
    %2288 = vst [vmem:[#allocation4 + $0x150] sm:$0xff] %v2160
    %2289 = vst [vmem:[#allocation4 + $0x158] sm:$0xff] %v2161
    %2290 = vst [vmem:[#allocation4 + $0x160] sm:$0xff] %v2162
    %2291 = vst [vmem:[#allocation4 + $0x168] sm:$0xf] %v2163
    %2292 = vst [vmem:[#allocation4 + $0x16c] sm:$0xff] %v2164
    %2293 = vst [vmem:[#allocation4 + $0x174] sm:$0xff] %v2165
    %2294 = vst [vmem:[#allocation4 + $0x17c] sm:$0xff] %v2166
    %2295 = vst [vmem:[#allocation4 + $0x184] sm:$0xf] %v2167
    %2296 = vst [vmem:[#allocation4 + $0x188] sm:$0xff] %v2168
    %2297 = vst [vmem:[#allocation4 + $0x190] sm:$0xff] %v2169
    %2298 = vst [vmem:[#allocation4 + $0x198] sm:$0xff] %v2170
    %2299 = vst [vmem:[#allocation4 + $0x1a0] sm:$0xf] %v2171
    %2300 = vst [vmem:[#allocation4 + $0x1a4] sm:$0xff] %v2172
    %2301 = vst [vmem:[#allocation4 + $0x1ac] sm:$0xff] %v2173
    %2302 = vst [vmem:[#allocation4 + $0x1b4] sm:$0xff] %v2174
    %2303 = vst [vmem:[#allocation4 + $0x1bc] sm:$0xf] %v2175
    %2304 = vst [vmem:[#allocation4 + $0x1c0] sm:$0xff] %v2176
    %2305 = vst [vmem:[#allocation4 + $0x1c8] sm:$0xff] %v2177
    %2306 = vst [vmem:[#allocation4 + $0x1d0] sm:$0xff] %v2178
    %2307 = vst [vmem:[#allocation4 + $0x1d8] sm:$0xf] %v2179
    %2308 = vst [vmem:[#allocation4 + $0x1dc] sm:$0xff] %v2180
    %2309 = vst [vmem:[#allocation4 + $0x1e4] sm:$0xff] %v2181
    %2310 = vst [vmem:[#allocation4 + $0x1ec] sm:$0xff] %v2182
    %2311 = vst [vmem:[#allocation4 + $0x1f4] sm:$0xf] %v2183
    %2312 = vst [vmem:[#allocation4 + $0x1f8] sm:$0xff] %v2184
    %2313 = vst [vmem:[#allocation4 + $0x200] sm:$0xff] %v2185
    %2314 = vst [vmem:[#allocation4 + $0x208] sm:$0xff] %v2186
    %2315 = vst [vmem:[#allocation4 + $0x210] sm:$0xf] %v2187
    %2316 = vst [vmem:[#allocation4 + $0x214] sm:$0xff] %v2188
    %2317 = vst [vmem:[#allocation4 + $0x21c] sm:$0xff] %v2189
    %2318 = vst [vmem:[#allocation4 + $0x224] sm:$0xff] %v2190
    %2319 = vst [vmem:[#allocation4 + $0x22c] sm:$0xf] %v2191
    %2320 = vst [vmem:[#allocation4 + $0x230] sm:$0xff] %v2192
    %2321 = vst [vmem:[#allocation4 + $0x238] sm:$0xff] %v2193
    %2322 = vst [vmem:[#allocation4 + $0x240] sm:$0xff] %v2194
    %2323 = vst [vmem:[#allocation4 + $0x248] sm:$0xf] %v2195
    %2324 = vst [vmem:[#allocation4 + $0x24c] sm:$0xff] %v2196
    %2325 = vst [vmem:[#allocation4 + $0x254] sm:$0xff] %v2197
    %2326 = vst [vmem:[#allocation4 + $0x25c] sm:$0xff] %v2198
    %2327 = vst [vmem:[#allocation4 + $0x264] sm:$0xf] %v2199
    %2328 = vst [vmem:[#allocation4 + $0x268] sm:$0xff] %v2200
    %2329 = vst [vmem:[#allocation4 + $0x270] sm:$0xff] %v2201
    %2330 = vst [vmem:[#allocation4 + $0x278] sm:$0xff] %v2202
    %2331 = vst [vmem:[#allocation4 + $0x280] sm:$0xf] %v2203
    %2332 = vst [vmem:[#allocation4 + $0x284] sm:$0xff] %v2204
    %2333 = vst [vmem:[#allocation4 + $0x28c] sm:$0xff] %v2205
    %2334 = vst [vmem:[#allocation4 + $0x294] sm:$0xff] %v2206
    %2335 = vst [vmem:[#allocation4 + $0x29c] sm:$0xf] %v2207
    %2336 = vst [vmem:[#allocation4 + $0x2a0] sm:$0xff] %v2208
    %2337 = vst [vmem:[#allocation4 + $0x2a8] sm:$0xff] %v2209
    %2338 = vst [vmem:[#allocation4 + $0x2b0] sm:$0xff] %v2210
    %2339 = vst [vmem:[#allocation4 + $0x2b8] sm:$0xf] %v2211
    %2340 = vst [vmem:[#allocation4 + $0x2bc] sm:$0xff] %v2212
    %2341 = vst [vmem:[#allocation4 + $0x2c4] sm:$0xff] %v2213
    %2342 = vst [vmem:[#allocation4 + $0x2cc] sm:$0xff] %v2214
    %2343 = vst [vmem:[#allocation4 + $0x2d4] sm:$0xf] %v2215
    %2344 = vst [vmem:[#allocation4 + $0x2d8] sm:$0xff] %v2216
    %2345 = vst [vmem:[#allocation4 + $0x2e0] sm:$0xff] %v2217
    %2346 = vst [vmem:[#allocation4 + $0x2e8] sm:$0xff] %v2218
    %2347 = vst [vmem:[#allocation4 + $0x2f0] sm:$0xf] %v2219
    %2348 = vst [vmem:[#allocation4 + $0x2f4] sm:$0xff] %v2220
    %2349 = vst [vmem:[#allocation4 + $0x2fc] sm:$0xff] %v2221
    %2350 = vst [vmem:[#allocation4 + $0x304] sm:$0xff] %v2222
    %2351 = vst [vmem:[#allocation4 + $0x30c] sm:$0xf] %v2223
    %2352 = vst [vmem:[#allocation4 + $0x310] sm:$0xff] %v2224
    %2353 = vst [vmem:[#allocation4 + $0x318] sm:$0xff] %v2225
    %2354 = vst [vmem:[#allocation4 + $0x320] sm:$0xff] %v2226
    %2355 = vst [vmem:[#allocation4 + $0x328] sm:$0xf] %v2227
    %2356 = vst [vmem:[#allocation4 + $0x32c] sm:$0xff] %v2228
    %2357 = vst [vmem:[#allocation4 + $0x334] sm:$0xff] %v2229
    %2358 = vst [vmem:[#allocation4 + $0x33c] sm:$0xff] %v2230
    %2359 = vst [vmem:[#allocation4 + $0x344] sm:$0xf] %v2231
    %2360 = vst [vmem:[#allocation4 + $0x348] sm:$0xff] %v2232
    %2361 = vst [vmem:[#allocation4 + $0x350] sm:$0xff] %v2233
    %2362 = vst [vmem:[#allocation4 + $0x358] sm:$0xff] %v2234
    %2363 = vst [vmem:[#allocation4 + $0x360] sm:$0xf] %v2235
    %2364 = vst [vmem:[#allocation4 + $0x364] sm:$0xff] %v2236
    %2365 = vst [vmem:[#allocation4 + $0x36c] sm:$0xff] %v2237
    %2366 = vst [vmem:[#allocation4 + $0x374] sm:$0xff] %v2238
    %2367 = vst [vmem:[#allocation4 + $0x37c] sm:$0xf] %v2239
    %v2368 = vld [vmem:[%s3] sm:$0xff]
    %v2369 = vld [vmem:[%s3 + $0x8] sm:$0xff]
    %v2370 = vld [vmem:[%s3 + $0x10] sm:$0xff]
    %v2371 = vld [vmem:[%s3 + $0x18] sm:$0xff]
    %v2372 = vld [vmem:[%s3 + $0x20] sm:$0xff]
    %v2373 = vld [vmem:[%s3 + $0x28] sm:$0xff]
    %v2374 = vld [vmem:[%s3 + $0x30] sm:$0xff]
    %v2375 = vld [vmem:[%s3 + $0x38] sm:$0xff]
    %v2376 = vld [vmem:[%s3 + $0x40] sm:$0xff]
    %v2377 = vld [vmem:[%s3 + $0x48] sm:$0xff]
    %v2378 = vld [vmem:[%s3 + $0x50] sm:$0xff]
    %v2379 = vld [vmem:[%s3 + $0x58] sm:$0xff]
    %v2380 = vld [vmem:[%s3 + $0x60] sm:$0xff]
    %v2381 = vld [vmem:[%s3 + $0x68] sm:$0xff]
    %v2382 = vld [vmem:[%s3 + $0x70] sm:$0xff]
    %v2383 = vld [vmem:[%s3 + $0x78] sm:$0xff]
    %v2384 = vld [vmem:[%s3 + $0x80] sm:$0xff]
    %v2385 = vld [vmem:[%s3 + $0x88] sm:$0xff]
    %v2386 = vld [vmem:[%s3 + $0x90] sm:$0xff]
    %v2387 = vld [vmem:[%s3 + $0x98] sm:$0xff]
    %v2388 = vld [vmem:[%s3 + $0xa0] sm:$0xff]
    %v2389 = vld [vmem:[%s3 + $0xa8] sm:$0xff]
    %v2390 = vld [vmem:[%s3 + $0xb0] sm:$0xff]
    %v2391 = vld [vmem:[%s3 + $0xb8] sm:$0xff]
    %v2392 = vld [vmem:[%s3 + $0xc0] sm:$0xff]
    %v2393 = vld [vmem:[%s3 + $0xc8] sm:$0xff]
    %v2394 = vld [vmem:[%s3 + $0xd0] sm:$0xff]
    %v2395 = vld [vmem:[%s3 + $0xd8] sm:$0xff]
    %v2396 = vld [vmem:[%s3 + $0xe0] sm:$0xff]
    %v2397 = vld [vmem:[%s3 + $0xe8] sm:$0xff]
    %v2398 = vld [vmem:[%s3 + $0xf0] sm:$0xff]
    %v2399 = vld [vmem:[%s3 + $0xf8] sm:$0xff]
    %v2400 = vld [vmem:[%s3 + $0x100] sm:$0xff]
    %v2401 = vld [vmem:[%s3 + $0x108] sm:$0xff]
    %v2402 = vld [vmem:[%s3 + $0x110] sm:$0xff]
    %v2403 = vld [vmem:[%s3 + $0x118] sm:$0xff]
    %v2404 = vld [vmem:[%s3 + $0x120] sm:$0xff]
    %v2405 = vld [vmem:[%s3 + $0x128] sm:$0xff]
    %v2406 = vld [vmem:[%s3 + $0x130] sm:$0xff]
    %v2407 = vld [vmem:[%s3 + $0x138] sm:$0xff]
    %v2408 = vld [vmem:[%s3 + $0x140] sm:$0xff]
    %v2409 = vld [vmem:[%s3 + $0x148] sm:$0xff]
    %v2410 = vld [vmem:[%s3 + $0x150] sm:$0xff]
    %v2411 = vld [vmem:[%s3 + $0x158] sm:$0xff]
    %v2412 = vld [vmem:[%s3 + $0x160] sm:$0xff]
    %v2413 = vld [vmem:[%s3 + $0x168] sm:$0xff]
    %v2414 = vld [vmem:[%s3 + $0x170] sm:$0xff]
    %v2415 = vld [vmem:[%s3 + $0x178] sm:$0xff]
    %v2416 = vld [vmem:[%s3 + $0x180] sm:$0xff]
    %v2417 = vld [vmem:[%s3 + $0x188] sm:$0xff]
    %v2418 = vld [vmem:[%s3 + $0x190] sm:$0xff]
    %v2419 = vld [vmem:[%s3 + $0x198] sm:$0xff]
    %v2420 = vld [vmem:[%s3 + $0x1a0] sm:$0xff]
    %v2421 = vld [vmem:[%s3 + $0x1a8] sm:$0xff]
    %v2422 = vld [vmem:[%s3 + $0x1b0] sm:$0xff]
    %v2423 = vld [vmem:[%s3 + $0x1b8] sm:$0xff]
    %v2424 = vld [vmem:[%s3 + $0x1c0] sm:$0xff]
    %v2425 = vld [vmem:[%s3 + $0x1c8] sm:$0xff]
    %v2426 = vld [vmem:[%s3 + $0x1d0] sm:$0xff]
    %v2427 = vld [vmem:[%s3 + $0x1d8] sm:$0xff]
    %v2428 = vld [vmem:[%s3 + $0x1e0] sm:$0xff]
    %v2429 = vld [vmem:[%s3 + $0x1e8] sm:$0xff]
    %v2430 = vld [vmem:[%s3 + $0x1f0] sm:$0xff]
    %v2431 = vld [vmem:[%s3 + $0x1f8] sm:$0xff]
    %v2432 = vld [vmem:[%s3 + $0x200] sm:$0xff]
    %v2433 = vld [vmem:[%s3 + $0x208] sm:$0xff]
    %v2434 = vld [vmem:[%s3 + $0x210] sm:$0xff]
    %v2435 = vld [vmem:[%s3 + $0x218] sm:$0xff]
    %v2436 = vld [vmem:[%s3 + $0x220] sm:$0xff]
    %v2437 = vld [vmem:[%s3 + $0x228] sm:$0xff]
    %v2438 = vld [vmem:[%s3 + $0x230] sm:$0xff]
    %v2439 = vld [vmem:[%s3 + $0x238] sm:$0xff]
    %v2440 = vld [vmem:[%s3 + $0x240] sm:$0xff]
    %v2441 = vld [vmem:[%s3 + $0x248] sm:$0xff]
    %v2442 = vld [vmem:[%s3 + $0x250] sm:$0xff]
    %v2443 = vld [vmem:[%s3 + $0x258] sm:$0xff]
    %v2444 = vld [vmem:[%s3 + $0x260] sm:$0xff]
    %v2445 = vld [vmem:[%s3 + $0x268] sm:$0xff]
    %v2446 = vld [vmem:[%s3 + $0x270] sm:$0xff]
    %v2447 = vld [vmem:[%s3 + $0x278] sm:$0xff]
    %v2448 = vld [vmem:[%s3 + $0x280] sm:$0xff]
    %v2449 = vld [vmem:[%s3 + $0x288] sm:$0xff]
    %v2450 = vld [vmem:[%s3 + $0x290] sm:$0xff]
    %v2451 = vld [vmem:[%s3 + $0x298] sm:$0xff]
    %v2452 = vld [vmem:[%s3 + $0x2a0] sm:$0xff]
    %v2453 = vld [vmem:[%s3 + $0x2a8] sm:$0xff]
    %v2454 = vld [vmem:[%s3 + $0x2b0] sm:$0xff]
    %v2455 = vld [vmem:[%s3 + $0x2b8] sm:$0xff]
    %v2456 = vld [vmem:[%s3 + $0x2c0] sm:$0xff]
    %v2457 = vld [vmem:[%s3 + $0x2c8] sm:$0xff]
    %v2458 = vld [vmem:[%s3 + $0x2d0] sm:$0xff]
    %v2459 = vld [vmem:[%s3 + $0x2d8] sm:$0xff]
    %v2460 = vld [vmem:[%s3 + $0x2e0] sm:$0xff]
    %v2461 = vld [vmem:[%s3 + $0x2e8] sm:$0xff]
    %v2462 = vld [vmem:[%s3 + $0x2f0] sm:$0xff]
    %v2463 = vld [vmem:[%s3 + $0x2f8] sm:$0xff]
    %v2464 = vld [vmem:[%s3 + $0x300] sm:$0xff]
    %v2465 = vld [vmem:[%s3 + $0x308] sm:$0xff]
    %v2466 = vld [vmem:[%s3 + $0x310] sm:$0xff]
    %v2467 = vld [vmem:[%s3 + $0x318] sm:$0xff]
    %v2468 = vld [vmem:[%s3 + $0x320] sm:$0xff]
    %v2469 = vld [vmem:[%s3 + $0x328] sm:$0xff]
    %v2470 = vld [vmem:[%s3 + $0x330] sm:$0xff]
    %v2471 = vld [vmem:[%s3 + $0x338] sm:$0xff]
    %v2472 = vld [vmem:[%s3 + $0x340] sm:$0xff]
    %v2473 = vld [vmem:[%s3 + $0x348] sm:$0xff]
    %v2474 = vld [vmem:[%s3 + $0x350] sm:$0xff]
    %v2475 = vld [vmem:[%s3 + $0x358] sm:$0xff]
    %v2476 = vld [vmem:[%s3 + $0x360] sm:$0xff]
    %v2477 = vld [vmem:[%s3 + $0x368] sm:$0xff]
    %v2478 = vld [vmem:[%s3 + $0x370] sm:$0xff]
    %v2479 = vld [vmem:[%s3 + $0x378] sm:$0xff]
    %v2480 = vld [vmem:[%s4] sm:$0x3]
    %v2482 = vperm.slane %v2480, 0
    %v2483 = vperm.slane %v2480, 1
    %v2614 = vunpack.c.l.b16 %v2112
    %v2615 = vunpack.c.h.b16 %v2112
    %v2616 = vunpack.c.l.b16 %v2113
    %v2617 = vunpack.c.h.b16 %v2113
    %v2618 = vunpack.c.l.b16 %v2114
    %v2619 = vunpack.c.h.b16 %v2114
    %v2620 = vunpack.c.l.b16 %v2115
    %v2621 = vunpack.c.l.b16 %v2116
    %v2622 = vunpack.c.h.b16 %v2116
    %v2623 = vunpack.c.l.b16 %v2117
    %v2624 = vunpack.c.h.b16 %v2117
    %v2625 = vunpack.c.l.b16 %v2118
    %v2626 = vunpack.c.h.b16 %v2118
    %v2627 = vunpack.c.l.b16 %v2119
    %v2628 = vunpack.c.l.b16 %v2120
    %v2629 = vunpack.c.h.b16 %v2120
    %v2630 = vunpack.c.l.b16 %v2121
    %v2631 = vunpack.c.h.b16 %v2121
    %v2632 = vunpack.c.l.b16 %v2122
    %v2633 = vunpack.c.h.b16 %v2122
    %v2634 = vunpack.c.l.b16 %v2123
    %v2635 = vunpack.c.l.b16 %v2124
    %v2636 = vunpack.c.h.b16 %v2124
    %v2637 = vunpack.c.l.b16 %v2125
    %v2638 = vunpack.c.h.b16 %v2125
    %v2639 = vunpack.c.l.b16 %v2126
    %v2640 = vunpack.c.h.b16 %v2126
    %v2641 = vunpack.c.l.b16 %v2127
    %v2642 = vunpack.c.l.b16 %v2128
    %v2643 = vunpack.c.h.b16 %v2128
    %v2644 = vunpack.c.l.b16 %v2129
    %v2645 = vunpack.c.h.b16 %v2129
    %v2646 = vunpack.c.l.b16 %v2130
    %v2647 = vunpack.c.h.b16 %v2130
    %v2648 = vunpack.c.l.b16 %v2131
    %v2649 = vunpack.c.l.b16 %v2132
    %v2650 = vunpack.c.h.b16 %v2132
    %v2651 = vunpack.c.l.b16 %v2133
    %v2652 = vunpack.c.h.b16 %v2133
    %v2653 = vunpack.c.l.b16 %v2134
    %v2654 = vunpack.c.h.b16 %v2134
    %v2655 = vunpack.c.l.b16 %v2135
    %v2656 = vunpack.c.l.b16 %v2136
    %v2657 = vunpack.c.h.b16 %v2136
    %v2658 = vunpack.c.l.b16 %v2137
    %v2659 = vunpack.c.h.b16 %v2137
    %v2660 = vunpack.c.l.b16 %v2138
    %v2661 = vunpack.c.h.b16 %v2138
    %v2662 = vunpack.c.l.b16 %v2139
    %v2663 = vunpack.c.l.b16 %v2140
    %v2664 = vunpack.c.h.b16 %v2140
    %v2665 = vunpack.c.l.b16 %v2141
    %v2666 = vunpack.c.h.b16 %v2141
    %v2667 = vunpack.c.l.b16 %v2142
    %v2668 = vunpack.c.h.b16 %v2142
    %v2669 = vunpack.c.l.b16 %v2143
    %v2670 = vunpack.c.l.b16 %v2144
    %v2671 = vunpack.c.h.b16 %v2144
    %v2672 = vunpack.c.l.b16 %v2145
    %v2673 = vunpack.c.h.b16 %v2145
    %v2674 = vunpack.c.l.b16 %v2146
    %v2675 = vunpack.c.h.b16 %v2146
    %v2676 = vunpack.c.l.b16 %v2147
    %v2677 = vunpack.c.l.b16 %v2148
    %v2678 = vunpack.c.h.b16 %v2148
    %v2679 = vunpack.c.l.b16 %v2149
    %v2680 = vunpack.c.h.b16 %v2149
    %v2681 = vunpack.c.l.b16 %v2150
    %v2682 = vunpack.c.h.b16 %v2150
    %v2683 = vunpack.c.l.b16 %v2151
    %v2684 = vunpack.c.l.b16 %v2152
    %v2685 = vunpack.c.h.b16 %v2152
    %v2686 = vunpack.c.l.b16 %v2153
    %v2687 = vunpack.c.h.b16 %v2153
    %v2688 = vunpack.c.l.b16 %v2154
    %v2689 = vunpack.c.h.b16 %v2154
    %v2690 = vunpack.c.l.b16 %v2155
    %v2691 = vunpack.c.l.b16 %v2156
    %v2692 = vunpack.c.h.b16 %v2156
    %v2693 = vunpack.c.l.b16 %v2157
    %v2694 = vunpack.c.h.b16 %v2157
    %v2695 = vunpack.c.l.b16 %v2158
    %v2696 = vunpack.c.h.b16 %v2158
    %v2697 = vunpack.c.l.b16 %v2159
    %v2698 = vunpack.c.l.b16 %v2160
    %v2699 = vunpack.c.h.b16 %v2160
    %v2700 = vunpack.c.l.b16 %v2161
    %v2701 = vunpack.c.h.b16 %v2161
    %v2702 = vunpack.c.l.b16 %v2162
    %v2703 = vunpack.c.h.b16 %v2162
    %v2704 = vunpack.c.l.b16 %v2163
    %v2705 = vunpack.c.l.b16 %v2164
    %v2706 = vunpack.c.h.b16 %v2164
    %v2707 = vunpack.c.l.b16 %v2165
    %v2708 = vunpack.c.h.b16 %v2165
    %v2709 = vunpack.c.l.b16 %v2166
    %v2710 = vunpack.c.h.b16 %v2166
    %v2711 = vunpack.c.l.b16 %v2167
    %v2712 = vunpack.c.l.b16 %v2168
    %v2713 = vunpack.c.h.b16 %v2168
    %v2714 = vunpack.c.l.b16 %v2169
    %v2715 = vunpack.c.h.b16 %v2169
    %v2716 = vunpack.c.l.b16 %v2170
    %v2717 = vunpack.c.h.b16 %v2170
    %v2718 = vunpack.c.l.b16 %v2171
    %v2719 = vunpack.c.l.b16 %v2172
    %v2720 = vunpack.c.h.b16 %v2172
    %v2721 = vunpack.c.l.b16 %v2173
    %v2722 = vunpack.c.h.b16 %v2173
    %v2723 = vunpack.c.l.b16 %v2174
    %v2724 = vunpack.c.h.b16 %v2174
    %v2725 = vunpack.c.l.b16 %v2175
    %v2726 = vunpack.c.l.b16 %v2176
    %v2727 = vunpack.c.h.b16 %v2176
    %v2728 = vunpack.c.l.b16 %v2177
    %v2729 = vunpack.c.h.b16 %v2177
    %v2730 = vunpack.c.l.b16 %v2178
    %v2731 = vunpack.c.h.b16 %v2178
    %v2732 = vunpack.c.l.b16 %v2179
    %v2733 = vunpack.c.l.b16 %v2180
    %v2734 = vunpack.c.h.b16 %v2180
    %v2735 = vunpack.c.l.b16 %v2181
    %v2736 = vunpack.c.h.b16 %v2181
    %v2737 = vunpack.c.l.b16 %v2182
    %v2738 = vunpack.c.h.b16 %v2182
    %v2739 = vunpack.c.l.b16 %v2183
    %v2740 = vunpack.c.l.b16 %v2184
    %v2741 = vunpack.c.h.b16 %v2184
    %v2742 = vunpack.c.l.b16 %v2185
    %v2743 = vunpack.c.h.b16 %v2185
    %v2744 = vunpack.c.l.b16 %v2186
    %v2745 = vunpack.c.h.b16 %v2186
    %v2746 = vunpack.c.l.b16 %v2187
    %v2747 = vunpack.c.l.b16 %v2188
    %v2748 = vunpack.c.h.b16 %v2188
    %v2749 = vunpack.c.l.b16 %v2189
    %v2750 = vunpack.c.h.b16 %v2189
    %v2751 = vunpack.c.l.b16 %v2190
    %v2752 = vunpack.c.h.b16 %v2190
    %v2753 = vunpack.c.l.b16 %v2191
    %v2754 = vunpack.c.l.b16 %v2192
    %v2755 = vunpack.c.h.b16 %v2192
    %v2756 = vunpack.c.l.b16 %v2193
    %v2757 = vunpack.c.h.b16 %v2193
    %v2758 = vunpack.c.l.b16 %v2194
    %v2759 = vunpack.c.h.b16 %v2194
    %v2760 = vunpack.c.l.b16 %v2195
    %v2761 = vunpack.c.l.b16 %v2196
    %v2762 = vunpack.c.h.b16 %v2196
    %v2763 = vunpack.c.l.b16 %v2197
    %v2764 = vunpack.c.h.b16 %v2197
    %v2765 = vunpack.c.l.b16 %v2198
    %v2766 = vunpack.c.h.b16 %v2198
    %v2767 = vunpack.c.l.b16 %v2199
    %v2768 = vunpack.c.l.b16 %v2200
    %v2769 = vunpack.c.h.b16 %v2200
    %v2770 = vunpack.c.l.b16 %v2201
    %v2771 = vunpack.c.h.b16 %v2201
    %v2772 = vunpack.c.l.b16 %v2202
    %v2773 = vunpack.c.h.b16 %v2202
    %v2774 = vunpack.c.l.b16 %v2203
    %v2775 = vunpack.c.l.b16 %v2204
    %v2776 = vunpack.c.h.b16 %v2204
    %v2777 = vunpack.c.l.b16 %v2205
    %v2778 = vunpack.c.h.b16 %v2205
    %v2779 = vunpack.c.l.b16 %v2206
    %v2780 = vunpack.c.h.b16 %v2206
    %v2781 = vunpack.c.l.b16 %v2207
    %v2782 = vunpack.c.l.b16 %v2208
    %v2783 = vunpack.c.h.b16 %v2208
    %v2784 = vunpack.c.l.b16 %v2209
    %v2785 = vunpack.c.h.b16 %v2209
    %v2786 = vunpack.c.l.b16 %v2210
    %v2787 = vunpack.c.h.b16 %v2210
    %v2788 = vunpack.c.l.b16 %v2211
    %v2789 = vunpack.c.l.b16 %v2212
    %v2790 = vunpack.c.h.b16 %v2212
    %v2791 = vunpack.c.l.b16 %v2213
    %v2792 = vunpack.c.h.b16 %v2213
    %v2793 = vunpack.c.l.b16 %v2214
    %v2794 = vunpack.c.h.b16 %v2214
    %v2795 = vunpack.c.l.b16 %v2215
    %v2796 = vunpack.c.l.b16 %v2216
    %v2797 = vunpack.c.h.b16 %v2216
    %v2798 = vunpack.c.l.b16 %v2217
    %v2799 = vunpack.c.h.b16 %v2217
    %v2800 = vunpack.c.l.b16 %v2218
    %v2801 = vunpack.c.h.b16 %v2218
    %v2802 = vunpack.c.l.b16 %v2219
    %v2803 = vunpack.c.l.b16 %v2220
    %v2804 = vunpack.c.h.b16 %v2220
    %v2805 = vunpack.c.l.b16 %v2221
    %v2806 = vunpack.c.h.b16 %v2221
    %v2807 = vunpack.c.l.b16 %v2222
    %v2808 = vunpack.c.h.b16 %v2222
    %v2809 = vunpack.c.l.b16 %v2223
    %v2810 = vunpack.c.l.b16 %v2224
    %v2811 = vunpack.c.h.b16 %v2224
    %v2812 = vunpack.c.l.b16 %v2225
    %v2813 = vunpack.c.h.b16 %v2225
    %v2814 = vunpack.c.l.b16 %v2226
    %v2815 = vunpack.c.h.b16 %v2226
    %v2816 = vunpack.c.l.b16 %v2227
    %v2817 = vunpack.c.l.b16 %v2228
    %v2818 = vunpack.c.h.b16 %v2228
    %v2819 = vunpack.c.l.b16 %v2229
    %v2820 = vunpack.c.h.b16 %v2229
    %v2821 = vunpack.c.l.b16 %v2230
    %v2822 = vunpack.c.h.b16 %v2230
    %v2823 = vunpack.c.l.b16 %v2231
    %v2824 = vunpack.c.l.b16 %v2232
    %v2825 = vunpack.c.h.b16 %v2232
    %v2826 = vunpack.c.l.b16 %v2233
    %v2827 = vunpack.c.h.b16 %v2233
    %v2828 = vunpack.c.l.b16 %v2234
    %v2829 = vunpack.c.h.b16 %v2234
    %v2830 = vunpack.c.l.b16 %v2235
    %v2831 = vunpack.c.l.b16 %v2236
    %v2832 = vunpack.c.h.b16 %v2236
    %v2833 = vunpack.c.l.b16 %v2237
    %v2834 = vunpack.c.h.b16 %v2237
    %v2835 = vunpack.c.l.b16 %v2238
    %v2836 = vunpack.c.h.b16 %v2238
    %v2837 = vunpack.c.l.b16 %v2239
    %v2838 = vpack.c.b16 %v2621, %v2614
    %v2839 = vpack.c.b16 %v2622, %v2615
    %v2840 = vpack.c.b16 %v2623, %v2616
    %v2841 = vpack.c.b16 %v2624, %v2617
    %v2842 = vpack.c.b16 %v2625, %v2618
    %v2843 = vpack.c.b16 %v2626, %v2619
    %v2844 = vpack.c.b16 %v2627, %v2620
    %v2845 = vpack.c.b16 %v2635, %v2628
    %v2846 = vpack.c.b16 %v2636, %v2629
    %v2847 = vpack.c.b16 %v2637, %v2630
    %v2848 = vpack.c.b16 %v2638, %v2631
    %v2849 = vpack.c.b16 %v2639, %v2632
    %v2850 = vpack.c.b16 %v2640, %v2633
    %v2851 = vpack.c.b16 %v2641, %v2634
    %v2852 = vpack.c.b16 %v2649, %v2642
    %v2853 = vpack.c.b16 %v2650, %v2643
    %v2854 = vpack.c.b16 %v2651, %v2644
    %v2855 = vpack.c.b16 %v2652, %v2645
    %v2856 = vpack.c.b16 %v2653, %v2646
    %v2857 = vpack.c.b16 %v2654, %v2647
    %v2858 = vpack.c.b16 %v2655, %v2648
    %v2859 = vpack.c.b16 %v2663, %v2656
    %v2860 = vpack.c.b16 %v2664, %v2657
    %v2861 = vpack.c.b16 %v2665, %v2658
    %v2862 = vpack.c.b16 %v2666, %v2659
    %v2863 = vpack.c.b16 %v2667, %v2660
    %v2864 = vpack.c.b16 %v2668, %v2661
    %v2865 = vpack.c.b16 %v2669, %v2662
    %v2866 = vpack.c.b16 %v2677, %v2670
    %v2867 = vpack.c.b16 %v2678, %v2671
    %v2868 = vpack.c.b16 %v2679, %v2672
    %v2869 = vpack.c.b16 %v2680, %v2673
    %v2870 = vpack.c.b16 %v2681, %v2674
    %v2871 = vpack.c.b16 %v2682, %v2675
    %v2872 = vpack.c.b16 %v2683, %v2676
    %v2873 = vpack.c.b16 %v2691, %v2684
    %v2874 = vpack.c.b16 %v2692, %v2685
    %v2875 = vpack.c.b16 %v2693, %v2686
    %v2876 = vpack.c.b16 %v2694, %v2687
    %v2877 = vpack.c.b16 %v2695, %v2688
    %v2878 = vpack.c.b16 %v2696, %v2689
    %v2879 = vpack.c.b16 %v2697, %v2690
    %v2880 = vpack.c.b16 %v2705, %v2698
    %v2881 = vpack.c.b16 %v2706, %v2699
    %v2882 = vpack.c.b16 %v2707, %v2700
    %v2883 = vpack.c.b16 %v2708, %v2701
    %v2884 = vpack.c.b16 %v2709, %v2702
    %v2885 = vpack.c.b16 %v2710, %v2703
    %v2886 = vpack.c.b16 %v2711, %v2704
    %v2887 = vpack.c.b16 %v2719, %v2712
    %v2888 = vpack.c.b16 %v2720, %v2713
    %v2889 = vpack.c.b16 %v2721, %v2714
    %v2890 = vpack.c.b16 %v2722, %v2715
    %v2891 = vpack.c.b16 %v2723, %v2716
    %v2892 = vpack.c.b16 %v2724, %v2717
    %v2893 = vpack.c.b16 %v2725, %v2718
    %v2894 = vpack.c.b16 %v2733, %v2726
    %v2895 = vpack.c.b16 %v2734, %v2727
    %v2896 = vpack.c.b16 %v2735, %v2728
    %v2897 = vpack.c.b16 %v2736, %v2729
    %v2898 = vpack.c.b16 %v2737, %v2730
    %v2899 = vpack.c.b16 %v2738, %v2731
    %v2900 = vpack.c.b16 %v2739, %v2732
    %v2901 = vpack.c.b16 %v2747, %v2740
    %v2902 = vpack.c.b16 %v2748, %v2741
    %v2903 = vpack.c.b16 %v2749, %v2742
    %v2904 = vpack.c.b16 %v2750, %v2743
    %v2905 = vpack.c.b16 %v2751, %v2744
    %v2906 = vpack.c.b16 %v2752, %v2745
    %v2907 = vpack.c.b16 %v2753, %v2746
    %v2908 = vpack.c.b16 %v2761, %v2754
    %v2909 = vpack.c.b16 %v2762, %v2755
    %v2910 = vpack.c.b16 %v2763, %v2756
    %v2911 = vpack.c.b16 %v2764, %v2757
    %v2912 = vpack.c.b16 %v2765, %v2758
    %v2913 = vpack.c.b16 %v2766, %v2759
    %v2914 = vpack.c.b16 %v2767, %v2760
    %v2915 = vpack.c.b16 %v2775, %v2768
    %v2916 = vpack.c.b16 %v2776, %v2769
    %v2917 = vpack.c.b16 %v2777, %v2770
    %v2918 = vpack.c.b16 %v2778, %v2771
    %v2919 = vpack.c.b16 %v2779, %v2772
    %v2920 = vpack.c.b16 %v2780, %v2773
    %v2921 = vpack.c.b16 %v2781, %v2774
    %v2922 = vpack.c.b16 %v2789, %v2782
    %v2923 = vpack.c.b16 %v2790, %v2783
    %v2924 = vpack.c.b16 %v2791, %v2784
    %v2925 = vpack.c.b16 %v2792, %v2785
    %v2926 = vpack.c.b16 %v2793, %v2786
    %v2927 = vpack.c.b16 %v2794, %v2787
    %v2928 = vpack.c.b16 %v2795, %v2788
    %v2929 = vpack.c.b16 %v2803, %v2796
    %v2930 = vpack.c.b16 %v2804, %v2797
    %v2931 = vpack.c.b16 %v2805, %v2798
    %v2932 = vpack.c.b16 %v2806, %v2799
    %v2933 = vpack.c.b16 %v2807, %v2800
    %v2934 = vpack.c.b16 %v2808, %v2801
    %v2935 = vpack.c.b16 %v2809, %v2802
    %v2936 = vpack.c.b16 %v2817, %v2810
    %v2937 = vpack.c.b16 %v2818, %v2811
    %v2938 = vpack.c.b16 %v2819, %v2812
    %v2939 = vpack.c.b16 %v2820, %v2813
    %v2940 = vpack.c.b16 %v2821, %v2814
    %v2941 = vpack.c.b16 %v2822, %v2815
    %v2942 = vpack.c.b16 %v2823, %v2816
    %v2943 = vpack.c.b16 %v2831, %v2824
    %v2944 = vpack.c.b16 %v2832, %v2825
    %v2945 = vpack.c.b16 %v2833, %v2826
    %v2946 = vpack.c.b16 %v2834, %v2827
    %v2947 = vpack.c.b16 %v2835, %v2828
    %v2948 = vpack.c.b16 %v2836, %v2829
    %v2949 = vpack.c.b16 %v2837, %v2830
    %v3174 = vunpack.c.l.b16 %v2368
    %v3175 = vunpack.c.h.b16 %v2368
    %v3176 = vunpack.c.l.b16 %v2369
    %v3177 = vunpack.c.h.b16 %v2369
    %v3178 = vunpack.c.l.b16 %v2370
    %v3179 = vunpack.c.h.b16 %v2370
    %v3180 = vunpack.c.l.b16 %v2371
    %v3181 = vunpack.c.h.b16 %v2371
    %v3182 = vunpack.c.l.b16 %v2372
    %v3183 = vunpack.c.h.b16 %v2372
    %v3184 = vunpack.c.l.b16 %v2373
    %v3185 = vunpack.c.h.b16 %v2373
    %v3186 = vunpack.c.l.b16 %v2374
    %v3187 = vunpack.c.h.b16 %v2374
    %v3188 = vunpack.c.l.b16 %v2375
    %v3189 = vunpack.c.h.b16 %v2375
    %v3190 = vunpack.c.l.b16 %v2376
    %v3191 = vunpack.c.h.b16 %v2376
    %v3192 = vunpack.c.l.b16 %v2377
    %v3193 = vunpack.c.h.b16 %v2377
    %v3194 = vunpack.c.l.b16 %v2378
    %v3195 = vunpack.c.h.b16 %v2378
    %v3196 = vunpack.c.l.b16 %v2379
    %v3197 = vunpack.c.h.b16 %v2379
    %v3198 = vunpack.c.l.b16 %v2380
    %v3199 = vunpack.c.h.b16 %v2380
    %v3200 = vunpack.c.l.b16 %v2381
    %v3201 = vunpack.c.h.b16 %v2381
    %v3202 = vunpack.c.l.b16 %v2382
    %v3203 = vunpack.c.h.b16 %v2382
    %v3204 = vunpack.c.l.b16 %v2383
    %v3205 = vunpack.c.h.b16 %v2383
    %v3206 = vunpack.c.l.b16 %v2384
    %v3207 = vunpack.c.h.b16 %v2384
    %v3208 = vunpack.c.l.b16 %v2385
    %v3209 = vunpack.c.h.b16 %v2385
    %v3210 = vunpack.c.l.b16 %v2386
    %v3211 = vunpack.c.h.b16 %v2386
    %v3212 = vunpack.c.l.b16 %v2387
    %v3213 = vunpack.c.h.b16 %v2387
    %v3214 = vunpack.c.l.b16 %v2388
    %v3215 = vunpack.c.h.b16 %v2388
    %v3216 = vunpack.c.l.b16 %v2389
    %v3217 = vunpack.c.h.b16 %v2389
    %v3218 = vunpack.c.l.b16 %v2390
    %v3219 = vunpack.c.h.b16 %v2390
    %v3220 = vunpack.c.l.b16 %v2391
    %v3221 = vunpack.c.h.b16 %v2391
    %v3222 = vunpack.c.l.b16 %v2392
    %v3223 = vunpack.c.h.b16 %v2392
    %v3224 = vunpack.c.l.b16 %v2393
    %v3225 = vunpack.c.h.b16 %v2393
    %v3226 = vunpack.c.l.b16 %v2394
    %v3227 = vunpack.c.h.b16 %v2394
    %v3228 = vunpack.c.l.b16 %v2395
    %v3229 = vunpack.c.h.b16 %v2395
    %v3230 = vunpack.c.l.b16 %v2396
    %v3231 = vunpack.c.h.b16 %v2396
    %v3232 = vunpack.c.l.b16 %v2397
    %v3233 = vunpack.c.h.b16 %v2397
    %v3234 = vunpack.c.l.b16 %v2398
    %v3235 = vunpack.c.h.b16 %v2398
    %v3236 = vunpack.c.l.b16 %v2399
    %v3237 = vunpack.c.h.b16 %v2399
    %v3238 = vunpack.c.l.b16 %v2400
    %v3239 = vunpack.c.h.b16 %v2400
    %v3240 = vunpack.c.l.b16 %v2401
    %v3241 = vunpack.c.h.b16 %v2401
    %v3242 = vunpack.c.l.b16 %v2402
    %v3243 = vunpack.c.h.b16 %v2402
    %v3244 = vunpack.c.l.b16 %v2403
    %v3245 = vunpack.c.h.b16 %v2403
    %v3246 = vunpack.c.l.b16 %v2404
    %v3247 = vunpack.c.h.b16 %v2404
    %v3248 = vunpack.c.l.b16 %v2405
    %v3249 = vunpack.c.h.b16 %v2405
    %v3250 = vunpack.c.l.b16 %v2406
    %v3251 = vunpack.c.h.b16 %v2406
    %v3252 = vunpack.c.l.b16 %v2407
    %v3253 = vunpack.c.h.b16 %v2407
    %v3254 = vunpack.c.l.b16 %v2408
    %v3255 = vunpack.c.h.b16 %v2408
    %v3256 = vunpack.c.l.b16 %v2409
    %v3257 = vunpack.c.h.b16 %v2409
    %v3258 = vunpack.c.l.b16 %v2410
    %v3259 = vunpack.c.h.b16 %v2410
    %v3260 = vunpack.c.l.b16 %v2411
    %v3261 = vunpack.c.h.b16 %v2411
    %v3262 = vunpack.c.l.b16 %v2412
    %v3263 = vunpack.c.h.b16 %v2412
    %v3264 = vunpack.c.l.b16 %v2413
    %v3265 = vunpack.c.h.b16 %v2413
    %v3266 = vunpack.c.l.b16 %v2414
    %v3267 = vunpack.c.h.b16 %v2414
    %v3268 = vunpack.c.l.b16 %v2415
    %v3269 = vunpack.c.h.b16 %v2415
    %v3270 = vunpack.c.l.b16 %v2416
    %v3271 = vunpack.c.h.b16 %v2416
    %v3272 = vunpack.c.l.b16 %v2417
    %v3273 = vunpack.c.h.b16 %v2417
    %v3274 = vunpack.c.l.b16 %v2418
    %v3275 = vunpack.c.h.b16 %v2418
    %v3276 = vunpack.c.l.b16 %v2419
    %v3277 = vunpack.c.h.b16 %v2419
    %v3278 = vunpack.c.l.b16 %v2420
    %v3279 = vunpack.c.h.b16 %v2420
    %v3280 = vunpack.c.l.b16 %v2421
    %v3281 = vunpack.c.h.b16 %v2421
    %v3282 = vunpack.c.l.b16 %v2422
    %v3283 = vunpack.c.h.b16 %v2422
    %v3284 = vunpack.c.l.b16 %v2423
    %v3285 = vunpack.c.h.b16 %v2423
    %v3286 = vunpack.c.l.b16 %v2424
    %v3287 = vunpack.c.h.b16 %v2424
    %v3288 = vunpack.c.l.b16 %v2425
    %v3289 = vunpack.c.h.b16 %v2425
    %v3290 = vunpack.c.l.b16 %v2426
    %v3291 = vunpack.c.h.b16 %v2426
    %v3292 = vunpack.c.l.b16 %v2427
    %v3293 = vunpack.c.h.b16 %v2427
    %v3294 = vunpack.c.l.b16 %v2428
    %v3295 = vunpack.c.h.b16 %v2428
    %v3296 = vunpack.c.l.b16 %v2429
    %v3297 = vunpack.c.h.b16 %v2429
    %v3298 = vunpack.c.l.b16 %v2430
    %v3299 = vunpack.c.h.b16 %v2430
    %v3300 = vunpack.c.l.b16 %v2431
    %v3301 = vunpack.c.h.b16 %v2431
    %v3302 = vunpack.c.l.b16 %v2432
    %v3303 = vunpack.c.h.b16 %v2432
    %v3304 = vunpack.c.l.b16 %v2433
    %v3305 = vunpack.c.h.b16 %v2433
    %v3306 = vunpack.c.l.b16 %v2434
    %v3307 = vunpack.c.h.b16 %v2434
    %v3308 = vunpack.c.l.b16 %v2435
    %v3309 = vunpack.c.h.b16 %v2435
    %v3310 = vunpack.c.l.b16 %v2436
    %v3311 = vunpack.c.h.b16 %v2436
    %v3312 = vunpack.c.l.b16 %v2437
    %v3313 = vunpack.c.h.b16 %v2437
    %v3314 = vunpack.c.l.b16 %v2438
    %v3315 = vunpack.c.h.b16 %v2438
    %v3316 = vunpack.c.l.b16 %v2439
    %v3317 = vunpack.c.h.b16 %v2439
    %v3318 = vunpack.c.l.b16 %v2440
    %v3319 = vunpack.c.h.b16 %v2440
    %v3320 = vunpack.c.l.b16 %v2441
    %v3321 = vunpack.c.h.b16 %v2441
    %v3322 = vunpack.c.l.b16 %v2442
    %v3323 = vunpack.c.h.b16 %v2442
    %v3324 = vunpack.c.l.b16 %v2443
    %v3325 = vunpack.c.h.b16 %v2443
    %v3326 = vunpack.c.l.b16 %v2444
    %v3327 = vunpack.c.h.b16 %v2444
    %v3328 = vunpack.c.l.b16 %v2445
    %v3329 = vunpack.c.h.b16 %v2445
    %v3330 = vunpack.c.l.b16 %v2446
    %v3331 = vunpack.c.h.b16 %v2446
    %v3332 = vunpack.c.l.b16 %v2447
    %v3333 = vunpack.c.h.b16 %v2447
    %v3334 = vunpack.c.l.b16 %v2448
    %v3335 = vunpack.c.h.b16 %v2448
    %v3336 = vunpack.c.l.b16 %v2449
    %v3337 = vunpack.c.h.b16 %v2449
    %v3338 = vunpack.c.l.b16 %v2450
    %v3339 = vunpack.c.h.b16 %v2450
    %v3340 = vunpack.c.l.b16 %v2451
    %v3341 = vunpack.c.h.b16 %v2451
    %v3342 = vunpack.c.l.b16 %v2452
    %v3343 = vunpack.c.h.b16 %v2452
    %v3344 = vunpack.c.l.b16 %v2453
    %v3345 = vunpack.c.h.b16 %v2453
    %v3346 = vunpack.c.l.b16 %v2454
    %v3347 = vunpack.c.h.b16 %v2454
    %v3348 = vunpack.c.l.b16 %v2455
    %v3349 = vunpack.c.h.b16 %v2455
    %v3350 = vunpack.c.l.b16 %v2456
    %v3351 = vunpack.c.h.b16 %v2456
    %v3352 = vunpack.c.l.b16 %v2457
    %v3353 = vunpack.c.h.b16 %v2457
    %v3354 = vunpack.c.l.b16 %v2458
    %v3355 = vunpack.c.h.b16 %v2458
    %v3356 = vunpack.c.l.b16 %v2459
    %v3357 = vunpack.c.h.b16 %v2459
    %v3358 = vunpack.c.l.b16 %v2460
    %v3359 = vunpack.c.h.b16 %v2460
    %v3360 = vunpack.c.l.b16 %v2461
    %v3361 = vunpack.c.h.b16 %v2461
    %v3362 = vunpack.c.l.b16 %v2462
    %v3363 = vunpack.c.h.b16 %v2462
    %v3364 = vunpack.c.l.b16 %v2463
    %v3365 = vunpack.c.h.b16 %v2463
    %v3366 = vunpack.c.l.b16 %v2464
    %v3367 = vunpack.c.h.b16 %v2464
    %v3368 = vunpack.c.l.b16 %v2465
    %v3369 = vunpack.c.h.b16 %v2465
    %v3370 = vunpack.c.l.b16 %v2466
    %v3371 = vunpack.c.h.b16 %v2466
    %v3372 = vunpack.c.l.b16 %v2467
    %v3373 = vunpack.c.h.b16 %v2467
    %v3374 = vunpack.c.l.b16 %v2468
    %v3375 = vunpack.c.h.b16 %v2468
    %v3376 = vunpack.c.l.b16 %v2469
    %v3377 = vunpack.c.h.b16 %v2469
    %v3378 = vunpack.c.l.b16 %v2470
    %v3379 = vunpack.c.h.b16 %v2470
    %v3380 = vunpack.c.l.b16 %v2471
    %v3381 = vunpack.c.h.b16 %v2471
    %v3382 = vunpack.c.l.b16 %v2472
    %v3383 = vunpack.c.h.b16 %v2472
    %v3384 = vunpack.c.l.b16 %v2473
    %v3385 = vunpack.c.h.b16 %v2473
    %v3386 = vunpack.c.l.b16 %v2474
    %v3387 = vunpack.c.h.b16 %v2474
    %v3388 = vunpack.c.l.b16 %v2475
    %v3389 = vunpack.c.h.b16 %v2475
    %v3390 = vunpack.c.l.b16 %v2476
    %v3391 = vunpack.c.h.b16 %v2476
    %v3392 = vunpack.c.l.b16 %v2477
    %v3393 = vunpack.c.h.b16 %v2477
    %v3394 = vunpack.c.l.b16 %v2478
    %v3395 = vunpack.c.h.b16 %v2478
    %v3396 = vunpack.c.l.b16 %v2479
    %v3397 = vunpack.c.h.b16 %v2479
    %v3398 = vpack.c.b16 %v3176, %v3174
    %v3399 = vpack.c.b16 %v3177, %v3175
    %v3400 = vpack.c.b16 %v3180, %v3178
    %v3401 = vpack.c.b16 %v3181, %v3179
    %v3402 = vpack.c.b16 %v3184, %v3182
    %v3403 = vpack.c.b16 %v3185, %v3183
    %v3404 = vpack.c.b16 %v3188, %v3186
    %v3405 = vpack.c.b16 %v3189, %v3187
    %v3406 = vpack.c.b16 %v3192, %v3190
    %v3407 = vpack.c.b16 %v3193, %v3191
    %v3408 = vpack.c.b16 %v3196, %v3194
    %v3409 = vpack.c.b16 %v3197, %v3195
    %v3410 = vpack.c.b16 %v3200, %v3198
    %v3411 = vpack.c.b16 %v3201, %v3199
    %v3412 = vpack.c.b16 %v3204, %v3202
    %v3413 = vpack.c.b16 %v3205, %v3203
    %v3414 = vpack.c.b16 %v3208, %v3206
    %v3415 = vpack.c.b16 %v3209, %v3207
    %v3416 = vpack.c.b16 %v3212, %v3210
    %v3417 = vpack.c.b16 %v3213, %v3211
    %v3418 = vpack.c.b16 %v3216, %v3214
    %v3419 = vpack.c.b16 %v3217, %v3215
    %v3420 = vpack.c.b16 %v3220, %v3218
    %v3421 = vpack.c.b16 %v3221, %v3219
    %v3422 = vpack.c.b16 %v3224, %v3222
    %v3423 = vpack.c.b16 %v3225, %v3223
    %v3424 = vpack.c.b16 %v3228, %v3226
    %v3425 = vpack.c.b16 %v3229, %v3227
    %v3426 = vpack.c.b16 %v3232, %v3230
    %v3427 = vpack.c.b16 %v3233, %v3231
    %v3428 = vpack.c.b16 %v3236, %v3234
    %v3429 = vpack.c.b16 %v3237, %v3235
    %v3430 = vpack.c.b16 %v3240, %v3238
    %v3431 = vpack.c.b16 %v3241, %v3239
    %v3432 = vpack.c.b16 %v3244, %v3242
    %v3433 = vpack.c.b16 %v3245, %v3243
    %v3434 = vpack.c.b16 %v3248, %v3246
    %v3435 = vpack.c.b16 %v3249, %v3247
    %v3436 = vpack.c.b16 %v3252, %v3250
    %v3437 = vpack.c.b16 %v3253, %v3251
    %v3438 = vpack.c.b16 %v3256, %v3254
    %v3439 = vpack.c.b16 %v3257, %v3255
    %v3440 = vpack.c.b16 %v3260, %v3258
    %v3441 = vpack.c.b16 %v3261, %v3259
    %v3442 = vpack.c.b16 %v3264, %v3262
    %v3443 = vpack.c.b16 %v3265, %v3263
    %v3444 = vpack.c.b16 %v3268, %v3266
    %v3445 = vpack.c.b16 %v3269, %v3267
    %v3446 = vpack.c.b16 %v3272, %v3270
    %v3447 = vpack.c.b16 %v3273, %v3271
    %v3448 = vpack.c.b16 %v3276, %v3274
    %v3449 = vpack.c.b16 %v3277, %v3275
    %v3450 = vpack.c.b16 %v3280, %v3278
    %v3451 = vpack.c.b16 %v3281, %v3279
    %v3452 = vpack.c.b16 %v3284, %v3282
    %v3453 = vpack.c.b16 %v3285, %v3283
    %v3454 = vpack.c.b16 %v3288, %v3286
    %v3455 = vpack.c.b16 %v3289, %v3287
    %v3456 = vpack.c.b16 %v3292, %v3290
    %v3457 = vpack.c.b16 %v3293, %v3291
    %v3458 = vpack.c.b16 %v3296, %v3294
    %v3459 = vpack.c.b16 %v3297, %v3295
    %v3460 = vpack.c.b16 %v3300, %v3298
    %v3461 = vpack.c.b16 %v3301, %v3299
    %v3462 = vpack.c.b16 %v3304, %v3302
    %v3463 = vpack.c.b16 %v3305, %v3303
    %v3464 = vpack.c.b16 %v3308, %v3306
    %v3465 = vpack.c.b16 %v3309, %v3307
    %v3466 = vpack.c.b16 %v3312, %v3310
    %v3467 = vpack.c.b16 %v3313, %v3311
    %v3468 = vpack.c.b16 %v3316, %v3314
    %v3469 = vpack.c.b16 %v3317, %v3315
    %v3470 = vpack.c.b16 %v3320, %v3318
    %v3471 = vpack.c.b16 %v3321, %v3319
    %v3472 = vpack.c.b16 %v3324, %v3322
    %v3473 = vpack.c.b16 %v3325, %v3323
    %v3474 = vpack.c.b16 %v3328, %v3326
    %v3475 = vpack.c.b16 %v3329, %v3327
    %v3476 = vpack.c.b16 %v3332, %v3330
    %v3477 = vpack.c.b16 %v3333, %v3331
    %v3478 = vpack.c.b16 %v3336, %v3334
    %v3479 = vpack.c.b16 %v3337, %v3335
    %v3480 = vpack.c.b16 %v3340, %v3338
    %v3481 = vpack.c.b16 %v3341, %v3339
    %v3482 = vpack.c.b16 %v3344, %v3342
    %v3483 = vpack.c.b16 %v3345, %v3343
    %v3484 = vpack.c.b16 %v3348, %v3346
    %v3485 = vpack.c.b16 %v3349, %v3347
    %v3486 = vpack.c.b16 %v3352, %v3350
    %v3487 = vpack.c.b16 %v3353, %v3351
    %v3488 = vpack.c.b16 %v3356, %v3354
    %v3489 = vpack.c.b16 %v3357, %v3355
    %v3490 = vpack.c.b16 %v3360, %v3358
    %v3491 = vpack.c.b16 %v3361, %v3359
    %v3492 = vpack.c.b16 %v3364, %v3362
    %v3493 = vpack.c.b16 %v3365, %v3363
    %v3494 = vpack.c.b16 %v3368, %v3366
    %v3495 = vpack.c.b16 %v3369, %v3367
    %v3496 = vpack.c.b16 %v3372, %v3370
    %v3497 = vpack.c.b16 %v3373, %v3371
    %v3498 = vpack.c.b16 %v3376, %v3374
    %v3499 = vpack.c.b16 %v3377, %v3375
    %v3500 = vpack.c.b16 %v3380, %v3378
    %v3501 = vpack.c.b16 %v3381, %v3379
    %v3502 = vpack.c.b16 %v3384, %v3382
    %v3503 = vpack.c.b16 %v3385, %v3383
    %v3504 = vpack.c.b16 %v3388, %v3386
    %v3505 = vpack.c.b16 %v3389, %v3387
    %v3506 = vpack.c.b16 %v3392, %v3390
    %v3507 = vpack.c.b16 %v3393, %v3391
    %v3508 = vpack.c.b16 %v3396, %v3394
    %v3509 = vpack.c.b16 %v3397, %v3395
    %3622 = vmatpush.bf16.msra.mxu0 %v3412
    %3623 = vmatpush.bf16.msra.mxu0 %v3410
    %3624 = vmatpush.bf16.msra.mxu0 %v3408
    %3625 = vmatpush.bf16.msra.mxu0 %v3406
    %3626 = vmatpush.bf16.msra.mxu0 %v3404
    %3627 = vmatpush.bf16.msra.mxu0 %v3402
    %3628 = vmatpush.bf16.msra.mxu0 %v3400
    %3629 = vmatpush.bf16.msra.mxu0 %v3398
    %3630 = vmatmul.bf16.gmra.mxu0 %v2838
    %v3631 = vpop.f32.mrf.mxu0
    %v3632 = vadd.f32 %v2482, %v3631
    %v3633 = vpop.f32.mrf.mxu0
    %v3634 = vadd.f32 %v2482, %v3633
    %3635 = vmatmul.bf16.gmra.mxu0 %v2845
    %v3636 = vpop.f32.mrf.mxu0
    %v3637 = vadd.f32 %v2482, %v3636
    %v3638 = vpop.f32.mrf.mxu0
    %v3639 = vadd.f32 %v2482, %v3638
    %3640 = vmatmul.bf16.gmra.mxu0 %v2852
    %v3641 = vpop.f32.mrf.mxu0
    %v3642 = vadd.f32 %v2482, %v3641
    %v3643 = vpop.f32.mrf.mxu0
    %v3644 = vadd.f32 %v2482, %v3643
    %3645 = vmatmul.bf16.gmra.mxu0 %v2859
    %v3646 = vpop.f32.mrf.mxu0
    %v3647 = vadd.f32 %v2482, %v3646
    %v3648 = vpop.f32.mrf.mxu0
    %v3649 = vadd.f32 %v2482, %v3648
    %3650 = vmatmul.bf16.gmra.mxu0 %v2866
    %v3651 = vpop.f32.mrf.mxu0
    %v3652 = vadd.f32 %v2482, %v3651
    %v3653 = vpop.f32.mrf.mxu0
    %v3654 = vadd.f32 %v2482, %v3653
    %3655 = vmatmul.bf16.gmra.mxu0 %v2873
    %v3656 = vpop.f32.mrf.mxu0
    %v3657 = vadd.f32 %v2482, %v3656
    %v3658 = vpop.f32.mrf.mxu0
    %v3659 = vadd.f32 %v2482, %v3658
    %3660 = vmatmul.bf16.gmra.mxu0 %v2880
    %v3661 = vpop.f32.mrf.mxu0
    %v3662 = vadd.f32 %v2482, %v3661
    %v3663 = vpop.f32.mrf.mxu0
    %v3664 = vadd.f32 %v2482, %v3663
    %3665 = vmatmul.bf16.gmra.mxu0 %v2887
    %v3666 = vpop.f32.mrf.mxu0
    %v3667 = vadd.f32 %v2482, %v3666
    %v3668 = vpop.f32.mrf.mxu0
    %v3669 = vadd.f32 %v2482, %v3668
    %3670 = vmatmul.bf16.gmra.mxu0 %v2894
    %v3671 = vpop.f32.mrf.mxu0
    %v3672 = vadd.f32 %v2482, %v3671
    %v3673 = vpop.f32.mrf.mxu0
    %v3674 = vadd.f32 %v2482, %v3673
    %3675 = vmatmul.bf16.gmra.mxu0 %v2901
    %v3676 = vpop.f32.mrf.mxu0
    %v3677 = vadd.f32 %v2482, %v3676
    %v3678 = vpop.f32.mrf.mxu0
    %v3679 = vadd.f32 %v2482, %v3678
    %3680 = vmatmul.bf16.gmra.mxu0 %v2908
    %v3681 = vpop.f32.mrf.mxu0
    %v3682 = vadd.f32 %v2482, %v3681
    %v3683 = vpop.f32.mrf.mxu0
    %v3684 = vadd.f32 %v2482, %v3683
    %3685 = vmatmul.bf16.gmra.mxu0 %v2915
    %v3686 = vpop.f32.mrf.mxu0
    %v3687 = vadd.f32 %v2482, %v3686
    %v3688 = vpop.f32.mrf.mxu0
    %v3689 = vadd.f32 %v2482, %v3688
    %3690 = vmatmul.bf16.gmra.mxu0 %v2922
    %v3691 = vpop.f32.mrf.mxu0
    %v3692 = vadd.f32 %v2482, %v3691
    %v3693 = vpop.f32.mrf.mxu0
    %v3694 = vadd.f32 %v2482, %v3693
    %3695 = vmatmul.bf16.gmra.mxu0 %v2929
    %v3696 = vpop.f32.mrf.mxu0
    %v3697 = vadd.f32 %v2482, %v3696
    %v3698 = vpop.f32.mrf.mxu0
    %v3699 = vadd.f32 %v2482, %v3698
    %3700 = vmatmul.bf16.gmra.mxu0 %v2936
    %v3701 = vpop.f32.mrf.mxu0
    %v3702 = vadd.f32 %v2482, %v3701
    %v3703 = vpop.f32.mrf.mxu0
    %v3704 = vadd.f32 %v2482, %v3703
    %3705 = vmatmul.bf16.gmra.mxu0 %v2943
    %v3706 = vpop.f32.mrf.mxu0
    %v3707 = vadd.f32 %v2482, %v3706
    %v3708 = vpop.f32.mrf.mxu0
    %v3709 = vadd.f32 %v2482, %v3708
    %3710 = vdwg.mxu0
    %3711 = vmatpush.bf16.msra.mxu0 %v3428
    %3712 = vmatpush.bf16.msra.mxu0 %v3426
    %3713 = vmatpush.bf16.msra.mxu0 %v3424
    %3714 = vmatpush.bf16.msra.mxu0 %v3422
    %3715 = vmatpush.bf16.msra.mxu0 %v3420
    %3716 = vmatpush.bf16.msra.mxu0 %v3418
    %3717 = vmatpush.bf16.msra.mxu0 %v3416
    %3718 = vmatpush.bf16.msra.mxu0 %v3414
    %3719 = vmatmul.bf16.gmra.mxu0 %v2839
    %v3720 = vpop.f32.mrf.mxu0
    %v3721 = vadd.f32 %v3632, %v3720
    %v3722 = vpop.f32.mrf.mxu0
    %v3723 = vadd.f32 %v3634, %v3722
    %3724 = vmatmul.bf16.gmra.mxu0 %v2846
    %v3725 = vpop.f32.mrf.mxu0
    %v3726 = vadd.f32 %v3637, %v3725
    %v3727 = vpop.f32.mrf.mxu0
    %v3728 = vadd.f32 %v3639, %v3727
    %3729 = vmatmul.bf16.gmra.mxu0 %v2853
    %v3730 = vpop.f32.mrf.mxu0
    %v3731 = vadd.f32 %v3642, %v3730
    %v3732 = vpop.f32.mrf.mxu0
    %v3733 = vadd.f32 %v3644, %v3732
    %3734 = vmatmul.bf16.gmra.mxu0 %v2860
    %v3735 = vpop.f32.mrf.mxu0
    %v3736 = vadd.f32 %v3647, %v3735
    %v3737 = vpop.f32.mrf.mxu0
    %v3738 = vadd.f32 %v3649, %v3737
    %3739 = vmatmul.bf16.gmra.mxu0 %v2867
    %v3740 = vpop.f32.mrf.mxu0
    %v3741 = vadd.f32 %v3652, %v3740
    %v3742 = vpop.f32.mrf.mxu0
    %v3743 = vadd.f32 %v3654, %v3742
    %3744 = vmatmul.bf16.gmra.mxu0 %v2874
    %v3745 = vpop.f32.mrf.mxu0
    %v3746 = vadd.f32 %v3657, %v3745
    %v3747 = vpop.f32.mrf.mxu0
    %v3748 = vadd.f32 %v3659, %v3747
    %3749 = vmatmul.bf16.gmra.mxu0 %v2881
    %v3750 = vpop.f32.mrf.mxu0
    %v3751 = vadd.f32 %v3662, %v3750
    %v3752 = vpop.f32.mrf.mxu0
    %v3753 = vadd.f32 %v3664, %v3752
    %3754 = vmatmul.bf16.gmra.mxu0 %v2888
    %v3755 = vpop.f32.mrf.mxu0
    %v3756 = vadd.f32 %v3667, %v3755
    %v3757 = vpop.f32.mrf.mxu0
    %v3758 = vadd.f32 %v3669, %v3757
    %3759 = vmatmul.bf16.gmra.mxu0 %v2895
    %v3760 = vpop.f32.mrf.mxu0
    %v3761 = vadd.f32 %v3672, %v3760
    %v3762 = vpop.f32.mrf.mxu0
    %v3763 = vadd.f32 %v3674, %v3762
    %3764 = vmatmul.bf16.gmra.mxu0 %v2902
    %v3765 = vpop.f32.mrf.mxu0
    %v3766 = vadd.f32 %v3677, %v3765
    %v3767 = vpop.f32.mrf.mxu0
    %v3768 = vadd.f32 %v3679, %v3767
    %3769 = vmatmul.bf16.gmra.mxu0 %v2909
    %v3770 = vpop.f32.mrf.mxu0
    %v3771 = vadd.f32 %v3682, %v3770
    %v3772 = vpop.f32.mrf.mxu0
    %v3773 = vadd.f32 %v3684, %v3772
    %3774 = vmatmul.bf16.gmra.mxu0 %v2916
    %v3775 = vpop.f32.mrf.mxu0
    %v3776 = vadd.f32 %v3687, %v3775
    %v3777 = vpop.f32.mrf.mxu0
    %v3778 = vadd.f32 %v3689, %v3777
    %3779 = vmatmul.bf16.gmra.mxu0 %v2923
    %v3780 = vpop.f32.mrf.mxu0
    %v3781 = vadd.f32 %v3692, %v3780
    %v3782 = vpop.f32.mrf.mxu0
    %v3783 = vadd.f32 %v3694, %v3782
    %3784 = vmatmul.bf16.gmra.mxu0 %v2930
    %v3785 = vpop.f32.mrf.mxu0
    %v3786 = vadd.f32 %v3697, %v3785
    %v3787 = vpop.f32.mrf.mxu0
    %v3788 = vadd.f32 %v3699, %v3787
    %3789 = vmatmul.bf16.gmra.mxu0 %v2937
    %v3790 = vpop.f32.mrf.mxu0
    %v3791 = vadd.f32 %v3702, %v3790
    %v3792 = vpop.f32.mrf.mxu0
    %v3793 = vadd.f32 %v3704, %v3792
    %3794 = vmatmul.bf16.gmra.mxu0 %v2944
    %v3795 = vpop.f32.mrf.mxu0
    %v3796 = vadd.f32 %v3707, %v3795
    %v3797 = vpop.f32.mrf.mxu0
    %v3798 = vadd.f32 %v3709, %v3797
    %3799 = vdwg.mxu0
    %3800 = vmatpush.bf16.msra.mxu0 %v3444
    %3801 = vmatpush.bf16.msra.mxu0 %v3442
    %3802 = vmatpush.bf16.msra.mxu0 %v3440
    %3803 = vmatpush.bf16.msra.mxu0 %v3438
    %3804 = vmatpush.bf16.msra.mxu0 %v3436
    %3805 = vmatpush.bf16.msra.mxu0 %v3434
    %3806 = vmatpush.bf16.msra.mxu0 %v3432
    %3807 = vmatpush.bf16.msra.mxu0 %v3430
    %3808 = vmatmul.bf16.gmra.mxu0 %v2840
    %v3809 = vpop.f32.mrf.mxu0
    %v3810 = vadd.f32 %v3721, %v3809
    %v3811 = vpop.f32.mrf.mxu0
    %v3812 = vadd.f32 %v3723, %v3811
    %3813 = vmatmul.bf16.gmra.mxu0 %v2847
    %v3814 = vpop.f32.mrf.mxu0
    %v3815 = vadd.f32 %v3726, %v3814
    %v3816 = vpop.f32.mrf.mxu0
    %v3817 = vadd.f32 %v3728, %v3816
    %3818 = vmatmul.bf16.gmra.mxu0 %v2854
    %v3819 = vpop.f32.mrf.mxu0
    %v3820 = vadd.f32 %v3731, %v3819
    %v3821 = vpop.f32.mrf.mxu0
    %v3822 = vadd.f32 %v3733, %v3821
    %3823 = vmatmul.bf16.gmra.mxu0 %v2861
    %v3824 = vpop.f32.mrf.mxu0
    %v3825 = vadd.f32 %v3736, %v3824
    %v3826 = vpop.f32.mrf.mxu0
    %v3827 = vadd.f32 %v3738, %v3826
    %3828 = vmatmul.bf16.gmra.mxu0 %v2868
    %v3829 = vpop.f32.mrf.mxu0
    %v3830 = vadd.f32 %v3741, %v3829
    %v3831 = vpop.f32.mrf.mxu0
    %v3832 = vadd.f32 %v3743, %v3831
    %3833 = vmatmul.bf16.gmra.mxu0 %v2875
    %v3834 = vpop.f32.mrf.mxu0
    %v3835 = vadd.f32 %v3746, %v3834
    %v3836 = vpop.f32.mrf.mxu0
    %v3837 = vadd.f32 %v3748, %v3836
    %3838 = vmatmul.bf16.gmra.mxu0 %v2882
    %v3839 = vpop.f32.mrf.mxu0
    %v3840 = vadd.f32 %v3751, %v3839
    %v3841 = vpop.f32.mrf.mxu0
    %v3842 = vadd.f32 %v3753, %v3841
    %3843 = vmatmul.bf16.gmra.mxu0 %v2889
    %v3844 = vpop.f32.mrf.mxu0
    %v3845 = vadd.f32 %v3756, %v3844
    %v3846 = vpop.f32.mrf.mxu0
    %v3847 = vadd.f32 %v3758, %v3846
    %3848 = vmatmul.bf16.gmra.mxu0 %v2896
    %v3849 = vpop.f32.mrf.mxu0
    %v3850 = vadd.f32 %v3761, %v3849
    %v3851 = vpop.f32.mrf.mxu0
    %v3852 = vadd.f32 %v3763, %v3851
    %3853 = vmatmul.bf16.gmra.mxu0 %v2903
    %v3854 = vpop.f32.mrf.mxu0
    %v3855 = vadd.f32 %v3766, %v3854
    %v3856 = vpop.f32.mrf.mxu0
    %v3857 = vadd.f32 %v3768, %v3856
    %3858 = vmatmul.bf16.gmra.mxu0 %v2910
    %v3859 = vpop.f32.mrf.mxu0
    %v3860 = vadd.f32 %v3771, %v3859
    %v3861 = vpop.f32.mrf.mxu0
    %v3862 = vadd.f32 %v3773, %v3861
    %3863 = vmatmul.bf16.gmra.mxu0 %v2917
    %v3864 = vpop.f32.mrf.mxu0
    %v3865 = vadd.f32 %v3776, %v3864
    %v3866 = vpop.f32.mrf.mxu0
    %v3867 = vadd.f32 %v3778, %v3866
    %3868 = vmatmul.bf16.gmra.mxu0 %v2924
    %v3869 = vpop.f32.mrf.mxu0
    %v3870 = vadd.f32 %v3781, %v3869
    %v3871 = vpop.f32.mrf.mxu0
    %v3872 = vadd.f32 %v3783, %v3871
    %3873 = vmatmul.bf16.gmra.mxu0 %v2931
    %v3874 = vpop.f32.mrf.mxu0
    %v3875 = vadd.f32 %v3786, %v3874
    %v3876 = vpop.f32.mrf.mxu0
    %v3877 = vadd.f32 %v3788, %v3876
    %3878 = vmatmul.bf16.gmra.mxu0 %v2938
    %v3879 = vpop.f32.mrf.mxu0
    %v3880 = vadd.f32 %v3791, %v3879
    %v3881 = vpop.f32.mrf.mxu0
    %v3882 = vadd.f32 %v3793, %v3881
    %3883 = vmatmul.bf16.gmra.mxu0 %v2945
    %v3884 = vpop.f32.mrf.mxu0
    %v3885 = vadd.f32 %v3796, %v3884
    %v3886 = vpop.f32.mrf.mxu0
    %v3887 = vadd.f32 %v3798, %v3886
    %3888 = vdwg.mxu0
    %3889 = vmatpush.bf16.msra.mxu0 %v3460
    %3890 = vmatpush.bf16.msra.mxu0 %v3458
    %3891 = vmatpush.bf16.msra.mxu0 %v3456
    %3892 = vmatpush.bf16.msra.mxu0 %v3454
    %3893 = vmatpush.bf16.msra.mxu0 %v3452
    %3894 = vmatpush.bf16.msra.mxu0 %v3450
    %3895 = vmatpush.bf16.msra.mxu0 %v3448
    %3896 = vmatpush.bf16.msra.mxu0 %v3446
    %3897 = vmatmul.bf16.gmra.mxu0 %v2841
    %v3898 = vpop.f32.mrf.mxu0
    %v3899 = vadd.f32 %v3810, %v3898
    %v3900 = vpop.f32.mrf.mxu0
    %v3901 = vadd.f32 %v3812, %v3900
    %3902 = vmatmul.bf16.gmra.mxu0 %v2848
    %v3903 = vpop.f32.mrf.mxu0
    %v3904 = vadd.f32 %v3815, %v3903
    %v3905 = vpop.f32.mrf.mxu0
    %v3906 = vadd.f32 %v3817, %v3905
    %3907 = vmatmul.bf16.gmra.mxu0 %v2855
    %v3908 = vpop.f32.mrf.mxu0
    %v3909 = vadd.f32 %v3820, %v3908
    %v3910 = vpop.f32.mrf.mxu0
    %v3911 = vadd.f32 %v3822, %v3910
    %3912 = vmatmul.bf16.gmra.mxu0 %v2862
    %v3913 = vpop.f32.mrf.mxu0
    %v3914 = vadd.f32 %v3825, %v3913
    %v3915 = vpop.f32.mrf.mxu0
    %v3916 = vadd.f32 %v3827, %v3915
    %3917 = vmatmul.bf16.gmra.mxu0 %v2869
    %v3918 = vpop.f32.mrf.mxu0
    %v3919 = vadd.f32 %v3830, %v3918
    %v3920 = vpop.f32.mrf.mxu0
    %v3921 = vadd.f32 %v3832, %v3920
    %3922 = vmatmul.bf16.gmra.mxu0 %v2876
    %v3923 = vpop.f32.mrf.mxu0
    %v3924 = vadd.f32 %v3835, %v3923
    %v3925 = vpop.f32.mrf.mxu0
    %v3926 = vadd.f32 %v3837, %v3925
    %3927 = vmatmul.bf16.gmra.mxu0 %v2883
    %v3928 = vpop.f32.mrf.mxu0
    %v3929 = vadd.f32 %v3840, %v3928
    %v3930 = vpop.f32.mrf.mxu0
    %v3931 = vadd.f32 %v3842, %v3930
    %3932 = vmatmul.bf16.gmra.mxu0 %v2890
    %v3933 = vpop.f32.mrf.mxu0
    %v3934 = vadd.f32 %v3845, %v3933
    %v3935 = vpop.f32.mrf.mxu0
    %v3936 = vadd.f32 %v3847, %v3935
    %3937 = vmatmul.bf16.gmra.mxu0 %v2897
    %v3938 = vpop.f32.mrf.mxu0
    %v3939 = vadd.f32 %v3850, %v3938
    %v3940 = vpop.f32.mrf.mxu0
    %v3941 = vadd.f32 %v3852, %v3940
    %3942 = vmatmul.bf16.gmra.mxu0 %v2904
    %v3943 = vpop.f32.mrf.mxu0
    %v3944 = vadd.f32 %v3855, %v3943
    %v3945 = vpop.f32.mrf.mxu0
    %v3946 = vadd.f32 %v3857, %v3945
    %3947 = vmatmul.bf16.gmra.mxu0 %v2911
    %v3948 = vpop.f32.mrf.mxu0
    %v3949 = vadd.f32 %v3860, %v3948
    %v3950 = vpop.f32.mrf.mxu0
    %v3951 = vadd.f32 %v3862, %v3950
    %3952 = vmatmul.bf16.gmra.mxu0 %v2918
    %v3953 = vpop.f32.mrf.mxu0
    %v3954 = vadd.f32 %v3865, %v3953
    %v3955 = vpop.f32.mrf.mxu0
    %v3956 = vadd.f32 %v3867, %v3955
    %3957 = vmatmul.bf16.gmra.mxu0 %v2925
    %v3958 = vpop.f32.mrf.mxu0
    %v3959 = vadd.f32 %v3870, %v3958
    %v3960 = vpop.f32.mrf.mxu0
    %v3961 = vadd.f32 %v3872, %v3960
    %3962 = vmatmul.bf16.gmra.mxu0 %v2932
    %v3963 = vpop.f32.mrf.mxu0
    %v3964 = vadd.f32 %v3875, %v3963
    %v3965 = vpop.f32.mrf.mxu0
    %v3966 = vadd.f32 %v3877, %v3965
    %3967 = vmatmul.bf16.gmra.mxu0 %v2939
    %v3968 = vpop.f32.mrf.mxu0
    %v3969 = vadd.f32 %v3880, %v3968
    %v3970 = vpop.f32.mrf.mxu0
    %v3971 = vadd.f32 %v3882, %v3970
    %3972 = vmatmul.bf16.gmra.mxu0 %v2946
    %v3973 = vpop.f32.mrf.mxu0
    %v3974 = vadd.f32 %v3885, %v3973
    %v3975 = vpop.f32.mrf.mxu0
    %v3976 = vadd.f32 %v3887, %v3975
    %3977 = vdwg.mxu0
    %3978 = vmatpush.bf16.msra.mxu0 %v3476
    %3979 = vmatpush.bf16.msra.mxu0 %v3474
    %3980 = vmatpush.bf16.msra.mxu0 %v3472
    %3981 = vmatpush.bf16.msra.mxu0 %v3470
    %3982 = vmatpush.bf16.msra.mxu0 %v3468
    %3983 = vmatpush.bf16.msra.mxu0 %v3466
    %3984 = vmatpush.bf16.msra.mxu0 %v3464
    %3985 = vmatpush.bf16.msra.mxu0 %v3462
    %3986 = vmatmul.bf16.gmra.mxu0 %v2842
    %v3987 = vpop.f32.mrf.mxu0
    %v3988 = vadd.f32 %v3899, %v3987
    %v3989 = vpop.f32.mrf.mxu0
    %v3990 = vadd.f32 %v3901, %v3989
    %3991 = vmatmul.bf16.gmra.mxu0 %v2849
    %v3992 = vpop.f32.mrf.mxu0
    %v3993 = vadd.f32 %v3904, %v3992
    %v3994 = vpop.f32.mrf.mxu0
    %v3995 = vadd.f32 %v3906, %v3994
    %3996 = vmatmul.bf16.gmra.mxu0 %v2856
    %v3997 = vpop.f32.mrf.mxu0
    %v3998 = vadd.f32 %v3909, %v3997
    %v3999 = vpop.f32.mrf.mxu0
    %v4000 = vadd.f32 %v3911, %v3999
    %4001 = vmatmul.bf16.gmra.mxu0 %v2863
    %v4002 = vpop.f32.mrf.mxu0
    %v4003 = vadd.f32 %v3914, %v4002
    %v4004 = vpop.f32.mrf.mxu0
    %v4005 = vadd.f32 %v3916, %v4004
    %4006 = vmatmul.bf16.gmra.mxu0 %v2870
    %v4007 = vpop.f32.mrf.mxu0
    %v4008 = vadd.f32 %v3919, %v4007
    %v4009 = vpop.f32.mrf.mxu0
    %v4010 = vadd.f32 %v3921, %v4009
    %4011 = vmatmul.bf16.gmra.mxu0 %v2877
    %v4012 = vpop.f32.mrf.mxu0
    %v4013 = vadd.f32 %v3924, %v4012
    %v4014 = vpop.f32.mrf.mxu0
    %v4015 = vadd.f32 %v3926, %v4014
    %4016 = vmatmul.bf16.gmra.mxu0 %v2884
    %v4017 = vpop.f32.mrf.mxu0
    %v4018 = vadd.f32 %v3929, %v4017
    %v4019 = vpop.f32.mrf.mxu0
    %v4020 = vadd.f32 %v3931, %v4019
    %4021 = vmatmul.bf16.gmra.mxu0 %v2891
    %v4022 = vpop.f32.mrf.mxu0
    %v4023 = vadd.f32 %v3934, %v4022
    %v4024 = vpop.f32.mrf.mxu0
    %v4025 = vadd.f32 %v3936, %v4024
    %4026 = vmatmul.bf16.gmra.mxu0 %v2898
    %v4027 = vpop.f32.mrf.mxu0
    %v4028 = vadd.f32 %v3939, %v4027
    %v4029 = vpop.f32.mrf.mxu0
    %v4030 = vadd.f32 %v3941, %v4029
    %4031 = vmatmul.bf16.gmra.mxu0 %v2905
    %v4032 = vpop.f32.mrf.mxu0
    %v4033 = vadd.f32 %v3944, %v4032
    %v4034 = vpop.f32.mrf.mxu0
    %v4035 = vadd.f32 %v3946, %v4034
    %4036 = vmatmul.bf16.gmra.mxu0 %v2912
    %v4037 = vpop.f32.mrf.mxu0
    %v4038 = vadd.f32 %v3949, %v4037
    %v4039 = vpop.f32.mrf.mxu0
    %v4040 = vadd.f32 %v3951, %v4039
    %4041 = vmatmul.bf16.gmra.mxu0 %v2919
    %v4042 = vpop.f32.mrf.mxu0
    %v4043 = vadd.f32 %v3954, %v4042
    %v4044 = vpop.f32.mrf.mxu0
    %v4045 = vadd.f32 %v3956, %v4044
    %4046 = vmatmul.bf16.gmra.mxu0 %v2926
    %v4047 = vpop.f32.mrf.mxu0
    %v4048 = vadd.f32 %v3959, %v4047
    %v4049 = vpop.f32.mrf.mxu0
    %v4050 = vadd.f32 %v3961, %v4049
    %4051 = vmatmul.bf16.gmra.mxu0 %v2933
    %v4052 = vpop.f32.mrf.mxu0
    %v4053 = vadd.f32 %v3964, %v4052
    %v4054 = vpop.f32.mrf.mxu0
    %v4055 = vadd.f32 %v3966, %v4054
    %4056 = vmatmul.bf16.gmra.mxu0 %v2940
    %v4057 = vpop.f32.mrf.mxu0
    %v4058 = vadd.f32 %v3969, %v4057
    %v4059 = vpop.f32.mrf.mxu0
    %v4060 = vadd.f32 %v3971, %v4059
    %4061 = vmatmul.bf16.gmra.mxu0 %v2947
    %v4062 = vpop.f32.mrf.mxu0
    %v4063 = vadd.f32 %v3974, %v4062
    %v4064 = vpop.f32.mrf.mxu0
    %v4065 = vadd.f32 %v3976, %v4064
    %4066 = vdwg.mxu0
    %4067 = vmatpush.bf16.msra.mxu0 %v3492
    %4068 = vmatpush.bf16.msra.mxu0 %v3490
    %4069 = vmatpush.bf16.msra.mxu0 %v3488
    %4070 = vmatpush.bf16.msra.mxu0 %v3486
    %4071 = vmatpush.bf16.msra.mxu0 %v3484
    %4072 = vmatpush.bf16.msra.mxu0 %v3482
    %4073 = vmatpush.bf16.msra.mxu0 %v3480
    %4074 = vmatpush.bf16.msra.mxu0 %v3478
    %4075 = vmatmul.bf16.gmra.mxu0 %v2843
    %v4076 = vpop.f32.mrf.mxu0
    %v4077 = vadd.f32 %v3988, %v4076
    %v4078 = vpop.f32.mrf.mxu0
    %v4079 = vadd.f32 %v3990, %v4078
    %4080 = vmatmul.bf16.gmra.mxu0 %v2850
    %v4081 = vpop.f32.mrf.mxu0
    %v4082 = vadd.f32 %v3993, %v4081
    %v4083 = vpop.f32.mrf.mxu0
    %v4084 = vadd.f32 %v3995, %v4083
    %4085 = vmatmul.bf16.gmra.mxu0 %v2857
    %v4086 = vpop.f32.mrf.mxu0
    %v4087 = vadd.f32 %v3998, %v4086
    %v4088 = vpop.f32.mrf.mxu0
    %v4089 = vadd.f32 %v4000, %v4088
    %4090 = vmatmul.bf16.gmra.mxu0 %v2864
    %v4091 = vpop.f32.mrf.mxu0
    %v4092 = vadd.f32 %v4003, %v4091
    %v4093 = vpop.f32.mrf.mxu0
    %v4094 = vadd.f32 %v4005, %v4093
    %4095 = vmatmul.bf16.gmra.mxu0 %v2871
    %v4096 = vpop.f32.mrf.mxu0
    %v4097 = vadd.f32 %v4008, %v4096
    %v4098 = vpop.f32.mrf.mxu0
    %v4099 = vadd.f32 %v4010, %v4098
    %4100 = vmatmul.bf16.gmra.mxu0 %v2878
    %v4101 = vpop.f32.mrf.mxu0
    %v4102 = vadd.f32 %v4013, %v4101
    %v4103 = vpop.f32.mrf.mxu0
    %v4104 = vadd.f32 %v4015, %v4103
    %4105 = vmatmul.bf16.gmra.mxu0 %v2885
    %v4106 = vpop.f32.mrf.mxu0
    %v4107 = vadd.f32 %v4018, %v4106
    %v4108 = vpop.f32.mrf.mxu0
    %v4109 = vadd.f32 %v4020, %v4108
    %4110 = vmatmul.bf16.gmra.mxu0 %v2892
    %v4111 = vpop.f32.mrf.mxu0
    %v4112 = vadd.f32 %v4023, %v4111
    %v4113 = vpop.f32.mrf.mxu0
    %v4114 = vadd.f32 %v4025, %v4113
    %4115 = vmatmul.bf16.gmra.mxu0 %v2899
    %v4116 = vpop.f32.mrf.mxu0
    %v4117 = vadd.f32 %v4028, %v4116
    %v4118 = vpop.f32.mrf.mxu0
    %v4119 = vadd.f32 %v4030, %v4118
    %4120 = vmatmul.bf16.gmra.mxu0 %v2906
    %v4121 = vpop.f32.mrf.mxu0
    %v4122 = vadd.f32 %v4033, %v4121
    %v4123 = vpop.f32.mrf.mxu0
    %v4124 = vadd.f32 %v4035, %v4123
    %4125 = vmatmul.bf16.gmra.mxu0 %v2913
    %v4126 = vpop.f32.mrf.mxu0
    %v4127 = vadd.f32 %v4038, %v4126
    %v4128 = vpop.f32.mrf.mxu0
    %v4129 = vadd.f32 %v4040, %v4128
    %4130 = vmatmul.bf16.gmra.mxu0 %v2920
    %v4131 = vpop.f32.mrf.mxu0
    %v4132 = vadd.f32 %v4043, %v4131
    %v4133 = vpop.f32.mrf.mxu0
    %v4134 = vadd.f32 %v4045, %v4133
    %4135 = vmatmul.bf16.gmra.mxu0 %v2927
    %v4136 = vpop.f32.mrf.mxu0
    %v4137 = vadd.f32 %v4048, %v4136
    %v4138 = vpop.f32.mrf.mxu0
    %v4139 = vadd.f32 %v4050, %v4138
    %4140 = vmatmul.bf16.gmra.mxu0 %v2934
    %v4141 = vpop.f32.mrf.mxu0
    %v4142 = vadd.f32 %v4053, %v4141
    %v4143 = vpop.f32.mrf.mxu0
    %v4144 = vadd.f32 %v4055, %v4143
    %4145 = vmatmul.bf16.gmra.mxu0 %v2941
    %v4146 = vpop.f32.mrf.mxu0
    %v4147 = vadd.f32 %v4058, %v4146
    %v4148 = vpop.f32.mrf.mxu0
    %v4149 = vadd.f32 %v4060, %v4148
    %4150 = vmatmul.bf16.gmra.mxu0 %v2948
    %v4151 = vpop.f32.mrf.mxu0
    %v4152 = vadd.f32 %v4063, %v4151
    %v4153 = vpop.f32.mrf.mxu0
    %v4154 = vadd.f32 %v4065, %v4153
    %4155 = vdwg.mxu0
    %4156 = vmatpush.bf16.msra.mxu0 %v3508
    %4157 = vmatpush.bf16.msra.mxu0 %v3506
    %4158 = vmatpush.bf16.msra.mxu0 %v3504
    %4159 = vmatpush.bf16.msra.mxu0 %v3502
    %4160 = vmatpush.bf16.msra.mxu0 %v3500
    %4161 = vmatpush.bf16.msra.mxu0 %v3498
    %4162 = vmatpush.bf16.msra.mxu0 %v3496
    %4163 = vmatpush.bf16.msra.mxu0 %v3494
    %4164 = vmatmul.bf16.gmra.mxu0 %v2844
    %v4165 = vpop.f32.mrf.mxu0
    %v4166 = vadd.f32 %v4077, %v4165
    %v4167 = vpop.f32.mrf.mxu0
    %v4168 = vadd.f32 %v4079, %v4167
    %4169 = vmatmul.bf16.gmra.mxu0 %v2851
    %v4170 = vpop.f32.mrf.mxu0
    %v4171 = vadd.f32 %v4082, %v4170
    %v4172 = vpop.f32.mrf.mxu0
    %v4173 = vadd.f32 %v4084, %v4172
    %4174 = vmatmul.bf16.gmra.mxu0 %v2858
    %v4175 = vpop.f32.mrf.mxu0
    %v4176 = vadd.f32 %v4087, %v4175
    %v4177 = vpop.f32.mrf.mxu0
    %v4178 = vadd.f32 %v4089, %v4177
    %4179 = vmatmul.bf16.gmra.mxu0 %v2865
    %v4180 = vpop.f32.mrf.mxu0
    %v4181 = vadd.f32 %v4092, %v4180
    %v4182 = vpop.f32.mrf.mxu0
    %v4183 = vadd.f32 %v4094, %v4182
    %4184 = vmatmul.bf16.gmra.mxu0 %v2872
    %v4185 = vpop.f32.mrf.mxu0
    %v4186 = vadd.f32 %v4097, %v4185
    %v4187 = vpop.f32.mrf.mxu0
    %v4188 = vadd.f32 %v4099, %v4187
    %4189 = vmatmul.bf16.gmra.mxu0 %v2879
    %v4190 = vpop.f32.mrf.mxu0
    %v4191 = vadd.f32 %v4102, %v4190
    %v4192 = vpop.f32.mrf.mxu0
    %v4193 = vadd.f32 %v4104, %v4192
    %4194 = vmatmul.bf16.gmra.mxu0 %v2886
    %v4195 = vpop.f32.mrf.mxu0
    %v4196 = vadd.f32 %v4107, %v4195
    %v4197 = vpop.f32.mrf.mxu0
    %v4198 = vadd.f32 %v4109, %v4197
    %4199 = vmatmul.bf16.gmra.mxu0 %v2893
    %v4200 = vpop.f32.mrf.mxu0
    %v4201 = vadd.f32 %v4112, %v4200
    %v4202 = vpop.f32.mrf.mxu0
    %v4203 = vadd.f32 %v4114, %v4202
    %4204 = vmatmul.bf16.gmra.mxu0 %v2900
    %v4205 = vpop.f32.mrf.mxu0
    %v4206 = vadd.f32 %v4117, %v4205
    %v4207 = vpop.f32.mrf.mxu0
    %v4208 = vadd.f32 %v4119, %v4207
    %4209 = vmatmul.bf16.gmra.mxu0 %v2907
    %v4210 = vpop.f32.mrf.mxu0
    %v4211 = vadd.f32 %v4122, %v4210
    %v4212 = vpop.f32.mrf.mxu0
    %v4213 = vadd.f32 %v4124, %v4212
    %4214 = vmatmul.bf16.gmra.mxu0 %v2914
    %v4215 = vpop.f32.mrf.mxu0
    %v4216 = vadd.f32 %v4127, %v4215
    %v4217 = vpop.f32.mrf.mxu0
    %v4218 = vadd.f32 %v4129, %v4217
    %4219 = vmatmul.bf16.gmra.mxu0 %v2921
    %v4220 = vpop.f32.mrf.mxu0
    %v4221 = vadd.f32 %v4132, %v4220
    %v4222 = vpop.f32.mrf.mxu0
    %v4223 = vadd.f32 %v4134, %v4222
    %4224 = vmatmul.bf16.gmra.mxu0 %v2928
    %v4225 = vpop.f32.mrf.mxu0
    %v4226 = vadd.f32 %v4137, %v4225
    %v4227 = vpop.f32.mrf.mxu0
    %v4228 = vadd.f32 %v4139, %v4227
    %4229 = vmatmul.bf16.gmra.mxu0 %v2935
    %v4230 = vpop.f32.mrf.mxu0
    %v4231 = vadd.f32 %v4142, %v4230
    %v4232 = vpop.f32.mrf.mxu0
    %v4233 = vadd.f32 %v4144, %v4232
    %4234 = vmatmul.bf16.gmra.mxu0 %v2942
    %v4235 = vpop.f32.mrf.mxu0
    %v4236 = vadd.f32 %v4147, %v4235
    %v4237 = vpop.f32.mrf.mxu0
    %v4238 = vadd.f32 %v4149, %v4237
    %4239 = vmatmul.bf16.gmra.mxu0 %v2949
    %v4240 = vpop.f32.mrf.mxu0
    %v4241 = vadd.f32 %v4152, %v4240
    %v4242 = vpop.f32.mrf.mxu0
    %v4243 = vadd.f32 %v4154, %v4242
    %4244 = vdwg.mxu0
    %4245 = vmatpush.bf16.msra.mxu0 %v3413
    %4246 = vmatpush.bf16.msra.mxu0 %v3411
    %4247 = vmatpush.bf16.msra.mxu0 %v3409
    %4248 = vmatpush.bf16.msra.mxu0 %v3407
    %4249 = vmatpush.bf16.msra.mxu0 %v3405
    %4250 = vmatpush.bf16.msra.mxu0 %v3403
    %4251 = vmatpush.bf16.msra.mxu0 %v3401
    %4252 = vmatpush.bf16.msra.mxu0 %v3399
    %4253 = vmatmul.bf16.gmra.mxu0 %v2838
    %v4254 = vpop.f32.mrf.mxu0
    %v4255 = vadd.f32 %v2483, %v4254
    %v4256 = vpop.f32.mrf.mxu0
    %v4257 = vadd.f32 %v2483, %v4256
    %4258 = vmatmul.bf16.gmra.mxu0 %v2845
    %v4259 = vpop.f32.mrf.mxu0
    %v4260 = vadd.f32 %v2483, %v4259
    %v4261 = vpop.f32.mrf.mxu0
    %v4262 = vadd.f32 %v2483, %v4261
    %4263 = vmatmul.bf16.gmra.mxu0 %v2852
    %v4264 = vpop.f32.mrf.mxu0
    %v4265 = vadd.f32 %v2483, %v4264
    %v4266 = vpop.f32.mrf.mxu0
    %v4267 = vadd.f32 %v2483, %v4266
    %4268 = vmatmul.bf16.gmra.mxu0 %v2859
    %v4269 = vpop.f32.mrf.mxu0
    %v4270 = vadd.f32 %v2483, %v4269
    %v4271 = vpop.f32.mrf.mxu0
    %v4272 = vadd.f32 %v2483, %v4271
    %4273 = vmatmul.bf16.gmra.mxu0 %v2866
    %v4274 = vpop.f32.mrf.mxu0
    %v4275 = vadd.f32 %v2483, %v4274
    %v4276 = vpop.f32.mrf.mxu0
    %v4277 = vadd.f32 %v2483, %v4276
    %4278 = vmatmul.bf16.gmra.mxu0 %v2873
    %v4279 = vpop.f32.mrf.mxu0
    %v4280 = vadd.f32 %v2483, %v4279
    %v4281 = vpop.f32.mrf.mxu0
    %v4282 = vadd.f32 %v2483, %v4281
    %4283 = vmatmul.bf16.gmra.mxu0 %v2880
    %v4284 = vpop.f32.mrf.mxu0
    %v4285 = vadd.f32 %v2483, %v4284
    %v4286 = vpop.f32.mrf.mxu0
    %v4287 = vadd.f32 %v2483, %v4286
    %4288 = vmatmul.bf16.gmra.mxu0 %v2887
    %v4289 = vpop.f32.mrf.mxu0
    %v4290 = vadd.f32 %v2483, %v4289
    %v4291 = vpop.f32.mrf.mxu0
    %v4292 = vadd.f32 %v2483, %v4291
    %4293 = vmatmul.bf16.gmra.mxu0 %v2894
    %v4294 = vpop.f32.mrf.mxu0
    %v4295 = vadd.f32 %v2483, %v4294
    %v4296 = vpop.f32.mrf.mxu0
    %v4297 = vadd.f32 %v2483, %v4296
    %4298 = vmatmul.bf16.gmra.mxu0 %v2901
    %v4299 = vpop.f32.mrf.mxu0
    %v4300 = vadd.f32 %v2483, %v4299
    %v4301 = vpop.f32.mrf.mxu0
    %v4302 = vadd.f32 %v2483, %v4301
    %4303 = vmatmul.bf16.gmra.mxu0 %v2908
    %v4304 = vpop.f32.mrf.mxu0
    %v4305 = vadd.f32 %v2483, %v4304
    %v4306 = vpop.f32.mrf.mxu0
    %v4307 = vadd.f32 %v2483, %v4306
    %4308 = vmatmul.bf16.gmra.mxu0 %v2915
    %v4309 = vpop.f32.mrf.mxu0
    %v4310 = vadd.f32 %v2483, %v4309
    %v4311 = vpop.f32.mrf.mxu0
    %v4312 = vadd.f32 %v2483, %v4311
    %4313 = vmatmul.bf16.gmra.mxu0 %v2922
    %v4314 = vpop.f32.mrf.mxu0
    %v4315 = vadd.f32 %v2483, %v4314
    %v4316 = vpop.f32.mrf.mxu0
    %v4317 = vadd.f32 %v2483, %v4316
    %4318 = vmatmul.bf16.gmra.mxu0 %v2929
    %v4319 = vpop.f32.mrf.mxu0
    %v4320 = vadd.f32 %v2483, %v4319
    %v4321 = vpop.f32.mrf.mxu0
    %v4322 = vadd.f32 %v2483, %v4321
    %4323 = vmatmul.bf16.gmra.mxu0 %v2936
    %v4324 = vpop.f32.mrf.mxu0
    %v4325 = vadd.f32 %v2483, %v4324
    %v4326 = vpop.f32.mrf.mxu0
    %v4327 = vadd.f32 %v2483, %v4326
    %4328 = vmatmul.bf16.gmra.mxu0 %v2943
    %v4329 = vpop.f32.mrf.mxu0
    %v4330 = vadd.f32 %v2483, %v4329
    %v4331 = vpop.f32.mrf.mxu0
    %v4332 = vadd.f32 %v2483, %v4331
    %4333 = vdwg.mxu0
    %4334 = vmatpush.bf16.msra.mxu0 %v3429
    %4335 = vmatpush.bf16.msra.mxu0 %v3427
    %4336 = vmatpush.bf16.msra.mxu0 %v3425
    %4337 = vmatpush.bf16.msra.mxu0 %v3423
    %4338 = vmatpush.bf16.msra.mxu0 %v3421
    %4339 = vmatpush.bf16.msra.mxu0 %v3419
    %4340 = vmatpush.bf16.msra.mxu0 %v3417
    %4341 = vmatpush.bf16.msra.mxu0 %v3415
    %4342 = vmatmul.bf16.gmra.mxu0 %v2839
    %v4343 = vpop.f32.mrf.mxu0
    %v4344 = vadd.f32 %v4255, %v4343
    %v4345 = vpop.f32.mrf.mxu0
    %v4346 = vadd.f32 %v4257, %v4345
    %4347 = vmatmul.bf16.gmra.mxu0 %v2846
    %v4348 = vpop.f32.mrf.mxu0
    %v4349 = vadd.f32 %v4260, %v4348
    %v4350 = vpop.f32.mrf.mxu0
    %v4351 = vadd.f32 %v4262, %v4350
    %4352 = vmatmul.bf16.gmra.mxu0 %v2853
    %v4353 = vpop.f32.mrf.mxu0
    %v4354 = vadd.f32 %v4265, %v4353
    %v4355 = vpop.f32.mrf.mxu0
    %v4356 = vadd.f32 %v4267, %v4355
    %4357 = vmatmul.bf16.gmra.mxu0 %v2860
    %v4358 = vpop.f32.mrf.mxu0
    %v4359 = vadd.f32 %v4270, %v4358
    %v4360 = vpop.f32.mrf.mxu0
    %v4361 = vadd.f32 %v4272, %v4360
    %4362 = vmatmul.bf16.gmra.mxu0 %v2867
    %v4363 = vpop.f32.mrf.mxu0
    %v4364 = vadd.f32 %v4275, %v4363
    %v4365 = vpop.f32.mrf.mxu0
    %v4366 = vadd.f32 %v4277, %v4365
    %4367 = vmatmul.bf16.gmra.mxu0 %v2874
    %v4368 = vpop.f32.mrf.mxu0
    %v4369 = vadd.f32 %v4280, %v4368
    %v4370 = vpop.f32.mrf.mxu0
    %v4371 = vadd.f32 %v4282, %v4370
    %4372 = vmatmul.bf16.gmra.mxu0 %v2881
    %v4373 = vpop.f32.mrf.mxu0
    %v4374 = vadd.f32 %v4285, %v4373
    %v4375 = vpop.f32.mrf.mxu0
    %v4376 = vadd.f32 %v4287, %v4375
    %4377 = vmatmul.bf16.gmra.mxu0 %v2888
    %v4378 = vpop.f32.mrf.mxu0
    %v4379 = vadd.f32 %v4290, %v4378
    %v4380 = vpop.f32.mrf.mxu0
    %v4381 = vadd.f32 %v4292, %v4380
    %4382 = vmatmul.bf16.gmra.mxu0 %v2895
    %v4383 = vpop.f32.mrf.mxu0
    %v4384 = vadd.f32 %v4295, %v4383
    %v4385 = vpop.f32.mrf.mxu0
    %v4386 = vadd.f32 %v4297, %v4385
    %4387 = vmatmul.bf16.gmra.mxu0 %v2902
    %v4388 = vpop.f32.mrf.mxu0
    %v4389 = vadd.f32 %v4300, %v4388
    %v4390 = vpop.f32.mrf.mxu0
    %v4391 = vadd.f32 %v4302, %v4390
    %4392 = vmatmul.bf16.gmra.mxu0 %v2909
    %v4393 = vpop.f32.mrf.mxu0
    %v4394 = vadd.f32 %v4305, %v4393
    %v4395 = vpop.f32.mrf.mxu0
    %v4396 = vadd.f32 %v4307, %v4395
    %4397 = vmatmul.bf16.gmra.mxu0 %v2916
    %v4398 = vpop.f32.mrf.mxu0
    %v4399 = vadd.f32 %v4310, %v4398
    %v4400 = vpop.f32.mrf.mxu0
    %v4401 = vadd.f32 %v4312, %v4400
    %4402 = vmatmul.bf16.gmra.mxu0 %v2923
    %v4403 = vpop.f32.mrf.mxu0
    %v4404 = vadd.f32 %v4315, %v4403
    %v4405 = vpop.f32.mrf.mxu0
    %v4406 = vadd.f32 %v4317, %v4405
    %4407 = vmatmul.bf16.gmra.mxu0 %v2930
    %v4408 = vpop.f32.mrf.mxu0
    %v4409 = vadd.f32 %v4320, %v4408
    %v4410 = vpop.f32.mrf.mxu0
    %v4411 = vadd.f32 %v4322, %v4410
    %4412 = vmatmul.bf16.gmra.mxu0 %v2937
    %v4413 = vpop.f32.mrf.mxu0
    %v4414 = vadd.f32 %v4325, %v4413
    %v4415 = vpop.f32.mrf.mxu0
    %v4416 = vadd.f32 %v4327, %v4415
    %4417 = vmatmul.bf16.gmra.mxu0 %v2944
    %v4418 = vpop.f32.mrf.mxu0
    %v4419 = vadd.f32 %v4330, %v4418
    %v4420 = vpop.f32.mrf.mxu0
    %v4421 = vadd.f32 %v4332, %v4420
    %4422 = vdwg.mxu0
    %4423 = vmatpush.bf16.msra.mxu0 %v3445
    %4424 = vmatpush.bf16.msra.mxu0 %v3443
    %4425 = vmatpush.bf16.msra.mxu0 %v3441
    %4426 = vmatpush.bf16.msra.mxu0 %v3439
    %4427 = vmatpush.bf16.msra.mxu0 %v3437
    %4428 = vmatpush.bf16.msra.mxu0 %v3435
    %4429 = vmatpush.bf16.msra.mxu0 %v3433
    %4430 = vmatpush.bf16.msra.mxu0 %v3431
    %4431 = vmatmul.bf16.gmra.mxu0 %v2840
    %v4432 = vpop.f32.mrf.mxu0
    %v4433 = vadd.f32 %v4344, %v4432
    %v4434 = vpop.f32.mrf.mxu0
    %v4435 = vadd.f32 %v4346, %v4434
    %4436 = vmatmul.bf16.gmra.mxu0 %v2847
    %v4437 = vpop.f32.mrf.mxu0
    %v4438 = vadd.f32 %v4349, %v4437
    %v4439 = vpop.f32.mrf.mxu0
    %v4440 = vadd.f32 %v4351, %v4439
    %4441 = vmatmul.bf16.gmra.mxu0 %v2854
    %v4442 = vpop.f32.mrf.mxu0
    %v4443 = vadd.f32 %v4354, %v4442
    %v4444 = vpop.f32.mrf.mxu0
    %v4445 = vadd.f32 %v4356, %v4444
    %4446 = vmatmul.bf16.gmra.mxu0 %v2861
    %v4447 = vpop.f32.mrf.mxu0
    %v4448 = vadd.f32 %v4359, %v4447
    %v4449 = vpop.f32.mrf.mxu0
    %v4450 = vadd.f32 %v4361, %v4449
    %4451 = vmatmul.bf16.gmra.mxu0 %v2868
    %v4452 = vpop.f32.mrf.mxu0
    %v4453 = vadd.f32 %v4364, %v4452
    %v4454 = vpop.f32.mrf.mxu0
    %v4455 = vadd.f32 %v4366, %v4454
    %4456 = vmatmul.bf16.gmra.mxu0 %v2875
    %v4457 = vpop.f32.mrf.mxu0
    %v4458 = vadd.f32 %v4369, %v4457
    %v4459 = vpop.f32.mrf.mxu0
    %v4460 = vadd.f32 %v4371, %v4459
    %4461 = vmatmul.bf16.gmra.mxu0 %v2882
    %v4462 = vpop.f32.mrf.mxu0
    %v4463 = vadd.f32 %v4374, %v4462
    %v4464 = vpop.f32.mrf.mxu0
    %v4465 = vadd.f32 %v4376, %v4464
    %4466 = vmatmul.bf16.gmra.mxu0 %v2889
    %v4467 = vpop.f32.mrf.mxu0
    %v4468 = vadd.f32 %v4379, %v4467
    %v4469 = vpop.f32.mrf.mxu0
    %v4470 = vadd.f32 %v4381, %v4469
    %4471 = vmatmul.bf16.gmra.mxu0 %v2896
    %v4472 = vpop.f32.mrf.mxu0
    %v4473 = vadd.f32 %v4384, %v4472
    %v4474 = vpop.f32.mrf.mxu0
    %v4475 = vadd.f32 %v4386, %v4474
    %4476 = vmatmul.bf16.gmra.mxu0 %v2903
    %v4477 = vpop.f32.mrf.mxu0
    %v4478 = vadd.f32 %v4389, %v4477
    %v4479 = vpop.f32.mrf.mxu0
    %v4480 = vadd.f32 %v4391, %v4479
    %4481 = vmatmul.bf16.gmra.mxu0 %v2910
    %v4482 = vpop.f32.mrf.mxu0
    %v4483 = vadd.f32 %v4394, %v4482
    %v4484 = vpop.f32.mrf.mxu0
    %v4485 = vadd.f32 %v4396, %v4484
    %4486 = vmatmul.bf16.gmra.mxu0 %v2917
    %v4487 = vpop.f32.mrf.mxu0
    %v4488 = vadd.f32 %v4399, %v4487
    %v4489 = vpop.f32.mrf.mxu0
    %v4490 = vadd.f32 %v4401, %v4489
    %4491 = vmatmul.bf16.gmra.mxu0 %v2924
    %v4492 = vpop.f32.mrf.mxu0
    %v4493 = vadd.f32 %v4404, %v4492
    %v4494 = vpop.f32.mrf.mxu0
    %v4495 = vadd.f32 %v4406, %v4494
    %4496 = vmatmul.bf16.gmra.mxu0 %v2931
    %v4497 = vpop.f32.mrf.mxu0
    %v4498 = vadd.f32 %v4409, %v4497
    %v4499 = vpop.f32.mrf.mxu0
    %v4500 = vadd.f32 %v4411, %v4499
    %4501 = vmatmul.bf16.gmra.mxu0 %v2938
    %v4502 = vpop.f32.mrf.mxu0
    %v4503 = vadd.f32 %v4414, %v4502
    %v4504 = vpop.f32.mrf.mxu0
    %v4505 = vadd.f32 %v4416, %v4504
    %4506 = vmatmul.bf16.gmra.mxu0 %v2945
    %v4507 = vpop.f32.mrf.mxu0
    %v4508 = vadd.f32 %v4419, %v4507
    %v4509 = vpop.f32.mrf.mxu0
    %v4510 = vadd.f32 %v4421, %v4509
    %4511 = vdwg.mxu0
    %4512 = vmatpush.bf16.msra.mxu0 %v3461
    %4513 = vmatpush.bf16.msra.mxu0 %v3459
    %4514 = vmatpush.bf16.msra.mxu0 %v3457
    %4515 = vmatpush.bf16.msra.mxu0 %v3455
    %4516 = vmatpush.bf16.msra.mxu0 %v3453
    %4517 = vmatpush.bf16.msra.mxu0 %v3451
    %4518 = vmatpush.bf16.msra.mxu0 %v3449
    %4519 = vmatpush.bf16.msra.mxu0 %v3447
    %4520 = vmatmul.bf16.gmra.mxu0 %v2841
    %v4521 = vpop.f32.mrf.mxu0
    %v4522 = vadd.f32 %v4433, %v4521
    %v4523 = vpop.f32.mrf.mxu0
    %v4524 = vadd.f32 %v4435, %v4523
    %4525 = vmatmul.bf16.gmra.mxu0 %v2848
    %v4526 = vpop.f32.mrf.mxu0
    %v4527 = vadd.f32 %v4438, %v4526
    %v4528 = vpop.f32.mrf.mxu0
    %v4529 = vadd.f32 %v4440, %v4528
    %4530 = vmatmul.bf16.gmra.mxu0 %v2855
    %v4531 = vpop.f32.mrf.mxu0
    %v4532 = vadd.f32 %v4443, %v4531
    %v4533 = vpop.f32.mrf.mxu0
    %v4534 = vadd.f32 %v4445, %v4533
    %4535 = vmatmul.bf16.gmra.mxu0 %v2862
    %v4536 = vpop.f32.mrf.mxu0
    %v4537 = vadd.f32 %v4448, %v4536
    %v4538 = vpop.f32.mrf.mxu0
    %v4539 = vadd.f32 %v4450, %v4538
    %4540 = vmatmul.bf16.gmra.mxu0 %v2869
    %v4541 = vpop.f32.mrf.mxu0
    %v4542 = vadd.f32 %v4453, %v4541
    %v4543 = vpop.f32.mrf.mxu0
    %v4544 = vadd.f32 %v4455, %v4543
    %4545 = vmatmul.bf16.gmra.mxu0 %v2876
    %v4546 = vpop.f32.mrf.mxu0
    %v4547 = vadd.f32 %v4458, %v4546
    %v4548 = vpop.f32.mrf.mxu0
    %v4549 = vadd.f32 %v4460, %v4548
    %4550 = vmatmul.bf16.gmra.mxu0 %v2883
    %v4551 = vpop.f32.mrf.mxu0
    %v4552 = vadd.f32 %v4463, %v4551
    %v4553 = vpop.f32.mrf.mxu0
    %v4554 = vadd.f32 %v4465, %v4553
    %4555 = vmatmul.bf16.gmra.mxu0 %v2890
    %v4556 = vpop.f32.mrf.mxu0
    %v4557 = vadd.f32 %v4468, %v4556
    %v4558 = vpop.f32.mrf.mxu0
    %v4559 = vadd.f32 %v4470, %v4558
    %4560 = vmatmul.bf16.gmra.mxu0 %v2897
    %v4561 = vpop.f32.mrf.mxu0
    %v4562 = vadd.f32 %v4473, %v4561
    %v4563 = vpop.f32.mrf.mxu0
    %v4564 = vadd.f32 %v4475, %v4563
    %4565 = vmatmul.bf16.gmra.mxu0 %v2904
    %v4566 = vpop.f32.mrf.mxu0
    %v4567 = vadd.f32 %v4478, %v4566
    %v4568 = vpop.f32.mrf.mxu0
    %v4569 = vadd.f32 %v4480, %v4568
    %4570 = vmatmul.bf16.gmra.mxu0 %v2911
    %v4571 = vpop.f32.mrf.mxu0
    %v4572 = vadd.f32 %v4483, %v4571
    %v4573 = vpop.f32.mrf.mxu0
    %v4574 = vadd.f32 %v4485, %v4573
    %4575 = vmatmul.bf16.gmra.mxu0 %v2918
    %v4576 = vpop.f32.mrf.mxu0
    %v4577 = vadd.f32 %v4488, %v4576
    %v4578 = vpop.f32.mrf.mxu0
    %v4579 = vadd.f32 %v4490, %v4578
    %4580 = vmatmul.bf16.gmra.mxu0 %v2925
    %v4581 = vpop.f32.mrf.mxu0
    %v4582 = vadd.f32 %v4493, %v4581
    %v4583 = vpop.f32.mrf.mxu0
    %v4584 = vadd.f32 %v4495, %v4583
    %4585 = vmatmul.bf16.gmra.mxu0 %v2932
    %v4586 = vpop.f32.mrf.mxu0
    %v4587 = vadd.f32 %v4498, %v4586
    %v4588 = vpop.f32.mrf.mxu0
    %v4589 = vadd.f32 %v4500, %v4588
    %4590 = vmatmul.bf16.gmra.mxu0 %v2939
    %v4591 = vpop.f32.mrf.mxu0
    %v4592 = vadd.f32 %v4503, %v4591
    %v4593 = vpop.f32.mrf.mxu0
    %v4594 = vadd.f32 %v4505, %v4593
    %4595 = vmatmul.bf16.gmra.mxu0 %v2946
    %v4596 = vpop.f32.mrf.mxu0
    %v4597 = vadd.f32 %v4508, %v4596
    %v4598 = vpop.f32.mrf.mxu0
    %v4599 = vadd.f32 %v4510, %v4598
    %4600 = vdwg.mxu0
    %4601 = vmatpush.bf16.msra.mxu0 %v3477
    %4602 = vmatpush.bf16.msra.mxu0 %v3475
    %4603 = vmatpush.bf16.msra.mxu0 %v3473
    %4604 = vmatpush.bf16.msra.mxu0 %v3471
    %4605 = vmatpush.bf16.msra.mxu0 %v3469
    %4606 = vmatpush.bf16.msra.mxu0 %v3467
    %4607 = vmatpush.bf16.msra.mxu0 %v3465
    %4608 = vmatpush.bf16.msra.mxu0 %v3463
    %4609 = vmatmul.bf16.gmra.mxu0 %v2842
    %v4610 = vpop.f32.mrf.mxu0
    %v4611 = vadd.f32 %v4522, %v4610
    %v4612 = vpop.f32.mrf.mxu0
    %v4613 = vadd.f32 %v4524, %v4612
    %4614 = vmatmul.bf16.gmra.mxu0 %v2849
    %v4615 = vpop.f32.mrf.mxu0
    %v4616 = vadd.f32 %v4527, %v4615
    %v4617 = vpop.f32.mrf.mxu0
    %v4618 = vadd.f32 %v4529, %v4617
    %4619 = vmatmul.bf16.gmra.mxu0 %v2856
    %v4620 = vpop.f32.mrf.mxu0
    %v4621 = vadd.f32 %v4532, %v4620
    %v4622 = vpop.f32.mrf.mxu0
    %v4623 = vadd.f32 %v4534, %v4622
    %4624 = vmatmul.bf16.gmra.mxu0 %v2863
    %v4625 = vpop.f32.mrf.mxu0
    %v4626 = vadd.f32 %v4537, %v4625
    %v4627 = vpop.f32.mrf.mxu0
    %v4628 = vadd.f32 %v4539, %v4627
    %4629 = vmatmul.bf16.gmra.mxu0 %v2870
    %v4630 = vpop.f32.mrf.mxu0
    %v4631 = vadd.f32 %v4542, %v4630
    %v4632 = vpop.f32.mrf.mxu0
    %v4633 = vadd.f32 %v4544, %v4632
    %4634 = vmatmul.bf16.gmra.mxu0 %v2877
    %v4635 = vpop.f32.mrf.mxu0
    %v4636 = vadd.f32 %v4547, %v4635
    %v4637 = vpop.f32.mrf.mxu0
    %v4638 = vadd.f32 %v4549, %v4637
    %4639 = vmatmul.bf16.gmra.mxu0 %v2884
    %v4640 = vpop.f32.mrf.mxu0
    %v4641 = vadd.f32 %v4552, %v4640
    %v4642 = vpop.f32.mrf.mxu0
    %v4643 = vadd.f32 %v4554, %v4642
    %4644 = vmatmul.bf16.gmra.mxu0 %v2891
    %v4645 = vpop.f32.mrf.mxu0
    %v4646 = vadd.f32 %v4557, %v4645
    %v4647 = vpop.f32.mrf.mxu0
    %v4648 = vadd.f32 %v4559, %v4647
    %4649 = vmatmul.bf16.gmra.mxu0 %v2898
    %v4650 = vpop.f32.mrf.mxu0
    %v4651 = vadd.f32 %v4562, %v4650
    %v4652 = vpop.f32.mrf.mxu0
    %v4653 = vadd.f32 %v4564, %v4652
    %4654 = vmatmul.bf16.gmra.mxu0 %v2905
    %v4655 = vpop.f32.mrf.mxu0
    %v4656 = vadd.f32 %v4567, %v4655
    %v4657 = vpop.f32.mrf.mxu0
    %v4658 = vadd.f32 %v4569, %v4657
    %4659 = vmatmul.bf16.gmra.mxu0 %v2912
    %v4660 = vpop.f32.mrf.mxu0
    %v4661 = vadd.f32 %v4572, %v4660
    %v4662 = vpop.f32.mrf.mxu0
    %v4663 = vadd.f32 %v4574, %v4662
    %4664 = vmatmul.bf16.gmra.mxu0 %v2919
    %v4665 = vpop.f32.mrf.mxu0
    %v4666 = vadd.f32 %v4577, %v4665
    %v4667 = vpop.f32.mrf.mxu0
    %v4668 = vadd.f32 %v4579, %v4667
    %4669 = vmatmul.bf16.gmra.mxu0 %v2926
    %v4670 = vpop.f32.mrf.mxu0
    %v4671 = vadd.f32 %v4582, %v4670
    %v4672 = vpop.f32.mrf.mxu0
    %v4673 = vadd.f32 %v4584, %v4672
    %4674 = vmatmul.bf16.gmra.mxu0 %v2933
    %v4675 = vpop.f32.mrf.mxu0
    %v4676 = vadd.f32 %v4587, %v4675
    %v4677 = vpop.f32.mrf.mxu0
    %v4678 = vadd.f32 %v4589, %v4677
    %4679 = vmatmul.bf16.gmra.mxu0 %v2940
    %v4680 = vpop.f32.mrf.mxu0
    %v4681 = vadd.f32 %v4592, %v4680
    %v4682 = vpop.f32.mrf.mxu0
    %v4683 = vadd.f32 %v4594, %v4682
    %4684 = vmatmul.bf16.gmra.mxu0 %v2947
    %v4685 = vpop.f32.mrf.mxu0
    %v4686 = vadd.f32 %v4597, %v4685
    %v4687 = vpop.f32.mrf.mxu0
    %v4688 = vadd.f32 %v4599, %v4687
    %4689 = vdwg.mxu0
    %4690 = vmatpush.bf16.msra.mxu0 %v3493
    %4691 = vmatpush.bf16.msra.mxu0 %v3491
    %4692 = vmatpush.bf16.msra.mxu0 %v3489
    %4693 = vmatpush.bf16.msra.mxu0 %v3487
    %4694 = vmatpush.bf16.msra.mxu0 %v3485
    %4695 = vmatpush.bf16.msra.mxu0 %v3483
    %4696 = vmatpush.bf16.msra.mxu0 %v3481
    %4697 = vmatpush.bf16.msra.mxu0 %v3479
    %4698 = vmatmul.bf16.gmra.mxu0 %v2843
    %v4699 = vpop.f32.mrf.mxu0
    %v4700 = vadd.f32 %v4611, %v4699
    %v4701 = vpop.f32.mrf.mxu0
    %v4702 = vadd.f32 %v4613, %v4701
    %4703 = vmatmul.bf16.gmra.mxu0 %v2850
    %v4704 = vpop.f32.mrf.mxu0
    %v4705 = vadd.f32 %v4616, %v4704
    %v4706 = vpop.f32.mrf.mxu0
    %v4707 = vadd.f32 %v4618, %v4706
    %4708 = vmatmul.bf16.gmra.mxu0 %v2857
    %v4709 = vpop.f32.mrf.mxu0
    %v4710 = vadd.f32 %v4621, %v4709
    %v4711 = vpop.f32.mrf.mxu0
    %v4712 = vadd.f32 %v4623, %v4711
    %4713 = vmatmul.bf16.gmra.mxu0 %v2864
    %v4714 = vpop.f32.mrf.mxu0
    %v4715 = vadd.f32 %v4626, %v4714
    %v4716 = vpop.f32.mrf.mxu0
    %v4717 = vadd.f32 %v4628, %v4716
    %4718 = vmatmul.bf16.gmra.mxu0 %v2871
    %v4719 = vpop.f32.mrf.mxu0
    %v4720 = vadd.f32 %v4631, %v4719
    %v4721 = vpop.f32.mrf.mxu0
    %v4722 = vadd.f32 %v4633, %v4721
    %4723 = vmatmul.bf16.gmra.mxu0 %v2878
    %v4724 = vpop.f32.mrf.mxu0
    %v4725 = vadd.f32 %v4636, %v4724
    %v4726 = vpop.f32.mrf.mxu0
    %v4727 = vadd.f32 %v4638, %v4726
    %4728 = vmatmul.bf16.gmra.mxu0 %v2885
    %v4729 = vpop.f32.mrf.mxu0
    %v4730 = vadd.f32 %v4641, %v4729
    %v4731 = vpop.f32.mrf.mxu0
    %v4732 = vadd.f32 %v4643, %v4731
    %4733 = vmatmul.bf16.gmra.mxu0 %v2892
    %v4734 = vpop.f32.mrf.mxu0
    %v4735 = vadd.f32 %v4646, %v4734
    %v4736 = vpop.f32.mrf.mxu0
    %v4737 = vadd.f32 %v4648, %v4736
    %4738 = vmatmul.bf16.gmra.mxu0 %v2899
    %v4739 = vpop.f32.mrf.mxu0
    %v4740 = vadd.f32 %v4651, %v4739
    %v4741 = vpop.f32.mrf.mxu0
    %v4742 = vadd.f32 %v4653, %v4741
    %4743 = vmatmul.bf16.gmra.mxu0 %v2906
    %v4744 = vpop.f32.mrf.mxu0
    %v4745 = vadd.f32 %v4656, %v4744
    %v4746 = vpop.f32.mrf.mxu0
    %v4747 = vadd.f32 %v4658, %v4746
    %4748 = vmatmul.bf16.gmra.mxu0 %v2913
    %v4749 = vpop.f32.mrf.mxu0
    %v4750 = vadd.f32 %v4661, %v4749
    %v4751 = vpop.f32.mrf.mxu0
    %v4752 = vadd.f32 %v4663, %v4751
    %4753 = vmatmul.bf16.gmra.mxu0 %v2920
    %v4754 = vpop.f32.mrf.mxu0
    %v4755 = vadd.f32 %v4666, %v4754
    %v4756 = vpop.f32.mrf.mxu0
    %v4757 = vadd.f32 %v4668, %v4756
    %4758 = vmatmul.bf16.gmra.mxu0 %v2927
    %v4759 = vpop.f32.mrf.mxu0
    %v4760 = vadd.f32 %v4671, %v4759
    %v4761 = vpop.f32.mrf.mxu0
    %v4762 = vadd.f32 %v4673, %v4761
    %4763 = vmatmul.bf16.gmra.mxu0 %v2934
    %v4764 = vpop.f32.mrf.mxu0
    %v4765 = vadd.f32 %v4676, %v4764
    %v4766 = vpop.f32.mrf.mxu0
    %v4767 = vadd.f32 %v4678, %v4766
    %4768 = vmatmul.bf16.gmra.mxu0 %v2941
    %v4769 = vpop.f32.mrf.mxu0
    %v4770 = vadd.f32 %v4681, %v4769
    %v4771 = vpop.f32.mrf.mxu0
    %v4772 = vadd.f32 %v4683, %v4771
    %4773 = vmatmul.bf16.gmra.mxu0 %v2948
    %v4774 = vpop.f32.mrf.mxu0
    %v4775 = vadd.f32 %v4686, %v4774
    %v4776 = vpop.f32.mrf.mxu0
    %v4777 = vadd.f32 %v4688, %v4776
    %4778 = vdwg.mxu0
    %4779 = vmatpush.bf16.msra.mxu0 %v3509
    %4780 = vmatpush.bf16.msra.mxu0 %v3507
    %4781 = vmatpush.bf16.msra.mxu0 %v3505
    %4782 = vmatpush.bf16.msra.mxu0 %v3503
    %4783 = vmatpush.bf16.msra.mxu0 %v3501
    %4784 = vmatpush.bf16.msra.mxu0 %v3499
    %4785 = vmatpush.bf16.msra.mxu0 %v3497
    %4786 = vmatpush.bf16.msra.mxu0 %v3495
    %4787 = vmatmul.bf16.gmra.mxu0 %v2844
    %v4788 = vpop.f32.mrf.mxu0
    %v4789 = vadd.f32 %v4700, %v4788
    %v4790 = vpop.f32.mrf.mxu0
    %v4791 = vadd.f32 %v4702, %v4790
    %4792 = vmatmul.bf16.gmra.mxu0 %v2851
    %v4793 = vpop.f32.mrf.mxu0
    %v4794 = vadd.f32 %v4705, %v4793
    %v4795 = vpop.f32.mrf.mxu0
    %v4796 = vadd.f32 %v4707, %v4795
    %4797 = vmatmul.bf16.gmra.mxu0 %v2858
    %v4798 = vpop.f32.mrf.mxu0
    %v4799 = vadd.f32 %v4710, %v4798
    %v4800 = vpop.f32.mrf.mxu0
    %v4801 = vadd.f32 %v4712, %v4800
    %4802 = vmatmul.bf16.gmra.mxu0 %v2865
    %v4803 = vpop.f32.mrf.mxu0
    %v4804 = vadd.f32 %v4715, %v4803
    %v4805 = vpop.f32.mrf.mxu0
    %v4806 = vadd.f32 %v4717, %v4805
    %4807 = vmatmul.bf16.gmra.mxu0 %v2872
    %v4808 = vpop.f32.mrf.mxu0
    %v4809 = vadd.f32 %v4720, %v4808
    %v4810 = vpop.f32.mrf.mxu0
    %v4811 = vadd.f32 %v4722, %v4810
    %4812 = vmatmul.bf16.gmra.mxu0 %v2879
    %v4813 = vpop.f32.mrf.mxu0
    %v4814 = vadd.f32 %v4725, %v4813
    %v4815 = vpop.f32.mrf.mxu0
    %v4816 = vadd.f32 %v4727, %v4815
    %4817 = vmatmul.bf16.gmra.mxu0 %v2886
    %v4818 = vpop.f32.mrf.mxu0
    %v4819 = vadd.f32 %v4730, %v4818
    %v4820 = vpop.f32.mrf.mxu0
    %v4821 = vadd.f32 %v4732, %v4820
    %4822 = vmatmul.bf16.gmra.mxu0 %v2893
    %v4823 = vpop.f32.mrf.mxu0
    %v4824 = vadd.f32 %v4735, %v4823
    %v4825 = vpop.f32.mrf.mxu0
    %v4826 = vadd.f32 %v4737, %v4825
    %4827 = vmatmul.bf16.gmra.mxu0 %v2900
    %v4828 = vpop.f32.mrf.mxu0
    %v4829 = vadd.f32 %v4740, %v4828
    %v4830 = vpop.f32.mrf.mxu0
    %v4831 = vadd.f32 %v4742, %v4830
    %4832 = vmatmul.bf16.gmra.mxu0 %v2907
    %v4833 = vpop.f32.mrf.mxu0
    %v4834 = vadd.f32 %v4745, %v4833
    %v4835 = vpop.f32.mrf.mxu0
    %v4836 = vadd.f32 %v4747, %v4835
    %4837 = vmatmul.bf16.gmra.mxu0 %v2914
    %v4838 = vpop.f32.mrf.mxu0
    %v4839 = vadd.f32 %v4750, %v4838
    %v4840 = vpop.f32.mrf.mxu0
    %v4841 = vadd.f32 %v4752, %v4840
    %4842 = vmatmul.bf16.gmra.mxu0 %v2921
    %v4843 = vpop.f32.mrf.mxu0
    %v4844 = vadd.f32 %v4755, %v4843
    %v4845 = vpop.f32.mrf.mxu0
    %v4846 = vadd.f32 %v4757, %v4845
    %4847 = vmatmul.bf16.gmra.mxu0 %v2928
    %v4848 = vpop.f32.mrf.mxu0
    %v4849 = vadd.f32 %v4760, %v4848
    %v4850 = vpop.f32.mrf.mxu0
    %v4851 = vadd.f32 %v4762, %v4850
    %4852 = vmatmul.bf16.gmra.mxu0 %v2935
    %v4853 = vpop.f32.mrf.mxu0
    %v4854 = vadd.f32 %v4765, %v4853
    %v4855 = vpop.f32.mrf.mxu0
    %v4856 = vadd.f32 %v4767, %v4855
    %4857 = vmatmul.bf16.gmra.mxu0 %v2942
    %v4858 = vpop.f32.mrf.mxu0
    %v4859 = vadd.f32 %v4770, %v4858
    %v4860 = vpop.f32.mrf.mxu0
    %v4861 = vadd.f32 %v4772, %v4860
    %4862 = vmatmul.bf16.gmra.mxu0 %v2949
    %v4863 = vpop.f32.mrf.mxu0
    %v4864 = vadd.f32 %v4775, %v4863
    %v4865 = vpop.f32.mrf.mxu0
    %v4866 = vadd.f32 %v4777, %v4865
    %4867 = vdwg.mxu0
    %v4868 = vld [vmem:[%s5] sm:$0x3]
    %v4869 = vld [vmem:[%s6] sm:$0x3]
    %v4870 = vadd.f32 %v4166, %v4168
    %v4871 = vadd.f32 %v4870, %v4171
    %v4872 = vadd.f32 %v4871, %v4173
    %v4873 = vadd.f32 %v4872, %v4176
    %v4874 = vadd.f32 %v4873, %v4178
    %v4875 = vadd.f32 %v4874, %v4181
    %v4876 = vadd.f32 %v4875, %v4183
    %v4877 = vadd.f32 %v4876, %v4186
    %v4878 = vadd.f32 %v4877, %v4188
    %v4879 = vadd.f32 %v4878, %v4191
    %v4880 = vadd.f32 %v4879, %v4193
    %v4881 = vadd.f32 %v4880, %v4196
    %v4882 = vadd.f32 %v4881, %v4198
    %v4883 = vadd.f32 %v4882, %v4201
    %v4884 = vadd.f32 %v4883, %v4203
    %v4885 = vadd.f32 %v4884, %v4206
    %v4886 = vadd.f32 %v4885, %v4208
    %v4887 = vadd.f32 %v4886, %v4211
    %v4888 = vadd.f32 %v4887, %v4213
    %v4889 = vadd.f32 %v4888, %v4216
    %v4890 = vadd.f32 %v4889, %v4218
    %v4891 = vadd.f32 %v4890, %v4221
    %v4892 = vadd.f32 %v4891, %v4223
    %v4893 = vadd.f32 %v4892, %v4226
    %v4894 = vadd.f32 %v4893, %v4228
    %v4895 = vadd.f32 %v4894, %v4231
    %v4896 = vadd.f32 %v4895, %v4233
    %v4897 = vadd.f32 %v4896, %v4236
    %v4898 = vadd.f32 %v4897, %v4238
    %v4899 = vadd.f32 %v4898, %v4241
    %v4900 = vadd.f32 %v4899, %v4243
    %v4901 = vrot.slane %v4900, 4
    %v4902 = vadd.f32 %v4900, %v4901
    %v4903 = vrot.slane %v4902, 2
    %v4904 = vadd.f32 %v4902, %v4903
    %v4905 = vrot.slane %v4904, 1
    %v4906 = vadd.f32 %v4904, %v4905
    %v4907 = vadd.f32 %v4789, %v4791
    %v4908 = vadd.f32 %v4907, %v4794
    %v4909 = vadd.f32 %v4908, %v4796
    %v4910 = vadd.f32 %v4909, %v4799
    %v4911 = vadd.f32 %v4910, %v4801
    %v4912 = vadd.f32 %v4911, %v4804
    %v4913 = vadd.f32 %v4912, %v4806
    %v4914 = vadd.f32 %v4913, %v4809
    %v4915 = vadd.f32 %v4914, %v4811
    %v4916 = vadd.f32 %v4915, %v4814
    %v4917 = vadd.f32 %v4916, %v4816
    %v4918 = vadd.f32 %v4917, %v4819
    %v4919 = vadd.f32 %v4918, %v4821
    %v4920 = vadd.f32 %v4919, %v4824
    %v4921 = vadd.f32 %v4920, %v4826
    %v4922 = vadd.f32 %v4921, %v4829
    %v4923 = vadd.f32 %v4922, %v4831
    %v4924 = vadd.f32 %v4923, %v4834
    %v4925 = vadd.f32 %v4924, %v4836
    %v4926 = vadd.f32 %v4925, %v4839
    %v4927 = vadd.f32 %v4926, %v4841
    %v4928 = vadd.f32 %v4927, %v4844
    %v4929 = vadd.f32 %v4928, %v4846
    %v4930 = vadd.f32 %v4929, %v4849
    %v4931 = vadd.f32 %v4930, %v4851
    %v4932 = vadd.f32 %v4931, %v4854
    %v4933 = vadd.f32 %v4932, %v4856
    %v4934 = vadd.f32 %v4933, %v4859
    %v4935 = vadd.f32 %v4934, %v4861
    %v4936 = vadd.f32 %v4935, %v4864
    %v4937 = vadd.f32 %v4936, %v4866
    %v4938 = vrot.slane %v4937, 4
    %v4939 = vadd.f32 %v4937, %v4938
    %v4940 = vrot.slane %v4939, 2
    %v4941 = vadd.f32 %v4939, %v4940
    %v4942 = vrot.slane %v4941, 1
    %v4943 = vadd.f32 %v4941, %v4942
    %v4944 = vmul.f32 %v4906, %v542
    %v4945 = vmul.f32 %v4943, %v542
    %v4946 = vmul.f32 %v4166, %v4166
    %v4947 = vmul.f32 %v4789, %v4789
    %v4948 = vmul.f32 %v4168, %v4168
    %v4949 = vmul.f32 %v4791, %v4791
    %v4950 = vmul.f32 %v4171, %v4171
    %v4951 = vmul.f32 %v4794, %v4794
    %v4952 = vmul.f32 %v4173, %v4173
    %v4953 = vmul.f32 %v4796, %v4796
    %v4954 = vmul.f32 %v4176, %v4176
    %v4955 = vmul.f32 %v4799, %v4799
    %v4956 = vmul.f32 %v4178, %v4178
    %v4957 = vmul.f32 %v4801, %v4801
    %v4958 = vmul.f32 %v4181, %v4181
    %v4959 = vmul.f32 %v4804, %v4804
    %v4960 = vmul.f32 %v4183, %v4183
    %v4961 = vmul.f32 %v4806, %v4806
    %v4962 = vmul.f32 %v4186, %v4186
    %v4963 = vmul.f32 %v4809, %v4809
    %v4964 = vmul.f32 %v4188, %v4188
    %v4965 = vmul.f32 %v4811, %v4811
    %v4966 = vmul.f32 %v4191, %v4191
    %v4967 = vmul.f32 %v4814, %v4814
    %v4968 = vmul.f32 %v4193, %v4193
    %v4969 = vmul.f32 %v4816, %v4816
    %v4970 = vmul.f32 %v4196, %v4196
    %v4971 = vmul.f32 %v4819, %v4819
    %v4972 = vmul.f32 %v4198, %v4198
    %v4973 = vmul.f32 %v4821, %v4821
    %v4974 = vmul.f32 %v4201, %v4201
    %v4975 = vmul.f32 %v4824, %v4824
    %v4976 = vmul.f32 %v4203, %v4203
    %v4977 = vmul.f32 %v4826, %v4826
    %v4978 = vmul.f32 %v4206, %v4206
    %v4979 = vmul.f32 %v4829, %v4829
    %v4980 = vmul.f32 %v4208, %v4208
    %v4981 = vmul.f32 %v4831, %v4831
    %v4982 = vmul.f32 %v4211, %v4211
    %v4983 = vmul.f32 %v4834, %v4834
    %v4984 = vmul.f32 %v4213, %v4213
    %v4985 = vmul.f32 %v4836, %v4836
    %v4986 = vmul.f32 %v4216, %v4216
    %v4987 = vmul.f32 %v4839, %v4839
    %v4988 = vmul.f32 %v4218, %v4218
    %v4989 = vmul.f32 %v4841, %v4841
    %v4990 = vmul.f32 %v4221, %v4221
    %v4991 = vmul.f32 %v4844, %v4844
    %v4992 = vmul.f32 %v4223, %v4223
    %v4993 = vmul.f32 %v4846, %v4846
    %v4994 = vmul.f32 %v4226, %v4226
    %v4995 = vmul.f32 %v4849, %v4849
    %v4996 = vmul.f32 %v4228, %v4228
    %v4997 = vmul.f32 %v4851, %v4851
    %v4998 = vmul.f32 %v4231, %v4231
    %v4999 = vmul.f32 %v4854, %v4854
    %v5000 = vmul.f32 %v4233, %v4233
    %v5001 = vmul.f32 %v4856, %v4856
    %v5002 = vmul.f32 %v4236, %v4236
    %v5003 = vmul.f32 %v4859, %v4859
    %v5004 = vmul.f32 %v4238, %v4238
    %v5005 = vmul.f32 %v4861, %v4861
    %v5006 = vmul.f32 %v4241, %v4241
    %v5007 = vmul.f32 %v4864, %v4864
    %v5008 = vmul.f32 %v4243, %v4243
    %v5009 = vmul.f32 %v4866, %v4866
    %v5010 = vadd.f32 %v4946, %v4948
    %v5011 = vadd.f32 %v5010, %v4950
    %v5012 = vadd.f32 %v5011, %v4952
    %v5013 = vadd.f32 %v5012, %v4954
    %v5014 = vadd.f32 %v5013, %v4956
    %v5015 = vadd.f32 %v5014, %v4958
    %v5016 = vadd.f32 %v5015, %v4960
    %v5017 = vadd.f32 %v5016, %v4962
    %v5018 = vadd.f32 %v5017, %v4964
    %v5019 = vadd.f32 %v5018, %v4966
    %v5020 = vadd.f32 %v5019, %v4968
    %v5021 = vadd.f32 %v5020, %v4970
    %v5022 = vadd.f32 %v5021, %v4972
    %v5023 = vadd.f32 %v5022, %v4974
    %v5024 = vadd.f32 %v5023, %v4976
    %v5025 = vadd.f32 %v5024, %v4978
    %v5026 = vadd.f32 %v5025, %v4980
    %v5027 = vadd.f32 %v5026, %v4982
    %v5028 = vadd.f32 %v5027, %v4984
    %v5029 = vadd.f32 %v5028, %v4986
    %v5030 = vadd.f32 %v5029, %v4988
    %v5031 = vadd.f32 %v5030, %v4990
    %v5032 = vadd.f32 %v5031, %v4992
    %v5033 = vadd.f32 %v5032, %v4994
    %v5034 = vadd.f32 %v5033, %v4996
    %v5035 = vadd.f32 %v5034, %v4998
    %v5036 = vadd.f32 %v5035, %v5000
    %v5037 = vadd.f32 %v5036, %v5002
    %v5038 = vadd.f32 %v5037, %v5004
    %v5039 = vadd.f32 %v5038, %v5006
    %v5040 = vadd.f32 %v5039, %v5008
    %v5041 = vrot.slane %v5040, 4
    %v5042 = vadd.f32 %v5040, %v5041
    %v5043 = vrot.slane %v5042, 2
    %v5044 = vadd.f32 %v5042, %v5043
    %v5045 = vrot.slane %v5044, 1
    %v5046 = vadd.f32 %v5044, %v5045
    %v5047 = vadd.f32 %v4947, %v4949
    %v5048 = vadd.f32 %v5047, %v4951
    %v5049 = vadd.f32 %v5048, %v4953
    %v5050 = vadd.f32 %v5049, %v4955
    %v5051 = vadd.f32 %v5050, %v4957
    %v5052 = vadd.f32 %v5051, %v4959
    %v5053 = vadd.f32 %v5052, %v4961
    %v5054 = vadd.f32 %v5053, %v4963
    %v5055 = vadd.f32 %v5054, %v4965
    %v5056 = vadd.f32 %v5055, %v4967
    %v5057 = vadd.f32 %v5056, %v4969
    %v5058 = vadd.f32 %v5057, %v4971
    %v5059 = vadd.f32 %v5058, %v4973
    %v5060 = vadd.f32 %v5059, %v4975
    %v5061 = vadd.f32 %v5060, %v4977
    %v5062 = vadd.f32 %v5061, %v4979
    %v5063 = vadd.f32 %v5062, %v4981
    %v5064 = vadd.f32 %v5063, %v4983
    %v5065 = vadd.f32 %v5064, %v4985
    %v5066 = vadd.f32 %v5065, %v4987
    %v5067 = vadd.f32 %v5066, %v4989
    %v5068 = vadd.f32 %v5067, %v4991
    %v5069 = vadd.f32 %v5068, %v4993
    %v5070 = vadd.f32 %v5069, %v4995
    %v5071 = vadd.f32 %v5070, %v4997
    %v5072 = vadd.f32 %v5071, %v4999
    %v5073 = vadd.f32 %v5072, %v5001
    %v5074 = vadd.f32 %v5073, %v5003
    %v5075 = vadd.f32 %v5074, %v5005
    %v5076 = vadd.f32 %v5075, %v5007
    %v5077 = vadd.f32 %v5076, %v5009
    %v5078 = vrot.slane %v5077, 4
    %v5079 = vadd.f32 %v5077, %v5078
    %v5080 = vrot.slane %v5079, 2
    %v5081 = vadd.f32 %v5079, %v5080
    %v5082 = vrot.slane %v5081, 1
    %v5083 = vadd.f32 %v5081, %v5082
    %v5084 = vmul.f32 %v5046, %v542
    %v5085 = vmul.f32 %v5083, %v542
    %v5086 = vmul.f32 %v4944, %v4944
    %v5087 = vmul.f32 %v4945, %v4945
    %v5088 = vsub.f32 %v5084, %v5086
    %v5089 = vsub.f32 %v5085, %v5087
    %v5090 = vadd.f32 %v5088, 2e-05
    %v5091 = vadd.f32 %v5089, 2e-05
    %v5092 = vrsqrt.pop %v5090
    %v5093 = vmul.f32 %v5092, %v5090
    %v5094 = vmul.f32 %v5093, %v5092
    %v5095 = vmul.f32 0.5, %v5094
    %v5096 = vsub.f32 1.5, %v5095
    %v5097 = vmul.f32 %v5092, %v5096
    %vm5098 = vweird.f32 %v5090
    %vm5099 = vweird.f32 %v5092
    %vm5100 = vmor %vm5098, %vm5099
    %v5101 = vsel %vm5100, %v5092, %v5097
    %v5102 = vrsqrt.pop %v5091
    %v5103 = vmul.f32 %v5102, %v5091
    %v5104 = vmul.f32 %v5103, %v5102
    %v5105 = vmul.f32 0.5, %v5104
    %v5106 = vsub.f32 1.5, %v5105
    %v5107 = vmul.f32 %v5102, %v5106
    %vm5108 = vweird.f32 %v5091
    %vm5109 = vweird.f32 %v5102
    %vm5110 = vmor %vm5108, %vm5109
    %v5111 = vsel %vm5110, %v5102, %v5107
    %v5114 = vrot.slane %v5111, 7
    %v5115 = vsel %vm1144, %v5101, %v5114
    %v5117 = vmul.f32 %v4868, %v5115
    %v5119 = vperm.slane %v5117, 0
    %v5120 = vperm.slane %v5117, 1
    %v5123 = vmul.f32 %v4944, %v5119
    %v5124 = vmul.f32 %v4945, %v5120
    %v5127 = vrot.slane %v5124, 7
    %v5128 = vsel %vm1144, %v5123, %v5127
    %v5130 = vsub.f32 %v4869, %v5128
    %v5131 = vmul.f32 %v4166, %v5119
    %v5132 = vmul.f32 %v4789, %v5120
    %v5133 = vmul.f32 %v4168, %v5119
    %v5134 = vmul.f32 %v4791, %v5120
    %v5135 = vmul.f32 %v4171, %v5119
    %v5136 = vmul.f32 %v4794, %v5120
    %v5137 = vmul.f32 %v4173, %v5119
    %v5138 = vmul.f32 %v4796, %v5120
    %v5139 = vmul.f32 %v4176, %v5119
    %v5140 = vmul.f32 %v4799, %v5120
    %v5141 = vmul.f32 %v4178, %v5119
    %v5142 = vmul.f32 %v4801, %v5120
    %v5143 = vmul.f32 %v4181, %v5119
    %v5144 = vmul.f32 %v4804, %v5120
    %v5145 = vmul.f32 %v4183, %v5119
    %v5146 = vmul.f32 %v4806, %v5120
    %v5147 = vmul.f32 %v4186, %v5119
    %v5148 = vmul.f32 %v4809, %v5120
    %v5149 = vmul.f32 %v4188, %v5119
    %v5150 = vmul.f32 %v4811, %v5120
    %v5151 = vmul.f32 %v4191, %v5119
    %v5152 = vmul.f32 %v4814, %v5120
    %v5153 = vmul.f32 %v4193, %v5119
    %v5154 = vmul.f32 %v4816, %v5120
    %v5155 = vmul.f32 %v4196, %v5119
    %v5156 = vmul.f32 %v4819, %v5120
    %v5157 = vmul.f32 %v4198, %v5119
    %v5158 = vmul.f32 %v4821, %v5120
    %v5159 = vmul.f32 %v4201, %v5119
    %v5160 = vmul.f32 %v4824, %v5120
    %v5161 = vmul.f32 %v4203, %v5119
    %v5162 = vmul.f32 %v4826, %v5120
    %v5163 = vmul.f32 %v4206, %v5119
    %v5164 = vmul.f32 %v4829, %v5120
    %v5165 = vmul.f32 %v4208, %v5119
    %v5166 = vmul.f32 %v4831, %v5120
    %v5167 = vmul.f32 %v4211, %v5119
    %v5168 = vmul.f32 %v4834, %v5120
    %v5169 = vmul.f32 %v4213, %v5119
    %v5170 = vmul.f32 %v4836, %v5120
    %v5171 = vmul.f32 %v4216, %v5119
    %v5172 = vmul.f32 %v4839, %v5120
    %v5173 = vmul.f32 %v4218, %v5119
    %v5174 = vmul.f32 %v4841, %v5120
    %v5175 = vmul.f32 %v4221, %v5119
    %v5176 = vmul.f32 %v4844, %v5120
    %v5177 = vmul.f32 %v4223, %v5119
    %v5178 = vmul.f32 %v4846, %v5120
    %v5179 = vmul.f32 %v4226, %v5119
    %v5180 = vmul.f32 %v4849, %v5120
    %v5181 = vmul.f32 %v4228, %v5119
    %v5182 = vmul.f32 %v4851, %v5120
    %v5183 = vmul.f32 %v4231, %v5119
    %v5184 = vmul.f32 %v4854, %v5120
    %v5185 = vmul.f32 %v4233, %v5119
    %v5186 = vmul.f32 %v4856, %v5120
    %v5187 = vmul.f32 %v4236, %v5119
    %v5188 = vmul.f32 %v4859, %v5120
    %v5189 = vmul.f32 %v4238, %v5119
    %v5190 = vmul.f32 %v4861, %v5120
    %v5191 = vmul.f32 %v4241, %v5119
    %v5192 = vmul.f32 %v4864, %v5120
    %v5193 = vmul.f32 %v4243, %v5119
    %v5194 = vmul.f32 %v4866, %v5120
    %v5196 = vperm.slane %v5130, 0
    %v5197 = vperm.slane %v5130, 1
    %v5200 = vadd.f32 %v5131, %v5196
    %v5201 = vadd.f32 %v5132, %v5197
    %v5202 = vadd.f32 %v5133, %v5196
    %v5203 = vadd.f32 %v5134, %v5197
    %v5204 = vadd.f32 %v5135, %v5196
    %v5205 = vadd.f32 %v5136, %v5197
    %v5206 = vadd.f32 %v5137, %v5196
    %v5207 = vadd.f32 %v5138, %v5197
    %v5208 = vadd.f32 %v5139, %v5196
    %v5209 = vadd.f32 %v5140, %v5197
    %v5210 = vadd.f32 %v5141, %v5196
    %v5211 = vadd.f32 %v5142, %v5197
    %v5212 = vadd.f32 %v5143, %v5196
    %v5213 = vadd.f32 %v5144, %v5197
    %v5214 = vadd.f32 %v5145, %v5196
    %v5215 = vadd.f32 %v5146, %v5197
    %v5216 = vadd.f32 %v5147, %v5196
    %v5217 = vadd.f32 %v5148, %v5197
    %v5218 = vadd.f32 %v5149, %v5196
    %v5219 = vadd.f32 %v5150, %v5197
    %v5220 = vadd.f32 %v5151, %v5196
    %v5221 = vadd.f32 %v5152, %v5197
    %v5222 = vadd.f32 %v5153, %v5196
    %v5223 = vadd.f32 %v5154, %v5197
    %v5224 = vadd.f32 %v5155, %v5196
    %v5225 = vadd.f32 %v5156, %v5197
    %v5226 = vadd.f32 %v5157, %v5196
    %v5227 = vadd.f32 %v5158, %v5197
    %v5228 = vadd.f32 %v5159, %v5196
    %v5229 = vadd.f32 %v5160, %v5197
    %v5230 = vadd.f32 %v5161, %v5196
    %v5231 = vadd.f32 %v5162, %v5197
    %v5232 = vadd.f32 %v5163, %v5196
    %v5233 = vadd.f32 %v5164, %v5197
    %v5234 = vadd.f32 %v5165, %v5196
    %v5235 = vadd.f32 %v5166, %v5197
    %v5236 = vadd.f32 %v5167, %v5196
    %v5237 = vadd.f32 %v5168, %v5197
    %v5238 = vadd.f32 %v5169, %v5196
    %v5239 = vadd.f32 %v5170, %v5197
    %v5240 = vadd.f32 %v5171, %v5196
    %v5241 = vadd.f32 %v5172, %v5197
    %v5242 = vadd.f32 %v5173, %v5196
    %v5243 = vadd.f32 %v5174, %v5197
    %v5244 = vadd.f32 %v5175, %v5196
    %v5245 = vadd.f32 %v5176, %v5197
    %v5246 = vadd.f32 %v5177, %v5196
    %v5247 = vadd.f32 %v5178, %v5197
    %v5248 = vadd.f32 %v5179, %v5196
    %v5249 = vadd.f32 %v5180, %v5197
    %v5250 = vadd.f32 %v5181, %v5196
    %v5251 = vadd.f32 %v5182, %v5197
    %v5252 = vadd.f32 %v5183, %v5196
    %v5253 = vadd.f32 %v5184, %v5197
    %v5254 = vadd.f32 %v5185, %v5196
    %v5255 = vadd.f32 %v5186, %v5197
    %v5256 = vadd.f32 %v5187, %v5196
    %v5257 = vadd.f32 %v5188, %v5197
    %v5258 = vadd.f32 %v5189, %v5196
    %v5259 = vadd.f32 %v5190, %v5197
    %v5260 = vadd.f32 %v5191, %v5196
    %v5261 = vadd.f32 %v5192, %v5197
    %v5262 = vadd.f32 %v5193, %v5196
    %v5263 = vadd.f32 %v5194, %v5197
    %vm5264 = vcmp.ge.f32.partialorder %v5200, 0.0
    %vm5265 = vcmp.ge.f32.partialorder %v5201, 0.0
    %vm5266 = vcmp.ge.f32.partialorder %v5202, 0.0
    %vm5267 = vcmp.ge.f32.partialorder %v5203, 0.0
    %vm5268 = vcmp.ge.f32.partialorder %v5204, 0.0
    %vm5269 = vcmp.ge.f32.partialorder %v5205, 0.0
    %vm5270 = vcmp.ge.f32.partialorder %v5206, 0.0
    %vm5271 = vcmp.ge.f32.partialorder %v5207, 0.0
    %vm5272 = vcmp.ge.f32.partialorder %v5208, 0.0
    %vm5273 = vcmp.ge.f32.partialorder %v5209, 0.0
    %vm5274 = vcmp.ge.f32.partialorder %v5210, 0.0
    %vm5275 = vcmp.ge.f32.partialorder %v5211, 0.0
    %vm5276 = vcmp.ge.f32.partialorder %v5212, 0.0
    %vm5277 = vcmp.ge.f32.partialorder %v5213, 0.0
    %vm5278 = vcmp.ge.f32.partialorder %v5214, 0.0
    %vm5279 = vcmp.ge.f32.partialorder %v5215, 0.0
    %vm5280 = vcmp.ge.f32.partialorder %v5216, 0.0
    %vm5281 = vcmp.ge.f32.partialorder %v5217, 0.0
    %vm5282 = vcmp.ge.f32.partialorder %v5218, 0.0
    %vm5283 = vcmp.ge.f32.partialorder %v5219, 0.0
    %vm5284 = vcmp.ge.f32.partialorder %v5220, 0.0
    %vm5285 = vcmp.ge.f32.partialorder %v5221, 0.0
    %vm5286 = vcmp.ge.f32.partialorder %v5222, 0.0
    %vm5287 = vcmp.ge.f32.partialorder %v5223, 0.0
    %vm5288 = vcmp.ge.f32.partialorder %v5224, 0.0
    %vm5289 = vcmp.ge.f32.partialorder %v5225, 0.0
    %vm5290 = vcmp.ge.f32.partialorder %v5226, 0.0
    %vm5291 = vcmp.ge.f32.partialorder %v5227, 0.0
    %vm5292 = vcmp.ge.f32.partialorder %v5228, 0.0
    %vm5293 = vcmp.ge.f32.partialorder %v5229, 0.0
    %vm5294 = vcmp.ge.f32.partialorder %v5230, 0.0
    %vm5295 = vcmp.ge.f32.partialorder %v5231, 0.0
    %vm5296 = vcmp.ge.f32.partialorder %v5232, 0.0
    %vm5297 = vcmp.ge.f32.partialorder %v5233, 0.0
    %vm5298 = vcmp.ge.f32.partialorder %v5234, 0.0
    %vm5299 = vcmp.ge.f32.partialorder %v5235, 0.0
    %vm5300 = vcmp.ge.f32.partialorder %v5236, 0.0
    %vm5301 = vcmp.ge.f32.partialorder %v5237, 0.0
    %vm5302 = vcmp.ge.f32.partialorder %v5238, 0.0
    %vm5303 = vcmp.ge.f32.partialorder %v5239, 0.0
    %vm5304 = vcmp.ge.f32.partialorder %v5240, 0.0
    %vm5305 = vcmp.ge.f32.partialorder %v5241, 0.0
    %vm5306 = vcmp.ge.f32.partialorder %v5242, 0.0
    %vm5307 = vcmp.ge.f32.partialorder %v5243, 0.0
    %vm5308 = vcmp.ge.f32.partialorder %v5244, 0.0
    %vm5309 = vcmp.ge.f32.partialorder %v5245, 0.0
    %vm5310 = vcmp.ge.f32.partialorder %v5246, 0.0
    %vm5311 = vcmp.ge.f32.partialorder %v5247, 0.0
    %vm5312 = vcmp.ge.f32.partialorder %v5248, 0.0
    %vm5313 = vcmp.ge.f32.partialorder %v5249, 0.0
    %vm5314 = vcmp.ge.f32.partialorder %v5250, 0.0
    %vm5315 = vcmp.ge.f32.partialorder %v5251, 0.0
    %vm5316 = vcmp.ge.f32.partialorder %v5252, 0.0
    %vm5317 = vcmp.ge.f32.partialorder %v5253, 0.0
    %vm5318 = vcmp.ge.f32.partialorder %v5254, 0.0
    %vm5319 = vcmp.ge.f32.partialorder %v5255, 0.0
    %vm5320 = vcmp.ge.f32.partialorder %v5256, 0.0
    %vm5321 = vcmp.ge.f32.partialorder %v5257, 0.0
    %vm5322 = vcmp.ge.f32.partialorder %v5258, 0.0
    %vm5323 = vcmp.ge.f32.partialorder %v5259, 0.0
    %vm5324 = vcmp.ge.f32.partialorder %v5260, 0.0
    %vm5325 = vcmp.ge.f32.partialorder %v5261, 0.0
    %vm5326 = vcmp.ge.f32.partialorder %v5262, 0.0
    %vm5327 = vcmp.ge.f32.partialorder %v5263, 0.0
    %v5328 = vsel %vm5264, 1.0, -1.0
    %v5329 = vsel %vm5265, 1.0, -1.0
    %v5330 = vsel %vm5266, 1.0, -1.0
    %v5331 = vsel %vm5267, 1.0, -1.0
    %v5332 = vsel %vm5268, 1.0, -1.0
    %v5333 = vsel %vm5269, 1.0, -1.0
    %v5334 = vsel %vm5270, 1.0, -1.0
    %v5335 = vsel %vm5271, 1.0, -1.0
    %v5336 = vsel %vm5272, 1.0, -1.0
    %v5337 = vsel %vm5273, 1.0, -1.0
    %v5338 = vsel %vm5274, 1.0, -1.0
    %v5339 = vsel %vm5275, 1.0, -1.0
    %v5340 = vsel %vm5276, 1.0, -1.0
    %v5341 = vsel %vm5277, 1.0, -1.0
    %v5342 = vsel %vm5278, 1.0, -1.0
    %v5343 = vsel %vm5279, 1.0, -1.0
    %v5344 = vsel %vm5280, 1.0, -1.0
    %v5345 = vsel %vm5281, 1.0, -1.0
    %v5346 = vsel %vm5282, 1.0, -1.0
    %v5347 = vsel %vm5283, 1.0, -1.0
    %v5348 = vsel %vm5284, 1.0, -1.0
    %v5349 = vsel %vm5285, 1.0, -1.0
    %v5350 = vsel %vm5286, 1.0, -1.0
    %v5351 = vsel %vm5287, 1.0, -1.0
    %v5352 = vsel %vm5288, 1.0, -1.0
    %v5353 = vsel %vm5289, 1.0, -1.0
    %v5354 = vsel %vm5290, 1.0, -1.0
    %v5355 = vsel %vm5291, 1.0, -1.0
    %v5356 = vsel %vm5292, 1.0, -1.0
    %v5357 = vsel %vm5293, 1.0, -1.0
    %v5358 = vsel %vm5294, 1.0, -1.0
    %v5359 = vsel %vm5295, 1.0, -1.0
    %v5360 = vsel %vm5296, 1.0, -1.0
    %v5361 = vsel %vm5297, 1.0, -1.0
    %v5362 = vsel %vm5298, 1.0, -1.0
    %v5363 = vsel %vm5299, 1.0, -1.0
    %v5364 = vsel %vm5300, 1.0, -1.0
    %v5365 = vsel %vm5301, 1.0, -1.0
    %v5366 = vsel %vm5302, 1.0, -1.0
    %v5367 = vsel %vm5303, 1.0, -1.0
    %v5368 = vsel %vm5304, 1.0, -1.0
    %v5369 = vsel %vm5305, 1.0, -1.0
    %v5370 = vsel %vm5306, 1.0, -1.0
    %v5371 = vsel %vm5307, 1.0, -1.0
    %v5372 = vsel %vm5308, 1.0, -1.0
    %v5373 = vsel %vm5309, 1.0, -1.0
    %v5374 = vsel %vm5310, 1.0, -1.0
    %v5375 = vsel %vm5311, 1.0, -1.0
    %v5376 = vsel %vm5312, 1.0, -1.0
    %v5377 = vsel %vm5313, 1.0, -1.0
    %v5378 = vsel %vm5314, 1.0, -1.0
    %v5379 = vsel %vm5315, 1.0, -1.0
    %v5380 = vsel %vm5316, 1.0, -1.0
    %v5381 = vsel %vm5317, 1.0, -1.0
    %v5382 = vsel %vm5318, 1.0, -1.0
    %v5383 = vsel %vm5319, 1.0, -1.0
    %v5384 = vsel %vm5320, 1.0, -1.0
    %v5385 = vsel %vm5321, 1.0, -1.0
    %v5386 = vsel %vm5322, 1.0, -1.0
    %v5387 = vsel %vm5323, 1.0, -1.0
    %v5388 = vsel %vm5324, 1.0, -1.0
    %v5389 = vsel %vm5325, 1.0, -1.0
    %v5390 = vsel %vm5326, 1.0, -1.0
    %v5391 = vsel %vm5327, 1.0, -1.0
    %v5392 = vpack.c.bf16 %v5329, %v5328
    %v5393 = vpack.c.bf16 %v5331, %v5330
    %v5394 = vpack.c.bf16 %v5333, %v5332
    %v5395 = vpack.c.bf16 %v5335, %v5334
    %v5396 = vpack.c.bf16 %v5337, %v5336
    %v5397 = vpack.c.bf16 %v5339, %v5338
    %v5398 = vpack.c.bf16 %v5341, %v5340
    %v5399 = vpack.c.bf16 %v5343, %v5342
    %v5400 = vpack.c.bf16 %v5345, %v5344
    %v5401 = vpack.c.bf16 %v5347, %v5346
    %v5402 = vpack.c.bf16 %v5349, %v5348
    %v5403 = vpack.c.bf16 %v5351, %v5350
    %v5404 = vpack.c.bf16 %v5353, %v5352
    %v5405 = vpack.c.bf16 %v5355, %v5354
    %v5406 = vpack.c.bf16 %v5357, %v5356
    %v5407 = vpack.c.bf16 %v5359, %v5358
    %v5408 = vpack.c.bf16 %v5361, %v5360
    %v5409 = vpack.c.bf16 %v5363, %v5362
    %v5410 = vpack.c.bf16 %v5365, %v5364
    %v5411 = vpack.c.bf16 %v5367, %v5366
    %v5412 = vpack.c.bf16 %v5369, %v5368
    %v5413 = vpack.c.bf16 %v5371, %v5370
    %v5414 = vpack.c.bf16 %v5373, %v5372
    %v5415 = vpack.c.bf16 %v5375, %v5374
    %v5416 = vpack.c.bf16 %v5377, %v5376
    %v5417 = vpack.c.bf16 %v5379, %v5378
    %v5418 = vpack.c.bf16 %v5381, %v5380
    %v5419 = vpack.c.bf16 %v5383, %v5382
    %v5420 = vpack.c.bf16 %v5385, %v5384
    %v5421 = vpack.c.bf16 %v5387, %v5386
    %v5422 = vpack.c.bf16 %v5389, %v5388
    %v5423 = vpack.c.bf16 %v5391, %v5390
    %5424 = vst [vmem:[#allocation6] sm:$0xff] %v5392
    %5425 = vst [vmem:[#allocation6 + $0x8] sm:$0xff] %v5393
    %5426 = vst [vmem:[#allocation6 + $0x10] sm:$0xff] %v5394
    %5427 = vst [vmem:[#allocation6 + $0x18] sm:$0xff] %v5395
    %5428 = vst [vmem:[#allocation6 + $0x20] sm:$0xff] %v5396
    %5429 = vst [vmem:[#allocation6 + $0x28] sm:$0xff] %v5397
    %5430 = vst [vmem:[#allocation6 + $0x30] sm:$0xff] %v5398
    %5431 = vst [vmem:[#allocation6 + $0x38] sm:$0xff] %v5399
    %5432 = vst [vmem:[#allocation6 + $0x40] sm:$0xff] %v5400
    %5433 = vst [vmem:[#allocation6 + $0x48] sm:$0xff] %v5401
    %5434 = vst [vmem:[#allocation6 + $0x50] sm:$0xff] %v5402
    %5435 = vst [vmem:[#allocation6 + $0x58] sm:$0xff] %v5403
    %5436 = vst [vmem:[#allocation6 + $0x60] sm:$0xff] %v5404
    %5437 = vst [vmem:[#allocation6 + $0x68] sm:$0xff] %v5405
    %5438 = vst [vmem:[#allocation6 + $0x70] sm:$0xff] %v5406
    %5439 = vst [vmem:[#allocation6 + $0x78] sm:$0xff] %v5407
    %5440 = vst [vmem:[#allocation6 + $0x80] sm:$0xff] %v5408
    %5441 = vst [vmem:[#allocation6 + $0x88] sm:$0xff] %v5409
    %5442 = vst [vmem:[#allocation6 + $0x90] sm:$0xff] %v5410
    %5443 = vst [vmem:[#allocation6 + $0x98] sm:$0xff] %v5411
    %5444 = vst [vmem:[#allocation6 + $0xa0] sm:$0xff] %v5412
    %5445 = vst [vmem:[#allocation6 + $0xa8] sm:$0xff] %v5413
    %5446 = vst [vmem:[#allocation6 + $0xb0] sm:$0xff] %v5414
    %5447 = vst [vmem:[#allocation6 + $0xb8] sm:$0xff] %v5415
    %5448 = vst [vmem:[#allocation6 + $0xc0] sm:$0xff] %v5416
    %5449 = vst [vmem:[#allocation6 + $0xc8] sm:$0xff] %v5417
    %5450 = vst [vmem:[#allocation6 + $0xd0] sm:$0xff] %v5418
    %5451 = vst [vmem:[#allocation6 + $0xd8] sm:$0xff] %v5419
    %5452 = vst [vmem:[#allocation6 + $0xe0] sm:$0xff] %v5420
    %5453 = vst [vmem:[#allocation6 + $0xe8] sm:$0xff] %v5421
    %5454 = vst [vmem:[#allocation6 + $0xf0] sm:$0xff] %v5422
    %5455 = vst [vmem:[#allocation6 + $0xf8] sm:$0xff] %v5423
    %v5456 = vld [vmem:[%s7] sm:$0xf]
    %v5457 = vld [vmem:[%s7 + $0x4] sm:$0xf]
    %v5458 = vld [vmem:[%s7 + $0x8] sm:$0xf]
    %v5459 = vld [vmem:[%s7 + $0xc] sm:$0xf]
    %v5460 = vld [vmem:[%s7 + $0x10] sm:$0xf]
    %v5461 = vld [vmem:[%s7 + $0x14] sm:$0xf]
    %v5462 = vld [vmem:[%s7 + $0x18] sm:$0xf]
    %v5463 = vld [vmem:[%s7 + $0x1c] sm:$0xf]
    %v5464 = vld [vmem:[%s7 + $0x20] sm:$0xf]
    %v5465 = vld [vmem:[%s7 + $0x24] sm:$0xf]
    %v5466 = vld [vmem:[%s7 + $0x28] sm:$0xf]
    %v5467 = vld [vmem:[%s7 + $0x2c] sm:$0xf]
    %v5468 = vld [vmem:[%s7 + $0x30] sm:$0xf]
    %v5469 = vld [vmem:[%s7 + $0x34] sm:$0xf]
    %v5470 = vld [vmem:[%s7 + $0x38] sm:$0xf]
    %v5471 = vld [vmem:[%s7 + $0x3c] sm:$0xf]
    %v5472 = vld [vmem:[%s7 + $0x40] sm:$0xf]
    %v5473 = vld [vmem:[%s7 + $0x44] sm:$0xf]
    %v5474 = vld [vmem:[%s7 + $0x48] sm:$0xf]
    %v5475 = vld [vmem:[%s7 + $0x4c] sm:$0xf]
    %v5476 = vld [vmem:[%s7 + $0x50] sm:$0xf]
    %v5477 = vld [vmem:[%s7 + $0x54] sm:$0xf]
    %v5478 = vld [vmem:[%s7 + $0x58] sm:$0xf]
    %v5479 = vld [vmem:[%s7 + $0x5c] sm:$0xf]
    %v5480 = vld [vmem:[%s7 + $0x60] sm:$0xf]
    %v5481 = vld [vmem:[%s7 + $0x64] sm:$0xf]
    %v5482 = vld [vmem:[%s7 + $0x68] sm:$0xf]
    %v5483 = vld [vmem:[%s7 + $0x6c] sm:$0xf]
    %v5484 = vld [vmem:[%s7 + $0x70] sm:$0xf]
    %v5485 = vld [vmem:[%s7 + $0x74] sm:$0xf]
    %v5486 = vld [vmem:[%s7 + $0x78] sm:$0xf]
    %v5487 = vld [vmem:[%s7 + $0x7c] sm:$0xf]
    %v5488 = vld [vmem:[%s8] sm:$0x1]
    %v5490 = vperm.slane %v5488, 0
    %v5524 = vunpack.c.l.b16 %v5392
    %v5525 = vunpack.c.h.b16 %v5392
    %v5526 = vunpack.c.l.b16 %v5393
    %v5527 = vunpack.c.h.b16 %v5393
    %v5528 = vunpack.c.l.b16 %v5394
    %v5529 = vunpack.c.h.b16 %v5394
    %v5530 = vunpack.c.l.b16 %v5395
    %v5531 = vunpack.c.h.b16 %v5395
    %v5532 = vunpack.c.l.b16 %v5396
    %v5533 = vunpack.c.h.b16 %v5396
    %v5534 = vunpack.c.l.b16 %v5397
    %v5535 = vunpack.c.h.b16 %v5397
    %v5536 = vunpack.c.l.b16 %v5398
    %v5537 = vunpack.c.h.b16 %v5398
    %v5538 = vunpack.c.l.b16 %v5399
    %v5539 = vunpack.c.h.b16 %v5399
    %v5540 = vunpack.c.l.b16 %v5400
    %v5541 = vunpack.c.h.b16 %v5400
    %v5542 = vunpack.c.l.b16 %v5401
    %v5543 = vunpack.c.h.b16 %v5401
    %v5544 = vunpack.c.l.b16 %v5402
    %v5545 = vunpack.c.h.b16 %v5402
    %v5546 = vunpack.c.l.b16 %v5403
    %v5547 = vunpack.c.h.b16 %v5403
    %v5548 = vunpack.c.l.b16 %v5404
    %v5549 = vunpack.c.h.b16 %v5404
    %v5550 = vunpack.c.l.b16 %v5405
    %v5551 = vunpack.c.h.b16 %v5405
    %v5552 = vunpack.c.l.b16 %v5406
    %v5553 = vunpack.c.h.b16 %v5406
    %v5554 = vunpack.c.l.b16 %v5407
    %v5555 = vunpack.c.h.b16 %v5407
    %v5556 = vunpack.c.l.b16 %v5408
    %v5557 = vunpack.c.h.b16 %v5408
    %v5558 = vunpack.c.l.b16 %v5409
    %v5559 = vunpack.c.h.b16 %v5409
    %v5560 = vunpack.c.l.b16 %v5410
    %v5561 = vunpack.c.h.b16 %v5410
    %v5562 = vunpack.c.l.b16 %v5411
    %v5563 = vunpack.c.h.b16 %v5411
    %v5564 = vunpack.c.l.b16 %v5412
    %v5565 = vunpack.c.h.b16 %v5412
    %v5566 = vunpack.c.l.b16 %v5413
    %v5567 = vunpack.c.h.b16 %v5413
    %v5568 = vunpack.c.l.b16 %v5414
    %v5569 = vunpack.c.h.b16 %v5414
    %v5570 = vunpack.c.l.b16 %v5415
    %v5571 = vunpack.c.h.b16 %v5415
    %v5572 = vunpack.c.l.b16 %v5416
    %v5573 = vunpack.c.h.b16 %v5416
    %v5574 = vunpack.c.l.b16 %v5417
    %v5575 = vunpack.c.h.b16 %v5417
    %v5576 = vunpack.c.l.b16 %v5418
    %v5577 = vunpack.c.h.b16 %v5418
    %v5578 = vunpack.c.l.b16 %v5419
    %v5579 = vunpack.c.h.b16 %v5419
    %v5580 = vunpack.c.l.b16 %v5420
    %v5581 = vunpack.c.h.b16 %v5420
    %v5582 = vunpack.c.l.b16 %v5421
    %v5583 = vunpack.c.h.b16 %v5421
    %v5584 = vunpack.c.l.b16 %v5422
    %v5585 = vunpack.c.h.b16 %v5422
    %v5586 = vunpack.c.l.b16 %v5423
    %v5587 = vunpack.c.h.b16 %v5423
    %v5588 = vpack.c.b16 %v5526, %v5524
    %v5589 = vpack.c.b16 %v5527, %v5525
    %v5590 = vpack.c.b16 %v5530, %v5528
    %v5591 = vpack.c.b16 %v5531, %v5529
    %v5592 = vpack.c.b16 %v5534, %v5532
    %v5593 = vpack.c.b16 %v5535, %v5533
    %v5594 = vpack.c.b16 %v5538, %v5536
    %v5595 = vpack.c.b16 %v5539, %v5537
    %v5596 = vpack.c.b16 %v5542, %v5540
    %v5597 = vpack.c.b16 %v5543, %v5541
    %v5598 = vpack.c.b16 %v5546, %v5544
    %v5599 = vpack.c.b16 %v5547, %v5545
    %v5600 = vpack.c.b16 %v5550, %v5548
    %v5601 = vpack.c.b16 %v5551, %v5549
    %v5602 = vpack.c.b16 %v5554, %v5552
    %v5603 = vpack.c.b16 %v5555, %v5553
    %v5604 = vpack.c.b16 %v5558, %v5556
    %v5605 = vpack.c.b16 %v5559, %v5557
    %v5606 = vpack.c.b16 %v5562, %v5560
    %v5607 = vpack.c.b16 %v5563, %v5561
    %v5608 = vpack.c.b16 %v5566, %v5564
    %v5609 = vpack.c.b16 %v5567, %v5565
    %v5610 = vpack.c.b16 %v5570, %v5568
    %v5611 = vpack.c.b16 %v5571, %v5569
    %v5612 = vpack.c.b16 %v5574, %v5572
    %v5613 = vpack.c.b16 %v5575, %v5573
    %v5614 = vpack.c.b16 %v5578, %v5576
    %v5615 = vpack.c.b16 %v5579, %v5577
    %v5616 = vpack.c.b16 %v5582, %v5580
    %v5617 = vpack.c.b16 %v5583, %v5581
    %v5618 = vpack.c.b16 %v5586, %v5584
    %v5619 = vpack.c.b16 %v5587, %v5585
    %v5684 = vunpack.c.l.b16 %v5456
    %v5685 = vunpack.c.l.b16 %v5457
    %v5686 = vunpack.c.l.b16 %v5458
    %v5687 = vunpack.c.l.b16 %v5459
    %v5688 = vunpack.c.l.b16 %v5460
    %v5689 = vunpack.c.l.b16 %v5461
    %v5690 = vunpack.c.l.b16 %v5462
    %v5691 = vunpack.c.l.b16 %v5463
    %v5692 = vunpack.c.l.b16 %v5464
    %v5693 = vunpack.c.l.b16 %v5465
    %v5694 = vunpack.c.l.b16 %v5466
    %v5695 = vunpack.c.l.b16 %v5467
    %v5696 = vunpack.c.l.b16 %v5468
    %v5697 = vunpack.c.l.b16 %v5469
    %v5698 = vunpack.c.l.b16 %v5470
    %v5699 = vunpack.c.l.b16 %v5471
    %v5700 = vunpack.c.l.b16 %v5472
    %v5701 = vunpack.c.l.b16 %v5473
    %v5702 = vunpack.c.l.b16 %v5474
    %v5703 = vunpack.c.l.b16 %v5475
    %v5704 = vunpack.c.l.b16 %v5476
    %v5705 = vunpack.c.l.b16 %v5477
    %v5706 = vunpack.c.l.b16 %v5478
    %v5707 = vunpack.c.l.b16 %v5479
    %v5708 = vunpack.c.l.b16 %v5480
    %v5709 = vunpack.c.l.b16 %v5481
    %v5710 = vunpack.c.l.b16 %v5482
    %v5711 = vunpack.c.l.b16 %v5483
    %v5712 = vunpack.c.l.b16 %v5484
    %v5713 = vunpack.c.l.b16 %v5485
    %v5714 = vunpack.c.l.b16 %v5486
    %v5715 = vunpack.c.l.b16 %v5487
    %v5716 = vpack.c.b16 %v5685, %v5684
    %v5717 = vpack.c.b16 %v5687, %v5686
    %v5718 = vpack.c.b16 %v5689, %v5688
    %v5719 = vpack.c.b16 %v5691, %v5690
    %v5720 = vpack.c.b16 %v5693, %v5692
    %v5721 = vpack.c.b16 %v5695, %v5694
    %v5722 = vpack.c.b16 %v5697, %v5696
    %v5723 = vpack.c.b16 %v5699, %v5698
    %v5724 = vpack.c.b16 %v5701, %v5700
    %v5725 = vpack.c.b16 %v5703, %v5702
    %v5726 = vpack.c.b16 %v5705, %v5704
    %v5727 = vpack.c.b16 %v5707, %v5706
    %v5728 = vpack.c.b16 %v5709, %v5708
    %v5729 = vpack.c.b16 %v5711, %v5710
    %v5730 = vpack.c.b16 %v5713, %v5712
    %v5731 = vpack.c.b16 %v5715, %v5714
    %5748 = vmatpush.bf16.msra.mxu0 %v5723
    %5749 = vmatpush.bf16.msra.mxu0 %v5722
    %5750 = vmatpush.bf16.msra.mxu0 %v5721
    %5751 = vmatpush.bf16.msra.mxu0 %v5720
    %5752 = vmatpush.bf16.msra.mxu0 %v5719
    %5753 = vmatpush.bf16.msra.mxu0 %v5718
    %5754 = vmatpush.bf16.msra.mxu0 %v5717
    %5755 = vmatpush.bf16.msra.mxu0 %v5716
    %5756 = vmatmul.bf16.gmra.mxu0 %v5588
    %v5757 = vpop.f32.mrf.mxu0
    %v5758 = vadd.f32 %v5490, %v5757
    %v5759 = vpop.f32.mrf.mxu0
    %v5760 = vadd.f32 %v5490, %v5759
    %5761 = vmatmul.bf16.gmra.mxu0 %v5590
    %v5762 = vpop.f32.mrf.mxu0
    %v5763 = vadd.f32 %v5490, %v5762
    %v5764 = vpop.f32.mrf.mxu0
    %v5765 = vadd.f32 %v5490, %v5764
    %5766 = vmatmul.bf16.gmra.mxu0 %v5592
    %v5767 = vpop.f32.mrf.mxu0
    %v5768 = vadd.f32 %v5490, %v5767
    %v5769 = vpop.f32.mrf.mxu0
    %v5770 = vadd.f32 %v5490, %v5769
    %5771 = vmatmul.bf16.gmra.mxu0 %v5594
    %v5772 = vpop.f32.mrf.mxu0
    %v5773 = vadd.f32 %v5490, %v5772
    %v5774 = vpop.f32.mrf.mxu0
    %v5775 = vadd.f32 %v5490, %v5774
    %5776 = vmatmul.bf16.gmra.mxu0 %v5596
    %v5777 = vpop.f32.mrf.mxu0
    %v5778 = vadd.f32 %v5490, %v5777
    %v5779 = vpop.f32.mrf.mxu0
    %v5780 = vadd.f32 %v5490, %v5779
    %5781 = vmatmul.bf16.gmra.mxu0 %v5598
    %v5782 = vpop.f32.mrf.mxu0
    %v5783 = vadd.f32 %v5490, %v5782
    %v5784 = vpop.f32.mrf.mxu0
    %v5785 = vadd.f32 %v5490, %v5784
    %5786 = vmatmul.bf16.gmra.mxu0 %v5600
    %v5787 = vpop.f32.mrf.mxu0
    %v5788 = vadd.f32 %v5490, %v5787
    %v5789 = vpop.f32.mrf.mxu0
    %v5790 = vadd.f32 %v5490, %v5789
    %5791 = vmatmul.bf16.gmra.mxu0 %v5602
    %v5792 = vpop.f32.mrf.mxu0
    %v5793 = vadd.f32 %v5490, %v5792
    %v5794 = vpop.f32.mrf.mxu0
    %v5795 = vadd.f32 %v5490, %v5794
    %5796 = vmatmul.bf16.gmra.mxu0 %v5604
    %v5797 = vpop.f32.mrf.mxu0
    %v5798 = vadd.f32 %v5490, %v5797
    %v5799 = vpop.f32.mrf.mxu0
    %v5800 = vadd.f32 %v5490, %v5799
    %5801 = vmatmul.bf16.gmra.mxu0 %v5606
    %v5802 = vpop.f32.mrf.mxu0
    %v5803 = vadd.f32 %v5490, %v5802
    %v5804 = vpop.f32.mrf.mxu0
    %v5805 = vadd.f32 %v5490, %v5804
    %5806 = vmatmul.bf16.gmra.mxu0 %v5608
    %v5807 = vpop.f32.mrf.mxu0
    %v5808 = vadd.f32 %v5490, %v5807
    %v5809 = vpop.f32.mrf.mxu0
    %v5810 = vadd.f32 %v5490, %v5809
    %5811 = vmatmul.bf16.gmra.mxu0 %v5610
    %v5812 = vpop.f32.mrf.mxu0
    %v5813 = vadd.f32 %v5490, %v5812
    %v5814 = vpop.f32.mrf.mxu0
    %v5815 = vadd.f32 %v5490, %v5814
    %5816 = vmatmul.bf16.gmra.mxu0 %v5612
    %v5817 = vpop.f32.mrf.mxu0
    %v5818 = vadd.f32 %v5490, %v5817
    %v5819 = vpop.f32.mrf.mxu0
    %v5820 = vadd.f32 %v5490, %v5819
    %5821 = vmatmul.bf16.gmra.mxu0 %v5614
    %v5822 = vpop.f32.mrf.mxu0
    %v5823 = vadd.f32 %v5490, %v5822
    %v5824 = vpop.f32.mrf.mxu0
    %v5825 = vadd.f32 %v5490, %v5824
    %5826 = vmatmul.bf16.gmra.mxu0 %v5616
    %v5827 = vpop.f32.mrf.mxu0
    %v5828 = vadd.f32 %v5490, %v5827
    %v5829 = vpop.f32.mrf.mxu0
    %v5830 = vadd.f32 %v5490, %v5829
    %5831 = vmatmul.bf16.gmra.mxu0 %v5618
    %v5832 = vpop.f32.mrf.mxu0
    %v5833 = vadd.f32 %v5490, %v5832
    %v5834 = vpop.f32.mrf.mxu0
    %v5835 = vadd.f32 %v5490, %v5834
    %5836 = vdwg.mxu0
    %5837 = vmatpush.bf16.msra.mxu0 %v5731
    %5838 = vmatpush.bf16.msra.mxu0 %v5730
    %5839 = vmatpush.bf16.msra.mxu0 %v5729
    %5840 = vmatpush.bf16.msra.mxu0 %v5728
    %5841 = vmatpush.bf16.msra.mxu0 %v5727
    %5842 = vmatpush.bf16.msra.mxu0 %v5726
    %5843 = vmatpush.bf16.msra.mxu0 %v5725
    %5844 = vmatpush.bf16.msra.mxu0 %v5724
    %5845 = vmatmul.bf16.gmra.mxu0 %v5589
    %v5846 = vpop.f32.mrf.mxu0
    %v5847 = vadd.f32 %v5758, %v5846
    %v5848 = vpop.f32.mrf.mxu0
    %v5849 = vadd.f32 %v5760, %v5848
    %5850 = vmatmul.bf16.gmra.mxu0 %v5591
    %v5851 = vpop.f32.mrf.mxu0
    %v5852 = vadd.f32 %v5763, %v5851
    %v5853 = vpop.f32.mrf.mxu0
    %v5854 = vadd.f32 %v5765, %v5853
    %5855 = vmatmul.bf16.gmra.mxu0 %v5593
    %v5856 = vpop.f32.mrf.mxu0
    %v5857 = vadd.f32 %v5768, %v5856
    %v5858 = vpop.f32.mrf.mxu0
    %v5859 = vadd.f32 %v5770, %v5858
    %5860 = vmatmul.bf16.gmra.mxu0 %v5595
    %v5861 = vpop.f32.mrf.mxu0
    %v5862 = vadd.f32 %v5773, %v5861
    %v5863 = vpop.f32.mrf.mxu0
    %v5864 = vadd.f32 %v5775, %v5863
    %5865 = vmatmul.bf16.gmra.mxu0 %v5597
    %v5866 = vpop.f32.mrf.mxu0
    %v5867 = vadd.f32 %v5778, %v5866
    %v5868 = vpop.f32.mrf.mxu0
    %v5869 = vadd.f32 %v5780, %v5868
    %5870 = vmatmul.bf16.gmra.mxu0 %v5599
    %v5871 = vpop.f32.mrf.mxu0
    %v5872 = vadd.f32 %v5783, %v5871
    %v5873 = vpop.f32.mrf.mxu0
    %v5874 = vadd.f32 %v5785, %v5873
    %5875 = vmatmul.bf16.gmra.mxu0 %v5601
    %v5876 = vpop.f32.mrf.mxu0
    %v5877 = vadd.f32 %v5788, %v5876
    %v5878 = vpop.f32.mrf.mxu0
    %v5879 = vadd.f32 %v5790, %v5878
    %5880 = vmatmul.bf16.gmra.mxu0 %v5603
    %v5881 = vpop.f32.mrf.mxu0
    %v5882 = vadd.f32 %v5793, %v5881
    %v5883 = vpop.f32.mrf.mxu0
    %v5884 = vadd.f32 %v5795, %v5883
    %5885 = vmatmul.bf16.gmra.mxu0 %v5605
    %v5886 = vpop.f32.mrf.mxu0
    %v5887 = vadd.f32 %v5798, %v5886
    %v5888 = vpop.f32.mrf.mxu0
    %v5889 = vadd.f32 %v5800, %v5888
    %5890 = vmatmul.bf16.gmra.mxu0 %v5607
    %v5891 = vpop.f32.mrf.mxu0
    %v5892 = vadd.f32 %v5803, %v5891
    %v5893 = vpop.f32.mrf.mxu0
    %v5894 = vadd.f32 %v5805, %v5893
    %5895 = vmatmul.bf16.gmra.mxu0 %v5609
    %v5896 = vpop.f32.mrf.mxu0
    %v5897 = vadd.f32 %v5808, %v5896
    %v5898 = vpop.f32.mrf.mxu0
    %v5899 = vadd.f32 %v5810, %v5898
    %5900 = vmatmul.bf16.gmra.mxu0 %v5611
    %v5901 = vpop.f32.mrf.mxu0
    %v5902 = vadd.f32 %v5813, %v5901
    %v5903 = vpop.f32.mrf.mxu0
    %v5904 = vadd.f32 %v5815, %v5903
    %5905 = vmatmul.bf16.gmra.mxu0 %v5613
    %v5906 = vpop.f32.mrf.mxu0
    %v5907 = vadd.f32 %v5818, %v5906
    %v5908 = vpop.f32.mrf.mxu0
    %v5909 = vadd.f32 %v5820, %v5908
    %5910 = vmatmul.bf16.gmra.mxu0 %v5615
    %v5911 = vpop.f32.mrf.mxu0
    %v5912 = vadd.f32 %v5823, %v5911
    %v5913 = vpop.f32.mrf.mxu0
    %v5914 = vadd.f32 %v5825, %v5913
    %5915 = vmatmul.bf16.gmra.mxu0 %v5617
    %v5916 = vpop.f32.mrf.mxu0
    %v5917 = vadd.f32 %v5828, %v5916
    %v5918 = vpop.f32.mrf.mxu0
    %v5919 = vadd.f32 %v5830, %v5918
    %5920 = vmatmul.bf16.gmra.mxu0 %v5619
    %v5921 = vpop.f32.mrf.mxu0
    %v5922 = vadd.f32 %v5833, %v5921
    %v5923 = vpop.f32.mrf.mxu0
    %v5924 = vadd.f32 %v5835, %v5923
    %5925 = vdwg.mxu0
    %v5926 = vld [vmem:[%s9] sm:$0x1]
    %v5927 = vld [vmem:[%s10] sm:$0x1]
    %v5928 = vadd.f32 %v5847, %v5849
    %v5929 = vadd.f32 %v5928, %v5852
    %v5930 = vadd.f32 %v5929, %v5854
    %v5931 = vadd.f32 %v5930, %v5857
    %v5932 = vadd.f32 %v5931, %v5859
    %v5933 = vadd.f32 %v5932, %v5862
    %v5934 = vadd.f32 %v5933, %v5864
    %v5935 = vadd.f32 %v5934, %v5867
    %v5936 = vadd.f32 %v5935, %v5869
    %v5937 = vadd.f32 %v5936, %v5872
    %v5938 = vadd.f32 %v5937, %v5874
    %v5939 = vadd.f32 %v5938, %v5877
    %v5940 = vadd.f32 %v5939, %v5879
    %v5941 = vadd.f32 %v5940, %v5882
    %v5942 = vadd.f32 %v5941, %v5884
    %v5943 = vadd.f32 %v5942, %v5887
    %v5944 = vadd.f32 %v5943, %v5889
    %v5945 = vadd.f32 %v5944, %v5892
    %v5946 = vadd.f32 %v5945, %v5894
    %v5947 = vadd.f32 %v5946, %v5897
    %v5948 = vadd.f32 %v5947, %v5899
    %v5949 = vadd.f32 %v5948, %v5902
    %v5950 = vadd.f32 %v5949, %v5904
    %v5951 = vadd.f32 %v5950, %v5907
    %v5952 = vadd.f32 %v5951, %v5909
    %v5953 = vadd.f32 %v5952, %v5912
    %v5954 = vadd.f32 %v5953, %v5914
    %v5955 = vadd.f32 %v5954, %v5917
    %v5956 = vadd.f32 %v5955, %v5919
    %v5957 = vadd.f32 %v5956, %v5922
    %v5958 = vadd.f32 %v5957, %v5924
    %v5959 = vrot.slane %v5958, 4
    %v5960 = vadd.f32 %v5958, %v5959
    %v5961 = vrot.slane %v5960, 2
    %v5962 = vadd.f32 %v5960, %v5961
    %v5963 = vrot.slane %v5962, 1
    %v5964 = vadd.f32 %v5962, %v5963
    %v5965 = vmul.f32 %v5964, %v542
    %v5966 = vmul.f32 %v5847, %v5847
    %v5967 = vmul.f32 %v5849, %v5849
    %v5968 = vmul.f32 %v5852, %v5852
    %v5969 = vmul.f32 %v5854, %v5854
    %v5970 = vmul.f32 %v5857, %v5857
    %v5971 = vmul.f32 %v5859, %v5859
    %v5972 = vmul.f32 %v5862, %v5862
    %v5973 = vmul.f32 %v5864, %v5864
    %v5974 = vmul.f32 %v5867, %v5867
    %v5975 = vmul.f32 %v5869, %v5869
    %v5976 = vmul.f32 %v5872, %v5872
    %v5977 = vmul.f32 %v5874, %v5874
    %v5978 = vmul.f32 %v5877, %v5877
    %v5979 = vmul.f32 %v5879, %v5879
    %v5980 = vmul.f32 %v5882, %v5882
    %v5981 = vmul.f32 %v5884, %v5884
    %v5982 = vmul.f32 %v5887, %v5887
    %v5983 = vmul.f32 %v5889, %v5889
    %v5984 = vmul.f32 %v5892, %v5892
    %v5985 = vmul.f32 %v5894, %v5894
    %v5986 = vmul.f32 %v5897, %v5897
    %v5987 = vmul.f32 %v5899, %v5899
    %v5988 = vmul.f32 %v5902, %v5902
    %v5989 = vmul.f32 %v5904, %v5904
    %v5990 = vmul.f32 %v5907, %v5907
    %v5991 = vmul.f32 %v5909, %v5909
    %v5992 = vmul.f32 %v5912, %v5912
    %v5993 = vmul.f32 %v5914, %v5914
    %v5994 = vmul.f32 %v5917, %v5917
    %v5995 = vmul.f32 %v5919, %v5919
    %v5996 = vmul.f32 %v5922, %v5922
    %v5997 = vmul.f32 %v5924, %v5924
    %v5998 = vadd.f32 %v5966, %v5967
    %v5999 = vadd.f32 %v5998, %v5968
    %v6000 = vadd.f32 %v5999, %v5969
    %v6001 = vadd.f32 %v6000, %v5970
    %v6002 = vadd.f32 %v6001, %v5971
    %v6003 = vadd.f32 %v6002, %v5972
    %v6004 = vadd.f32 %v6003, %v5973
    %v6005 = vadd.f32 %v6004, %v5974
    %v6006 = vadd.f32 %v6005, %v5975
    %v6007 = vadd.f32 %v6006, %v5976
    %v6008 = vadd.f32 %v6007, %v5977
    %v6009 = vadd.f32 %v6008, %v5978
    %v6010 = vadd.f32 %v6009, %v5979
    %v6011 = vadd.f32 %v6010, %v5980
    %v6012 = vadd.f32 %v6011, %v5981
    %v6013 = vadd.f32 %v6012, %v5982
    %v6014 = vadd.f32 %v6013, %v5983
    %v6015 = vadd.f32 %v6014, %v5984
    %v6016 = vadd.f32 %v6015, %v5985
    %v6017 = vadd.f32 %v6016, %v5986
    %v6018 = vadd.f32 %v6017, %v5987
    %v6019 = vadd.f32 %v6018, %v5988
    %v6020 = vadd.f32 %v6019, %v5989
    %v6021 = vadd.f32 %v6020, %v5990
    %v6022 = vadd.f32 %v6021, %v5991
    %v6023 = vadd.f32 %v6022, %v5992
    %v6024 = vadd.f32 %v6023, %v5993
    %v6025 = vadd.f32 %v6024, %v5994
    %v6026 = vadd.f32 %v6025, %v5995
    %v6027 = vadd.f32 %v6026, %v5996
    %v6028 = vadd.f32 %v6027, %v5997
    %v6029 = vrot.slane %v6028, 4
    %v6030 = vadd.f32 %v6028, %v6029
    %v6031 = vrot.slane %v6030, 2
    %v6032 = vadd.f32 %v6030, %v6031
    %v6033 = vrot.slane %v6032, 1
    %v6034 = vadd.f32 %v6032, %v6033
    %v6035 = vmul.f32 %v6034, %v542
    %v6036 = vmul.f32 %v5965, %v5965
    %v6037 = vsub.f32 %v6035, %v6036
    %v6038 = vadd.f32 %v6037, 2e-05
    %v6039 = vrsqrt.pop %v6038
    %v6040 = vmul.f32 %v6039, %v6038
    %v6041 = vmul.f32 %v6040, %v6039
    %v6042 = vmul.f32 0.5, %v6041
    %v6043 = vsub.f32 1.5, %v6042
    %v6044 = vmul.f32 %v6039, %v6043
    %vm6045 = vweird.f32 %v6038
    %vm6046 = vweird.f32 %v6039
    %vm6047 = vmor %vm6045, %vm6046
    %v6048 = vsel %vm6047, %v6039, %v6044
    %v6049 = vmul.f32 %v5926, %v6048
    %v6050 = vmul.f32 %v5965, %v6049
    %v6051 = vsub.f32 %v5927, %v6050
    %v6053 = vperm.slane %v6049, 0
    %v6055 = vmul.f32 %v5847, %v6053
    %v6056 = vmul.f32 %v5849, %v6053
    %v6057 = vmul.f32 %v5852, %v6053
    %v6058 = vmul.f32 %v5854, %v6053
    %v6059 = vmul.f32 %v5857, %v6053
    %v6060 = vmul.f32 %v5859, %v6053
    %v6061 = vmul.f32 %v5862, %v6053
    %v6062 = vmul.f32 %v5864, %v6053
    %v6063 = vmul.f32 %v5867, %v6053
    %v6064 = vmul.f32 %v5869, %v6053
    %v6065 = vmul.f32 %v5872, %v6053
    %v6066 = vmul.f32 %v5874, %v6053
    %v6067 = vmul.f32 %v5877, %v6053
    %v6068 = vmul.f32 %v5879, %v6053
    %v6069 = vmul.f32 %v5882, %v6053
    %v6070 = vmul.f32 %v5884, %v6053
    %v6071 = vmul.f32 %v5887, %v6053
    %v6072 = vmul.f32 %v5889, %v6053
    %v6073 = vmul.f32 %v5892, %v6053
    %v6074 = vmul.f32 %v5894, %v6053
    %v6075 = vmul.f32 %v5897, %v6053
    %v6076 = vmul.f32 %v5899, %v6053
    %v6077 = vmul.f32 %v5902, %v6053
    %v6078 = vmul.f32 %v5904, %v6053
    %v6079 = vmul.f32 %v5907, %v6053
    %v6080 = vmul.f32 %v5909, %v6053
    %v6081 = vmul.f32 %v5912, %v6053
    %v6082 = vmul.f32 %v5914, %v6053
    %v6083 = vmul.f32 %v5917, %v6053
    %v6084 = vmul.f32 %v5919, %v6053
    %v6085 = vmul.f32 %v5922, %v6053
    %v6086 = vmul.f32 %v5924, %v6053
    %v6088 = vperm.slane %v6051, 0
    %v6090 = vadd.f32 %v6055, %v6088
    %v6091 = vadd.f32 %v6056, %v6088
    %v6092 = vadd.f32 %v6057, %v6088
    %v6093 = vadd.f32 %v6058, %v6088
    %v6094 = vadd.f32 %v6059, %v6088
    %v6095 = vadd.f32 %v6060, %v6088
    %v6096 = vadd.f32 %v6061, %v6088
    %v6097 = vadd.f32 %v6062, %v6088
    %v6098 = vadd.f32 %v6063, %v6088
    %v6099 = vadd.f32 %v6064, %v6088
    %v6100 = vadd.f32 %v6065, %v6088
    %v6101 = vadd.f32 %v6066, %v6088
    %v6102 = vadd.f32 %v6067, %v6088
    %v6103 = vadd.f32 %v6068, %v6088
    %v6104 = vadd.f32 %v6069, %v6088
    %v6105 = vadd.f32 %v6070, %v6088
    %v6106 = vadd.f32 %v6071, %v6088
    %v6107 = vadd.f32 %v6072, %v6088
    %v6108 = vadd.f32 %v6073, %v6088
    %v6109 = vadd.f32 %v6074, %v6088
    %v6110 = vadd.f32 %v6075, %v6088
    %v6111 = vadd.f32 %v6076, %v6088
    %v6112 = vadd.f32 %v6077, %v6088
    %v6113 = vadd.f32 %v6078, %v6088
    %v6114 = vadd.f32 %v6079, %v6088
    %v6115 = vadd.f32 %v6080, %v6088
    %v6116 = vadd.f32 %v6081, %v6088
    %v6117 = vadd.f32 %v6082, %v6088
    %v6118 = vadd.f32 %v6083, %v6088
    %v6119 = vadd.f32 %v6084, %v6088
    %v6120 = vadd.f32 %v6085, %v6088
    %v6121 = vadd.f32 %v6086, %v6088
    %vm6122 = vcmp.ge.f32.partialorder %v6090, 0.0
    %vm6123 = vcmp.ge.f32.partialorder %v6091, 0.0
    %vm6124 = vcmp.ge.f32.partialorder %v6092, 0.0
    %vm6125 = vcmp.ge.f32.partialorder %v6093, 0.0
    %vm6126 = vcmp.ge.f32.partialorder %v6094, 0.0
    %vm6127 = vcmp.ge.f32.partialorder %v6095, 0.0
    %vm6128 = vcmp.ge.f32.partialorder %v6096, 0.0
    %vm6129 = vcmp.ge.f32.partialorder %v6097, 0.0
    %vm6130 = vcmp.ge.f32.partialorder %v6098, 0.0
    %vm6131 = vcmp.ge.f32.partialorder %v6099, 0.0
    %vm6132 = vcmp.ge.f32.partialorder %v6100, 0.0
    %vm6133 = vcmp.ge.f32.partialorder %v6101, 0.0
    %vm6134 = vcmp.ge.f32.partialorder %v6102, 0.0
    %vm6135 = vcmp.ge.f32.partialorder %v6103, 0.0
    %vm6136 = vcmp.ge.f32.partialorder %v6104, 0.0
    %vm6137 = vcmp.ge.f32.partialorder %v6105, 0.0
    %vm6138 = vcmp.ge.f32.partialorder %v6106, 0.0
    %vm6139 = vcmp.ge.f32.partialorder %v6107, 0.0
    %vm6140 = vcmp.ge.f32.partialorder %v6108, 0.0
    %vm6141 = vcmp.ge.f32.partialorder %v6109, 0.0
    %vm6142 = vcmp.ge.f32.partialorder %v6110, 0.0
    %vm6143 = vcmp.ge.f32.partialorder %v6111, 0.0
    %vm6144 = vcmp.ge.f32.partialorder %v6112, 0.0
    %vm6145 = vcmp.ge.f32.partialorder %v6113, 0.0
    %vm6146 = vcmp.ge.f32.partialorder %v6114, 0.0
    %vm6147 = vcmp.ge.f32.partialorder %v6115, 0.0
    %vm6148 = vcmp.ge.f32.partialorder %v6116, 0.0
    %vm6149 = vcmp.ge.f32.partialorder %v6117, 0.0
    %vm6150 = vcmp.ge.f32.partialorder %v6118, 0.0
    %vm6151 = vcmp.ge.f32.partialorder %v6119, 0.0
    %vm6152 = vcmp.ge.f32.partialorder %v6120, 0.0
    %vm6153 = vcmp.ge.f32.partialorder %v6121, 0.0
    %v6154 = vsel %vm6122, 1.0, -1.0
    %v6155 = vsel %vm6123, 1.0, -1.0
    %v6156 = vsel %vm6124, 1.0, -1.0
    %v6157 = vsel %vm6125, 1.0, -1.0
    %v6158 = vsel %vm6126, 1.0, -1.0
    %v6159 = vsel %vm6127, 1.0, -1.0
    %v6160 = vsel %vm6128, 1.0, -1.0
    %v6161 = vsel %vm6129, 1.0, -1.0
    %v6162 = vsel %vm6130, 1.0, -1.0
    %v6163 = vsel %vm6131, 1.0, -1.0
    %v6164 = vsel %vm6132, 1.0, -1.0
    %v6165 = vsel %vm6133, 1.0, -1.0
    %v6166 = vsel %vm6134, 1.0, -1.0
    %v6167 = vsel %vm6135, 1.0, -1.0
    %v6168 = vsel %vm6136, 1.0, -1.0
    %v6169 = vsel %vm6137, 1.0, -1.0
    %v6170 = vsel %vm6138, 1.0, -1.0
    %v6171 = vsel %vm6139, 1.0, -1.0
    %v6172 = vsel %vm6140, 1.0, -1.0
    %v6173 = vsel %vm6141, 1.0, -1.0
    %v6174 = vsel %vm6142, 1.0, -1.0
    %v6175 = vsel %vm6143, 1.0, -1.0
    %v6176 = vsel %vm6144, 1.0, -1.0
    %v6177 = vsel %vm6145, 1.0, -1.0
    %v6178 = vsel %vm6146, 1.0, -1.0
    %v6179 = vsel %vm6147, 1.0, -1.0
    %v6180 = vsel %vm6148, 1.0, -1.0
    %v6181 = vsel %vm6149, 1.0, -1.0
    %v6182 = vsel %vm6150, 1.0, -1.0
    %v6183 = vsel %vm6151, 1.0, -1.0
    %v6184 = vsel %vm6152, 1.0, -1.0
    %v6185 = vsel %vm6153, 1.0, -1.0
    %v6186 = vpack.c.bf16 %v6154, %v6154
    %v6187 = vpack.c.bf16 %v6155, %v6155
    %v6188 = vpack.c.bf16 %v6156, %v6156
    %v6189 = vpack.c.bf16 %v6157, %v6157
    %v6190 = vpack.c.bf16 %v6158, %v6158
    %v6191 = vpack.c.bf16 %v6159, %v6159
    %v6192 = vpack.c.bf16 %v6160, %v6160
    %v6193 = vpack.c.bf16 %v6161, %v6161
    %v6194 = vpack.c.bf16 %v6162, %v6162
    %v6195 = vpack.c.bf16 %v6163, %v6163
    %v6196 = vpack.c.bf16 %v6164, %v6164
    %v6197 = vpack.c.bf16 %v6165, %v6165
    %v6198 = vpack.c.bf16 %v6166, %v6166
    %v6199 = vpack.c.bf16 %v6167, %v6167
    %v6200 = vpack.c.bf16 %v6168, %v6168
    %v6201 = vpack.c.bf16 %v6169, %v6169
    %v6202 = vpack.c.bf16 %v6170, %v6170
    %v6203 = vpack.c.bf16 %v6171, %v6171
    %v6204 = vpack.c.bf16 %v6172, %v6172
    %v6205 = vpack.c.bf16 %v6173, %v6173
    %v6206 = vpack.c.bf16 %v6174, %v6174
    %v6207 = vpack.c.bf16 %v6175, %v6175
    %v6208 = vpack.c.bf16 %v6176, %v6176
    %v6209 = vpack.c.bf16 %v6177, %v6177
    %v6210 = vpack.c.bf16 %v6178, %v6178
    %v6211 = vpack.c.bf16 %v6179, %v6179
    %v6212 = vpack.c.bf16 %v6180, %v6180
    %v6213 = vpack.c.bf16 %v6181, %v6181
    %v6214 = vpack.c.bf16 %v6182, %v6182
    %v6215 = vpack.c.bf16 %v6183, %v6183
    %v6216 = vpack.c.bf16 %v6184, %v6184
    %v6217 = vpack.c.bf16 %v6185, %v6185
    %6218 = vst [vmem:[#allocation7] sm:$0xf] %v6186
    %6219 = vst [vmem:[#allocation7 + $0x4] sm:$0xf] %v6187
    %6220 = vst [vmem:[#allocation7 + $0x8] sm:$0xf] %v6188
    %6221 = vst [vmem:[#allocation7 + $0xc] sm:$0xf] %v6189
    %6222 = vst [vmem:[#allocation7 + $0x10] sm:$0xf] %v6190
    %6223 = vst [vmem:[#allocation7 + $0x14] sm:$0xf] %v6191
    %6224 = vst [vmem:[#allocation7 + $0x18] sm:$0xf] %v6192
    %6225 = vst [vmem:[#allocation7 + $0x1c] sm:$0xf] %v6193
    %6226 = vst [vmem:[#allocation7 + $0x20] sm:$0xf] %v6194
    %6227 = vst [vmem:[#allocation7 + $0x24] sm:$0xf] %v6195
    %6228 = vst [vmem:[#allocation7 + $0x28] sm:$0xf] %v6196
    %6229 = vst [vmem:[#allocation7 + $0x2c] sm:$0xf] %v6197
    %6230 = vst [vmem:[#allocation7 + $0x30] sm:$0xf] %v6198
    %6231 = vst [vmem:[#allocation7 + $0x34] sm:$0xf] %v6199
    %6232 = vst [vmem:[#allocation7 + $0x38] sm:$0xf] %v6200
    %6233 = vst [vmem:[#allocation7 + $0x3c] sm:$0xf] %v6201
    %6234 = vst [vmem:[#allocation7 + $0x40] sm:$0xf] %v6202
    %6235 = vst [vmem:[#allocation7 + $0x44] sm:$0xf] %v6203
    %6236 = vst [vmem:[#allocation7 + $0x48] sm:$0xf] %v6204
    %6237 = vst [vmem:[#allocation7 + $0x4c] sm:$0xf] %v6205
    %6238 = vst [vmem:[#allocation7 + $0x50] sm:$0xf] %v6206
    %6239 = vst [vmem:[#allocation7 + $0x54] sm:$0xf] %v6207
    %6240 = vst [vmem:[#allocation7 + $0x58] sm:$0xf] %v6208
    %6241 = vst [vmem:[#allocation7 + $0x5c] sm:$0xf] %v6209
    %6242 = vst [vmem:[#allocation7 + $0x60] sm:$0xf] %v6210
    %6243 = vst [vmem:[#allocation7 + $0x64] sm:$0xf] %v6211
    %6244 = vst [vmem:[#allocation7 + $0x68] sm:$0xf] %v6212
    %6245 = vst [vmem:[#allocation7 + $0x6c] sm:$0xf] %v6213
    %6246 = vst [vmem:[#allocation7 + $0x70] sm:$0xf] %v6214
    %6247 = vst [vmem:[#allocation7 + $0x74] sm:$0xf] %v6215
    %6248 = vst [vmem:[#allocation7 + $0x78] sm:$0xf] %v6216
    %6249 = vst [vmem:[#allocation7 + $0x7c] sm:$0xf] %v6217
    %v6250 = vld [vmem:[%s11] sm:$0xf]
    %v6251 = vld [vmem:[%s11 + $0x4] sm:$0xf]
    %v6252 = vld [vmem:[%s11 + $0x8] sm:$0xf]
    %v6253 = vld [vmem:[%s11 + $0xc] sm:$0xf]
    %v6254 = vld [vmem:[%s11 + $0x10] sm:$0xf]
    %v6255 = vld [vmem:[%s11 + $0x14] sm:$0xf]
    %v6256 = vld [vmem:[%s11 + $0x18] sm:$0xf]
    %v6257 = vld [vmem:[%s11 + $0x1c] sm:$0xf]
    %v6258 = vld [vmem:[%s11 + $0x20] sm:$0xf]
    %v6259 = vld [vmem:[%s11 + $0x24] sm:$0xf]
    %v6260 = vld [vmem:[%s11 + $0x28] sm:$0xf]
    %v6261 = vld [vmem:[%s11 + $0x2c] sm:$0xf]
    %v6262 = vld [vmem:[%s11 + $0x30] sm:$0xf]
    %v6263 = vld [vmem:[%s11 + $0x34] sm:$0xf]
    %v6264 = vld [vmem:[%s11 + $0x38] sm:$0xf]
    %v6265 = vld [vmem:[%s11 + $0x3c] sm:$0xf]
    %v6266 = vld [vmem:[%s12] sm:$0x1]
    %v6268 = vperm.slane %v6266, 0
    %v6302 = vunpack.c.l.b16 %v6186
    %v6303 = vunpack.c.l.b16 %v6187
    %v6304 = vunpack.c.l.b16 %v6188
    %v6305 = vunpack.c.l.b16 %v6189
    %v6306 = vunpack.c.l.b16 %v6190
    %v6307 = vunpack.c.l.b16 %v6191
    %v6308 = vunpack.c.l.b16 %v6192
    %v6309 = vunpack.c.l.b16 %v6193
    %v6310 = vunpack.c.l.b16 %v6194
    %v6311 = vunpack.c.l.b16 %v6195
    %v6312 = vunpack.c.l.b16 %v6196
    %v6313 = vunpack.c.l.b16 %v6197
    %v6314 = vunpack.c.l.b16 %v6198
    %v6315 = vunpack.c.l.b16 %v6199
    %v6316 = vunpack.c.l.b16 %v6200
    %v6317 = vunpack.c.l.b16 %v6201
    %v6318 = vunpack.c.l.b16 %v6202
    %v6319 = vunpack.c.l.b16 %v6203
    %v6320 = vunpack.c.l.b16 %v6204
    %v6321 = vunpack.c.l.b16 %v6205
    %v6322 = vunpack.c.l.b16 %v6206
    %v6323 = vunpack.c.l.b16 %v6207
    %v6324 = vunpack.c.l.b16 %v6208
    %v6325 = vunpack.c.l.b16 %v6209
    %v6326 = vunpack.c.l.b16 %v6210
    %v6327 = vunpack.c.l.b16 %v6211
    %v6328 = vunpack.c.l.b16 %v6212
    %v6329 = vunpack.c.l.b16 %v6213
    %v6330 = vunpack.c.l.b16 %v6214
    %v6331 = vunpack.c.l.b16 %v6215
    %v6332 = vunpack.c.l.b16 %v6216
    %v6333 = vunpack.c.l.b16 %v6217
    %v6334 = vpack.c.b16 %v6303, %v6302
    %v6335 = vpack.c.b16 %v6305, %v6304
    %v6336 = vpack.c.b16 %v6307, %v6306
    %v6337 = vpack.c.b16 %v6309, %v6308
    %v6338 = vpack.c.b16 %v6311, %v6310
    %v6339 = vpack.c.b16 %v6313, %v6312
    %v6340 = vpack.c.b16 %v6315, %v6314
    %v6341 = vpack.c.b16 %v6317, %v6316
    %v6342 = vpack.c.b16 %v6319, %v6318
    %v6343 = vpack.c.b16 %v6321, %v6320
    %v6344 = vpack.c.b16 %v6323, %v6322
    %v6345 = vpack.c.b16 %v6325, %v6324
    %v6346 = vpack.c.b16 %v6327, %v6326
    %v6347 = vpack.c.b16 %v6329, %v6328
    %v6348 = vpack.c.b16 %v6331, %v6330
    %v6349 = vpack.c.b16 %v6333, %v6332
    %v6382 = vunpack.c.l.b16 %v6250
    %v6383 = vunpack.c.l.b16 %v6251
    %v6384 = vunpack.c.l.b16 %v6252
    %v6385 = vunpack.c.l.b16 %v6253
    %v6386 = vunpack.c.l.b16 %v6254
    %v6387 = vunpack.c.l.b16 %v6255
    %v6388 = vunpack.c.l.b16 %v6256
    %v6389 = vunpack.c.l.b16 %v6257
    %v6390 = vunpack.c.l.b16 %v6258
    %v6391 = vunpack.c.l.b16 %v6259
    %v6392 = vunpack.c.l.b16 %v6260
    %v6393 = vunpack.c.l.b16 %v6261
    %v6394 = vunpack.c.l.b16 %v6262
    %v6395 = vunpack.c.l.b16 %v6263
    %v6396 = vunpack.c.l.b16 %v6264
    %v6397 = vunpack.c.l.b16 %v6265
    %v6398 = vpack.c.b16 %v6383, %v6382
    %v6399 = vpack.c.b16 %v6385, %v6384
    %v6400 = vpack.c.b16 %v6387, %v6386
    %v6401 = vpack.c.b16 %v6389, %v6388
    %v6402 = vpack.c.b16 %v6391, %v6390
    %v6403 = vpack.c.b16 %v6393, %v6392
    %v6404 = vpack.c.b16 %v6395, %v6394
    %v6405 = vpack.c.b16 %v6397, %v6396
    %6414 = vmatpush.bf16.msra.mxu0 %v6405
    %6415 = vmatpush.bf16.msra.mxu0 %v6404
    %6416 = vmatpush.bf16.msra.mxu0 %v6403
    %6417 = vmatpush.bf16.msra.mxu0 %v6402
    %6418 = vmatpush.bf16.msra.mxu0 %v6401
    %6419 = vmatpush.bf16.msra.mxu0 %v6400
    %6420 = vmatpush.bf16.msra.mxu0 %v6399
    %6421 = vmatpush.bf16.msra.mxu0 %v6398
    %6422 = vmatmul.bf16.gmra.mxu0 %v6334
    %v6423 = vpop.f32.mrf.mxu0
    %v6424 = vadd.f32 %v6268, %v6423
    %v6425 = vpop.f32.mrf.mxu0
    %v6426 = vadd.f32 %v6268, %v6425
    %6427 = vmatmul.bf16.gmra.mxu0 %v6335
    %v6428 = vpop.f32.mrf.mxu0
    %v6429 = vadd.f32 %v6268, %v6428
    %v6430 = vpop.f32.mrf.mxu0
    %v6431 = vadd.f32 %v6268, %v6430
    %6432 = vmatmul.bf16.gmra.mxu0 %v6336
    %v6433 = vpop.f32.mrf.mxu0
    %v6434 = vadd.f32 %v6268, %v6433
    %v6435 = vpop.f32.mrf.mxu0
    %v6436 = vadd.f32 %v6268, %v6435
    %6437 = vmatmul.bf16.gmra.mxu0 %v6337
    %v6438 = vpop.f32.mrf.mxu0
    %v6439 = vadd.f32 %v6268, %v6438
    %v6440 = vpop.f32.mrf.mxu0
    %v6441 = vadd.f32 %v6268, %v6440
    %6442 = vmatmul.bf16.gmra.mxu0 %v6338
    %v6443 = vpop.f32.mrf.mxu0
    %v6444 = vadd.f32 %v6268, %v6443
    %v6445 = vpop.f32.mrf.mxu0
    %v6446 = vadd.f32 %v6268, %v6445
    %6447 = vmatmul.bf16.gmra.mxu0 %v6339
    %v6448 = vpop.f32.mrf.mxu0
    %v6449 = vadd.f32 %v6268, %v6448
    %v6450 = vpop.f32.mrf.mxu0
    %v6451 = vadd.f32 %v6268, %v6450
    %6452 = vmatmul.bf16.gmra.mxu0 %v6340
    %v6453 = vpop.f32.mrf.mxu0
    %v6454 = vadd.f32 %v6268, %v6453
    %v6455 = vpop.f32.mrf.mxu0
    %v6456 = vadd.f32 %v6268, %v6455
    %6457 = vmatmul.bf16.gmra.mxu0 %v6341
    %v6458 = vpop.f32.mrf.mxu0
    %v6459 = vadd.f32 %v6268, %v6458
    %v6460 = vpop.f32.mrf.mxu0
    %v6461 = vadd.f32 %v6268, %v6460
    %6462 = vmatmul.bf16.gmra.mxu0 %v6342
    %v6463 = vpop.f32.mrf.mxu0
    %v6464 = vadd.f32 %v6268, %v6463
    %v6465 = vpop.f32.mrf.mxu0
    %v6466 = vadd.f32 %v6268, %v6465
    %6467 = vmatmul.bf16.gmra.mxu0 %v6343
    %v6468 = vpop.f32.mrf.mxu0
    %v6469 = vadd.f32 %v6268, %v6468
    %v6470 = vpop.f32.mrf.mxu0
    %v6471 = vadd.f32 %v6268, %v6470
    %6472 = vmatmul.bf16.gmra.mxu0 %v6344
    %v6473 = vpop.f32.mrf.mxu0
    %v6474 = vadd.f32 %v6268, %v6473
    %v6475 = vpop.f32.mrf.mxu0
    %v6476 = vadd.f32 %v6268, %v6475
    %6477 = vmatmul.bf16.gmra.mxu0 %v6345
    %v6478 = vpop.f32.mrf.mxu0
    %v6479 = vadd.f32 %v6268, %v6478
    %v6480 = vpop.f32.mrf.mxu0
    %v6481 = vadd.f32 %v6268, %v6480
    %6482 = vmatmul.bf16.gmra.mxu0 %v6346
    %v6483 = vpop.f32.mrf.mxu0
    %v6484 = vadd.f32 %v6268, %v6483
    %v6485 = vpop.f32.mrf.mxu0
    %v6486 = vadd.f32 %v6268, %v6485
    %6487 = vmatmul.bf16.gmra.mxu0 %v6347
    %v6488 = vpop.f32.mrf.mxu0
    %v6489 = vadd.f32 %v6268, %v6488
    %v6490 = vpop.f32.mrf.mxu0
    %v6491 = vadd.f32 %v6268, %v6490
    %6492 = vmatmul.bf16.gmra.mxu0 %v6348
    %v6493 = vpop.f32.mrf.mxu0
    %v6494 = vadd.f32 %v6268, %v6493
    %v6495 = vpop.f32.mrf.mxu0
    %v6496 = vadd.f32 %v6268, %v6495
    %6497 = vmatmul.bf16.gmra.mxu0 %v6349
    %v6498 = vpop.f32.mrf.mxu0
    %v6499 = vadd.f32 %v6268, %v6498
    %v6500 = vpop.f32.mrf.mxu0
    %v6501 = vadd.f32 %v6268, %v6500
    %6502 = vdwg.mxu0
    %6503 = vst [vmem:[#allocation2] sm:$0xff] %v6424
    %6504 = vst [vmem:[#allocation2 + $0x8] sm:$0xff] %v6426
    %6505 = vst [vmem:[#allocation2 + $0x10] sm:$0xff] %v6429
    %6506 = vst [vmem:[#allocation2 + $0x18] sm:$0xff] %v6431
    %6507 = vst [vmem:[#allocation2 + $0x20] sm:$0xff] %v6434
    %6508 = vst [vmem:[#allocation2 + $0x28] sm:$0xff] %v6436
    %6509 = vst [vmem:[#allocation2 + $0x30] sm:$0xff] %v6439
    %6510 = vst [vmem:[#allocation2 + $0x38] sm:$0xff] %v6441
    %6511 = vst [vmem:[#allocation2 + $0x40] sm:$0xff] %v6444
    %6512 = vst [vmem:[#allocation2 + $0x48] sm:$0xff] %v6446
    %6513 = vst [vmem:[#allocation2 + $0x50] sm:$0xff] %v6449
    %6514 = vst [vmem:[#allocation2 + $0x58] sm:$0xff] %v6451
    %6515 = vst [vmem:[#allocation2 + $0x60] sm:$0xff] %v6454
    %6516 = vst [vmem:[#allocation2 + $0x68] sm:$0xff] %v6456
    %6517 = vst [vmem:[#allocation2 + $0x70] sm:$0xff] %v6459
    %6518 = vst [vmem:[#allocation2 + $0x78] sm:$0xff] %v6461
    %6519 = vst [vmem:[#allocation2 + $0x80] sm:$0xff] %v6464
    %6520 = vst [vmem:[#allocation2 + $0x88] sm:$0xff] %v6466
    %6521 = vst [vmem:[#allocation2 + $0x90] sm:$0xff] %v6469
    %6522 = vst [vmem:[#allocation2 + $0x98] sm:$0xff] %v6471
    %6523 = vst [vmem:[#allocation2 + $0xa0] sm:$0xff] %v6474
    %6524 = vst [vmem:[#allocation2 + $0xa8] sm:$0xff] %v6476
    %6525 = vst [vmem:[#allocation2 + $0xb0] sm:$0xff] %v6479
    %6526 = vst [vmem:[#allocation2 + $0xb8] sm:$0xff] %v6481
    %6527 = vst [vmem:[#allocation2 + $0xc0] sm:$0xff] %v6484
    %6528 = vst [vmem:[#allocation2 + $0xc8] sm:$0xff] %v6486
    %6529 = vst [vmem:[#allocation2 + $0xd0] sm:$0xff] %v6489
    %6530 = vst [vmem:[#allocation2 + $0xd8] sm:$0xff] %v6491
    %6531 = vst [vmem:[#allocation2 + $0xe0] sm:$0xff] %v6494
    %6532 = vst [vmem:[#allocation2 + $0xe8] sm:$0xff] %v6496
    %6533 = vst [vmem:[#allocation2 + $0xf0] sm:$0xff] %v6499
    %6534 = vst [vmem:[#allocation2 + $0xf8] sm:$0xff] %v6501
    // Predicated region
    $region54: #{bnn_forward.1} parent=1 // pred_check
      _
    $region55: #{bnn_forward.1} parent=1 // pred_check_branch
      %6536 = sbr.rel (0) target = $region57
    $region56: #{bnn_forward.1} parent=1 // pred_region
      %6538 = vsyncadd [#allocation3], 0
      %s6539 = sshll.u32 [#allocation2], 4
      %s6540 = int_to_ptr.vmem [resolvable:$true] %s6539
      %s6541 = sshll.u32 %s13, 4
      %s6542 = int_to_ptr.hbm [resolvable:$true] %s6541
      %6547 = dma.vmem_to_hbm [thread:$0]  %s6540, 4096, %s6542, [#allocation3], 128, 128, 8
    $region57: #{bnn_forward.1} parent=1 // pred_fallthru
      _
    // Predicated region
    $region58: #{bnn_forward.1} parent=1 // pred_check
      _
    $region59: #{bnn_forward.1} parent=1 // pred_check_branch
      %6549 = sbr.rel (0) target = $region61
    $region60: #{bnn_forward.1} parent=1 // pred_region
      %6551 = vsyncadd [#allocation5], 0
      %s6552 = sshll.u32 [#allocation4], 4
      %s6553 = int_to_ptr.vmem [resolvable:$true] %s6552
      %s6554 = sshll.u32 %s14, 4
      %s6555 = int_to_ptr.hbm [resolvable:$true] %s6554
      %6560 = dma.vmem_to_hbm [thread:$0]  %s6553, 14336, %s6555, [#allocation5], 448, 448, 28
    $region61: #{bnn_forward.1} parent=1 // pred_fallthru
      _
    // Predicated region
    $region62: #{bnn_forward.1} parent=1 // pred_check
      _
    $region63: #{bnn_forward.1} parent=1 // pred_check_branch
      %6562 = sbr.rel (0) target = $region65
    $region64: #{bnn_forward.1} parent=1 // pred_region
      %6564 = vsyncadd [#allocation5], 0
      %s6565 = sshll.u32 [#allocation6], 4
      %s6566 = int_to_ptr.vmem [resolvable:$true] %s6565
      %s6567 = sshll.u32 %s15, 4
      %s6568 = int_to_ptr.hbm [resolvable:$true] %s6567
      %6573 = dma.vmem_to_hbm [thread:$0]  %s6566, 4096, %s6568, [#allocation5], 128, 128, 8
    $region65: #{bnn_forward.1} parent=1 // pred_fallthru
      _
    // Predicated region
    $region66: #{bnn_forward.1} parent=1 // pred_check
      _
    $region67: #{bnn_forward.1} parent=1 // pred_check_branch
      %6575 = sbr.rel (0) target = $region69
    $region68: #{bnn_forward.1} parent=1 // pred_region
      %6577 = vsyncadd [#allocation8], 0
      %s6578 = sshll.u32 [#allocation7], 4
      %s6579 = int_to_ptr.vmem [resolvable:$true] %s6578
      %s6580 = sshll.u32 %s16, 4
      %s6581 = int_to_ptr.hbm [resolvable:$true] %s6580
      %6586 = dma.vmem_to_hbm [thread:$0]  %s6579, 2048, %s6581, [#allocation8], 64, 64, 4
    $region69: #{bnn_forward.1} parent=1 // pred_fallthru
      _
    // Predicated region
    $region70: #{bnn_forward.1} parent=1 // pred_check
      _
    $region71: #{bnn_forward.1} parent=1 // pred_check_branch
      %6588 = sbr.rel (0) target = $region73
    $region72: #{bnn_forward.1} parent=1 // pred_region
      %6590 = dma.done [#allocation3], 4096
    $region73: #{bnn_forward.1} parent=1 // pred_fallthru
      _
    // Predicated region
    $region74: #{bnn_forward.1} parent=1 // pred_check
      _
    $region75: #{bnn_forward.1} parent=1 // pred_check_branch
      %6592 = sbr.rel (0) target = $region77
    $region76: #{bnn_forward.1} parent=1 // pred_region
      %6594 = dma.done [#allocation5], 14336
    $region77: #{bnn_forward.1} parent=1 // pred_fallthru
      _
    // Predicated region
    $region78: #{bnn_forward.1} parent=1 // pred_check
      _
    $region79: #{bnn_forward.1} parent=1 // pred_check_branch
      %6596 = sbr.rel (0) target = $region81
    $region80: #{bnn_forward.1} parent=1 // pred_region
      %6598 = dma.done [#allocation5], 4096
    $region81: #{bnn_forward.1} parent=1 // pred_fallthru
      _
    // Predicated region
    $region82: #{bnn_forward.1} parent=1 // pred_check
      _
    $region83: #{bnn_forward.1} parent=1 // pred_check_branch
      %6600 = sbr.rel (0) target = $region85
    $region84: #{bnn_forward.1} parent=1 // pred_region
      %6602 = dma.done [#allocation8], 2048
    $region85: #{bnn_forward.1} parent=1 // pred_fallthru
      _
    %6603 = vsyncpa [#allocation3], 1
    %6604 = vsyncpa [#allocation5], 1
    %6605 = vsyncpa [#allocation8], 1

</llo_original>
